<compile_context>
chip_gen: v6e
topology: v6e:2x2x1
jax: 0.10.0
libtpu: 0.0.40
codegen_flags: <defaults>
</compile_context>

<pallas_src>
import math
import functools

import jax
import jax.numpy as jnp
from jax.experimental import pallas as pl
from jax.experimental.pallas import tpu as pltpu

NUM_CLASSES = 7


# ------------------------------- helpers -----------------------------------

def _round_up(x, m):
    return ((x + m - 1) // m) * m


def _choose_tile(M, cap=512):
    """Pick a row tile: full extent if small, else the largest divisor <= cap."""
    if M <= cap:
        return M
    for tm in (512, 256, 128, 64, 32, 16, 8):
        if tm <= cap and M % tm == 0:
            return tm
    return cap  # falls back to padding (never hit at the shapes used here)


# --------------------- fused matmul (LN / bias / act / res) -----------------

def _make_fused_kernel(has_pre_ln, act, has_res, res_scale, has_post_ln, eps=1e-5):
    def kernel(*refs):
        refs = list(refs)
        o_ref = refs.pop()                    # single output, last ref
        it = iter(refs)
        x_ref = next(it)
        if has_pre_ln:
            lnw_ref = next(it)
            lnb_ref = next(it)
        w_ref = next(it)
        b_ref = next(it)
        if act == "glu":
            w2_ref = next(it)
            b2_ref = next(it)
        if has_res:
            r_ref = next(it)
        if has_post_ln:
            pw_ref = next(it)
            pb_ref = next(it)

        x = x_ref[...]
        if has_pre_ln:                        # LayerNorm prologue (f32)
            mu = jnp.mean(x, axis=-1, keepdims=True)
            xc = x - mu
            var = jnp.mean(xc * xc, axis=-1, keepdims=True)
            x = xc * jax.lax.rsqrt(var + eps) * lnw_ref[...] + lnb_ref[...]

        xb = x.astype(jnp.bfloat16)           # bf16 into the MXU, f32 accumulation
        y = jnp.dot(xb, w_ref[...], preferred_element_type=jnp.float32) + b_ref[...]

        if act == "silu":
            y = y * jax.nn.sigmoid(y)
        elif act == "glu":                    # GLU: value half * sigmoid(gate half)
            g = jnp.dot(xb, w2_ref[...],
                        preferred_element_type=jnp.float32) + b2_ref[...]
            y = y * jax.nn.sigmoid(g)

        if has_res:                           # y * scale + residual
            y = y * res_scale + r_ref[...]

        if has_post_ln:                       # fused trailing LayerNorm
            mu = jnp.mean(y, axis=-1, keepdims=True)
            yc = y - mu
            var = jnp.mean(yc * yc, axis=-1, keepdims=True)
            y = yc * jax.lax.rsqrt(var + eps) * pw_ref[...] + pb_ref[...]

        o_ref[...] = y
    return kernel


def fused_matmul(x, w, b, *, pre_ln=None, act=None, w2=None, b2=None,
                 residual=None, res_scale=1.0, post_ln=None):
    """out = epilogue( LN?(x) @ w + b ); w (and w2) are bf16, everything else f32.

    act: None | "silu" | "glu" (glu uses w2/b2 as the gate projection).
    residual/res_scale: out = out * res_scale + residual.
    post_ln: (weight, bias) LayerNorm applied after the residual add.
    """
    M, K = x.shape
    Kw, N = w.shape
    assert K == Kw
    tm = _choose_tile(M)
    Mp = _round_up(M, tm)
    pad = Mp - M
    if pad:
        x = jnp.pad(x, ((0, pad), (0, 0)))
        if residual is not None:
            residual = jnp.pad(residual, ((0, pad), (0, 0)))

    inputs = [x]
    in_specs = [pl.BlockSpec((tm, K), lambda i: (i, 0))]
    if pre_ln is not None:
        lw, lb = pre_ln
        inputs += [lw.reshape(1, K), lb.reshape(1, K)]
        in_specs += [pl.BlockSpec((1, K), lambda i: (0, 0)),
                     pl.BlockSpec((1, K), lambda i: (0, 0))]
    inputs += [w, b.reshape(1, N)]
    in_specs += [pl.BlockSpec((K, N), lambda i: (0, 0)),
                 pl.BlockSpec((1, N), lambda i: (0, 0))]
    if act == "glu":
        inputs += [w2, b2.reshape(1, N)]
        in_specs += [pl.BlockSpec((K, N), lambda i: (0, 0)),
                     pl.BlockSpec((1, N), lambda i: (0, 0))]
    if residual is not None:
        inputs.append(residual)
        in_specs.append(pl.BlockSpec((tm, N), lambda i: (i, 0)))
    if post_ln is not None:
        pw, pb = post_ln
        inputs += [pw.reshape(1, N), pb.reshape(1, N)]
        in_specs += [pl.BlockSpec((1, N), lambda i: (0, 0)),
                     pl.BlockSpec((1, N), lambda i: (0, 0))]

    kernel = _make_fused_kernel(pre_ln is not None, act, residual is not None,
                                res_scale, post_ln is not None)
    out = pl.pallas_call(
        kernel,
        out_shape=jax.ShapeDtypeStruct((Mp, N), jnp.float32),
        grid=(Mp // tm,),
        in_specs=in_specs,
        out_specs=pl.BlockSpec((tm, N), lambda i: (i, 0)),
        compiler_params=pltpu.CompilerParams(
            dimension_semantics=("parallel",)),
    )(*inputs)
    return out[:M] if pad else out


# --------------------------- fused BaseCNN kernel ---------------------------

def _base_cnn_kernel(x_ref, cw_ref, cb_ref, fw_ref, fb_ref, o_ref):
    # x: (H*W, 9*C) im2col patches for one image.
    x = x_ref[0].astype(jnp.bfloat16)
    y = jnp.dot(x, cw_ref[...], preferred_element_type=jnp.float32) + cb_ref[...]
    y = jnp.maximum(y, 0.0)                              # ReLU
    pooled = jnp.mean(y, axis=0, keepdims=True)          # global average pool
    feat = jnp.dot(pooled.astype(jnp.bfloat16), fw_ref[...],
                   preferred_element_type=jnp.float32) + fb_ref[...]
    o_ref[0] = feat


def base_cnn(imgs, p):
    """imgs: (B, T, C, H, W) -> (B*T, feat_dim).

    # TODO(synk): BaseCNN is not defined in the reference snippet; this is a
    # representative conv3x3(same) -> ReLU -> global-avg-pool -> linear backbone,
    # fully fused into one Pallas kernel per image.
    """
    B, T, C, H, W = imgs.shape
    N = B * T
    x = imgs.reshape(N, C, H, W).transpose(0, 2, 3, 1)        # NHWC
    xp = jnp.pad(x, ((0, 0), (1, 1), (1, 1), (0, 0)))
    cols = jnp.concatenate(
        [xp[:, dh:dh + H, dw:dw + W, :] for dh in range(3) for dw in range(3)],
        axis=-1).reshape(N, H * W, 9 * C)                     # (N, HW, 9C)
    k9c, cout = p["conv_w"].shape
    feat = p["fc_w"].shape[1]
    out = pl.pallas_call(
        _base_cnn_kernel,
        out_shape=jax.ShapeDtypeStruct((N, 1, feat), jnp.float32),
        grid=(N,),
        in_specs=[pl.BlockSpec((1, H * W, k9c), lambda i: (i, 0, 0)),
                  pl.BlockSpec((k9c, cout), lambda i: (0, 0)),
                  pl.BlockSpec((1, cout), lambda i: (0, 0)),
                  pl.BlockSpec((cout, feat), lambda i: (0, 0)),
                  pl.BlockSpec((1, feat), lambda i: (0, 0))],
        out_specs=pl.BlockSpec((1, 1, feat), lambda i: (i, 0, 0)),
        compiler_params=pltpu.CompilerParams(
            dimension_semantics=("parallel",)),
    )(cols, p["conv_w"], p["conv_b"].reshape(1, cout),
      p["fc_w"], p["fc_b"].reshape(1, feat))
    return out.reshape(N, feat)


# ------------------------ fused self-attention kernel -----------------------

def _attention_kernel(q_ref, k_ref, v_ref, ow_ref, ob_ref, res_ref, o_ref,
                      *, num_heads, scale):
    # q/k/v: (1, H, T, Dh); ow: (H, Dh, D) bf16; res: (1, T, D).
    acc = res_ref[0] + ob_ref[...]            # start from residual + out-proj bias
    for h in range(num_heads):                # static unrolled loop over heads
        qh = q_ref[0, h].astype(jnp.bfloat16)
        kh = k_ref[0, h].astype(jnp.bfloat16)
        vh = v_ref[0, h].astype(jnp.bfloat16)
        s = jax.lax.dot_general(qh, kh, (((1,), (1,)), ((), ())),
                                preferred_element_type=jnp.float32) * scale
        s = s - jnp.max(s, axis=-1, keepdims=True)
        p = jnp.exp(s)
        p = p * pl.reciprocal(jnp.sum(p, axis=-1, keepdims=True), approx=True)
        ctx = jnp.dot(p.astype(jnp.bfloat16), vh,
                      preferred_element_type=jnp.float32)          # (T, Dh)
        acc = acc + jnp.dot(ctx.astype(jnp.bfloat16), ow_ref[h],
                            preferred_element_type=jnp.float32)    # out-proj slice
    o_ref[0] = acc


def pallas_attention_block(q, k, v, out_w, out_b, residual):
    """q,k,v: (B, H, T, Dh); out_w: (H, Dh, D) bf16. Returns out_proj(attn) + residual."""
    B, H, T, Dh = q.shape
    D = H * Dh
    scale = 1.0 / math.sqrt(Dh)
    return pl.pallas_call(
        functools.partial(_attention_kernel, num_heads=H, scale=scale),
        out_shape=jax.ShapeDtypeStruct((B, T, D), jnp.float32),
        grid=(B,),
        in_specs=[pl.BlockSpec((1, H, T, Dh), lambda i: (i, 0, 0, 0)),
                  pl.BlockSpec((1, H, T, Dh), lambda i: (i, 0, 0, 0)),
                  pl.BlockSpec((1, H, T, Dh), lambda i: (i, 0, 0, 0)),
                  pl.BlockSpec((H, Dh, D), lambda i: (0, 0, 0)),
                  pl.BlockSpec((1, D), lambda i: (0, 0)),
                  pl.BlockSpec((1, T, D), lambda i: (i, 0, 0))],
        out_specs=pl.BlockSpec((1, T, D), lambda i: (i, 0, 0)),
        compiler_params=pltpu.CompilerParams(
            dimension_semantics=("parallel",)),
    )(q, k, v, out_w, out_b.reshape(1, D), residual)


# ------------------- depthwise conv (BN folded) + SiLU ----------------------

def _dwconv_silu_kernel(x_ref, w_ref, b_ref, o_ref, *, T, K):
    x = x_ref[...]                                     # (B, T+K-1, D)
    acc = x[:, 0:T, :] * w_ref[0]
    for k in range(1, K):                              # static unrolled tap loop
        acc = acc + x[:, k:k + T, :] * w_ref[k]
    acc = acc + b_ref[...]
    o_ref[...] = acc * jax.nn.sigmoid(acc)             # fused SiLU


def pallas_depthwise_conv_silu(x, w, b, K):
    """x: (B, T, D); w: (K, D) BatchNorm-folded taps; b: (D,). 'same' padding."""
    B, T, D = x.shape
    pad = (K - 1) // 2
    x_p = jnp.pad(x, ((0, 0), (pad, pad), (0, 0)))
    return pl.pallas_call(
        functools.partial(_dwconv_silu_kernel, T=T, K=K),
        out_shape=jax.ShapeDtypeStruct((B, T, D), jnp.float32),
    )(x_p, w.reshape(K, 1, D), b.reshape(1, D))


# ----------------------------- Conformer layer ------------------------------

def conformer_layer(x, p, num_heads, kernel_size):
    B, T, D = x.shape
    x2 = x.reshape(B * T, D)

    # --- FFN1 (half-step): LN -> w1 -> SiLU -> w2 -> *0.5 + residual ---------
    f = p["ffn1"]
    h = fused_matmul(x2, f["w1"], f["b1"],
                     pre_ln=(f["ln_w"], f["ln_b"]), act="silu")
    x2 = fused_matmul(h, f["w2"], f["b2"], residual=x2, res_scale=0.5)

    # --- Self-attention: LN -> QKV proj; per-batch attention with fused out-proj
    #     + bias + residual inside the kernel ---------------------------------
    qkv = fused_matmul(x2, p["attn"]["in_w"], p["attn"]["in_b"],
                       pre_ln=(p["attn_ln_w"], p["attn_ln_b"]))       # (B*T, 3D)
    Dh = D // num_heads
    qkv5 = qkv.reshape(B, T, 3, num_heads, Dh).transpose(2, 0, 3, 1, 4)
    x_attn = pallas_attention_block(qkv5[0], qkv5[1], qkv5[2],
                                    p["attn"]["out_w"], p["attn"]["out_b"],
                                    x2.reshape(B, T, D))
    x2 = x_attn.reshape(B * T, D)

    # --- Convolution module: LN -> pw1+GLU -> dwconv(BN folded)+SiLU -> pw2 + res
    c = p["conv"]
    h = fused_matmul(x2, c["pw1_a_w"], c["pw1_a_b"],
                     pre_ln=(c["ln_w"], c["ln_b"]),
                     act="glu", w2=c["pw1_g_w"], b2=c["pw1_g_b"])     # (B*T, D)
    h = pallas_depthwise_conv_silu(h.reshape(B, T, D), c["dw_w"], c["dw_b"],
                                   kernel_size)
    x2 = fused_matmul(h.reshape(B * T, D), c["pw2_w"], c["pw2_b"],
                      residual=x2, res_scale=1.0)

    # --- FFN2 (half-step) with the final LayerNorm fused into the epilogue ---
    f = p["ffn2"]
    h = fused_matmul(x2, f["w1"], f["b1"],
                     pre_ln=(f["ln_w"], f["ln_b"]), act="silu")
    x2 = fused_matmul(h, f["w2"], f["b2"], residual=x2, res_scale=0.5,
                      post_ln=(p["final_ln_w"], p["final_ln_b"]))
    return x2.reshape(B, T, D)


def conformer_vision_forward(g, r, params, *, num_heads, kernel_size):
    B, T = g.shape[0], g.shape[1]
    g_feat = base_cnn(g, params["cnn_g"])                       # (B*T, feat)
    r_feat = base_cnn(r, params["cnn_r"])                       # (B*T, feat)
    x = jnp.concatenate([g_feat, r_feat], axis=-1)              # (B*T, d_model)
    D = x.shape[-1]
    x = x.reshape(B, T, D)
    for layer_p in params["layers"]:
        x = conformer_layer(x, layer_p, num_heads, kernel_size)
    last = x[:, -1, :]                                          # x[:, -1, :]
    logits = fused_matmul(last, params["cls_w"], params["cls_b"])  # lane-padded
    return logits[:, :NUM_CLASSES]


# ----------------------------- Parameter init ------------------------------

def _dense_init(key, fan_in, shape):
    return jax.random.normal(key, shape, jnp.float32) * (1.0 / math.sqrt(fan_in))


def init_params(key, *, in_ch, cnn_hidden, feat_dim, d_model, ffn_dim,
                num_layers, num_heads, kernel_size):
    """PyTorch-layout f32 parameters."""
    keys = iter(jax.random.split(key, 256))
    nk = lambda: next(keys)

    def cnn_params():
        return {
            "conv_w": _dense_init(nk(), in_ch * 9, (cnn_hidden, in_ch, 3, 3)),
            "conv_b": jnp.zeros((cnn_hidden,), jnp.float32),
            "fc_w": _dense_init(nk(), cnn_hidden, (cnn_hidden, feat_dim)),
            "fc_b": jnp.zeros((feat_dim,), jnp.float32),
        }

    def ffn_params():
        return {
            "ln_w": jnp.ones((d_model,), jnp.float32),
            "ln_b": jnp.zeros((d_model,), jnp.float32),
            "w1": _dense_init(nk(), d_model, (d_model, ffn_dim)),
            "b1": jnp.zeros((ffn_dim,), jnp.float32),
            "w2": _dense_init(nk(), ffn_dim, (ffn_dim, d_model)),
            "b2": jnp.zeros((d_model,), jnp.float32),
        }

    def layer_params():
        return {
            "ffn1": ffn_params(),
            "attn_ln_w": jnp.ones((d_model,), jnp.float32),
            "attn_ln_b": jnp.zeros((d_model,), jnp.float32),
            "attn": {
                "in_w": _dense_init(nk(), d_model, (d_model, 3 * d_model)),
                "in_b": jnp.zeros((3 * d_model,), jnp.float32),
                "out_w": _dense_init(nk(), d_model, (d_model, d_model)),
                "out_b": jnp.zeros((d_model,), jnp.float32),
            },
            "conv": {
                "ln_w": jnp.ones((d_model,), jnp.float32),
                "ln_b": jnp.zeros((d_model,), jnp.float32),
                "pw1_w": _dense_init(nk(), d_model, (d_model, 2 * d_model)),
                "pw1_b": jnp.zeros((2 * d_model,), jnp.float32),
                "dw_w": _dense_init(nk(), kernel_size, (kernel_size, d_model)),
                "dw_b": jnp.zeros((d_model,), jnp.float32),
                "bn_rm": jnp.zeros((d_model,), jnp.float32),
                "bn_rv": jnp.ones((d_model,), jnp.float32),
                "bn_w": jnp.ones((d_model,), jnp.float32),
                "bn_b": jnp.zeros((d_model,), jnp.float32),
                "pw2_w": _dense_init(nk(), d_model, (d_model, d_model)),
                "pw2_b": jnp.zeros((d_model,), jnp.float32),
            },
            "ffn2": ffn_params(),
            "final_ln_w": jnp.ones((d_model,), jnp.float32),
            "final_ln_b": jnp.zeros((d_model,), jnp.float32),
        }

    return {
        "cnn_g": cnn_params(),
        "cnn_r": cnn_params(),
        "layers": [layer_params() for _ in range(num_layers)],
        "cls_w": _dense_init(nk(), d_model, (d_model, NUM_CLASSES)),
        "cls_b": jnp.zeros((NUM_CLASSES,), jnp.float32),
    }


def prepare_params(raw, *, num_heads):
    """One-time conversion to kernel-ready layout: bf16 weights, im2col conv
    weight, split GLU weight, eval BatchNorm folded into depthwise taps, head-major
    attention out-projection, 128-lane-padded classifier."""
    bf = lambda w: w.astype(jnp.bfloat16)

    def prep_cnn(c):
        cout, cin = c["conv_w"].shape[0], c["conv_w"].shape[1]
        return {
            "conv_w": bf(c["conv_w"].transpose(2, 3, 1, 0).reshape(9 * cin, cout)),
            "conv_b": c["conv_b"],
            "fc_w": bf(c["fc_w"]),
            "fc_b": c["fc_b"],
        }

    def prep_ffn(f):
        return {"ln_w": f["ln_w"], "ln_b": f["ln_b"],
                "w1": bf(f["w1"]), "b1": f["b1"],
                "w2": bf(f["w2"]), "b2": f["b2"]}

    def prep_layer(l):
        d_model = l["attn"]["out_w"].shape[0]
        dh = d_model // num_heads
        c = l["conv"]
        bn_scale = c["bn_w"] * jax.lax.rsqrt(c["bn_rv"] + 1e-5)
        dw_w = c["dw_w"] * bn_scale[None, :]
        dw_b = (c["dw_b"] - c["bn_rm"]) * bn_scale + c["bn_b"]
        return {
            "ffn1": prep_ffn(l["ffn1"]),
            "ffn2": prep_ffn(l["ffn2"]),
            "attn_ln_w": l["attn_ln_w"], "attn_ln_b": l["attn_ln_b"],
            "attn": {
                "in_w": bf(l["attn"]["in_w"]), "in_b": l["attn"]["in_b"],
                "out_w": bf(l["attn"]["out_w"].reshape(num_heads, dh, d_model)),
                "out_b": l["attn"]["out_b"],
            },
            "conv": {
                "ln_w": c["ln_w"], "ln_b": c["ln_b"],
                "pw1_a_w": bf(c["pw1_w"][:, :d_model]),
                "pw1_a_b": c["pw1_b"][:d_model],
                "pw1_g_w": bf(c["pw1_w"][:, d_model:]),
                "pw1_g_b": c["pw1_b"][d_model:],
                "dw_w": dw_w, "dw_b": dw_b,
                "pw2_w": bf(c["pw2_w"]), "pw2_b": c["pw2_b"],
            },
            "final_ln_w": l["final_ln_w"], "final_ln_b": l["final_ln_b"],
        }

    ncls = raw["cls_w"].shape[1]
    npad = _round_up(ncls, 128)
    cls_w = jnp.pad(raw["cls_w"], ((0, 0), (0, npad - ncls)))
    cls_b = jnp.pad(raw["cls_b"], ((0, npad - ncls),))
    return {
        "cnn_g": prep_cnn(raw["cnn_g"]),
        "cnn_r": prep_cnn(raw["cnn_r"]),
        "layers": [prep_layer(l) for l in raw["layers"]],
        "cls_w": bf(cls_w), "cls_b": cls_b,
    }


# ----------------------------------- Main -----------------------------------

if __name__ == "__main__":
    # Small shapes consistent with the module's forward pass.
    B, T, C, H, W = 2, 8, 4, 16, 16
    feat_dim = 32                      # mm_output_sizes[-1] (scaled down from 1024)
    d_model = 2 * feat_dim             # cat([g_feat, r_feat])
    num_heads = 4
    ffn_dim = 64
    num_layers = 2
    kernel_size = 7                    # depthwise kernel (scaled down from 31, odd)
    cnn_hidden = 16

    key = jax.random.PRNGKey(0)
    k_g, k_r, k_p = jax.random.split(key, 3)
    g = jax.random.normal(k_g, (B, T, C, H, W), jnp.float32)
    r = jax.random.normal(k_r, (B, T, C, H, W), jnp.float32)

    raw_params = init_params(k_p, in_ch=C, cnn_hidden=cnn_hidden, feat_dim=feat_dim,
                             d_model=d_model, ffn_dim=ffn_dim, num_layers=num_layers,
                             num_heads=num_heads, kernel_size=kernel_size)
    params = prepare_params(raw_params, num_heads=num_heads)

    fwd = jax.jit(functools.partial(conformer_vision_forward,
                                    num_heads=num_heads, kernel_size=kernel_size))
    out = fwd(g, r, params)
    jax.block_until_ready(out)
    assert out.shape == (B, NUM_CLASSES)
    print("KERNEL_OK")
</pallas_src>

<mosaic_0001>
module attributes {stable_mosaic.version = 11 : i64} {
  func.func @_base_cnn_kernel(%arg0: i32, %arg1: memref<1x256x36xf32, #tpu.memory_space<vmem>>, %arg2: memref<36x16xbf16, #tpu.memory_space<vmem>>, %arg3: memref<1x16xf32, #tpu.memory_space<vmem>>, %arg4: memref<16x32xbf16, #tpu.memory_space<vmem>>, %arg5: memref<1x32xf32, #tpu.memory_space<vmem>>, %arg6: memref<1x1x32xf32, #tpu.memory_space<vmem>>) attributes {dimension_semantics = [#tpu.dimension_semantics<parallel>], iteration_bounds = array<i64: 16>, scalar_prefetch = 0 : i64, scratch_operands = 0 : i64, tpu.core_type = #tpu.core_type<tc>, window_params = [{transform_indices = @transform_0, window_bounds = array<i64: 1, 256, 36>}, {pipeline_mode = #tpu.pipeline_mode<synchronous>, transform_indices = @transform_1, window_bounds = array<i64: 36, 16>}, {pipeline_mode = #tpu.pipeline_mode<synchronous>, transform_indices = @transform_2, window_bounds = array<i64: 1, 16>}, {pipeline_mode = #tpu.pipeline_mode<synchronous>, transform_indices = @transform_3, window_bounds = array<i64: 16, 32>}, {pipeline_mode = #tpu.pipeline_mode<synchronous>, transform_indices = @transform_4, window_bounds = array<i64: 1, 32>}, {transform_indices = @transform_5, window_bounds = array<i64: 1, 1, 32>}]} {
    %c0 = arith.constant 0 : index
    %c0_0 = arith.constant 0 : index
    %c0_1 = arith.constant 0 : index
    %0 = vector.load %arg1[%c0, %c0_0, %c0_1] : memref<1x256x36xf32, #tpu.memory_space<vmem>>, vector<1x256x36xf32>
    %1 = vector.shape_cast %0 : vector<1x256x36xf32> to vector<256x36xf32>
    %2 = arith.truncf %1 : vector<256x36xf32> to vector<256x36xbf16>
    %c0_2 = arith.constant 0 : index
    %c0_3 = arith.constant 0 : index
    %3 = vector.load %arg2[%c0_2, %c0_3] : memref<36x16xbf16, #tpu.memory_space<vmem>>, vector<36x16xbf16>
    %cst = arith.constant dense<0.000000e+00> : vector<256x16xf32>
    %4 = tpu.matmul %2, %3, %cst {dimension_numbers = #tpu.dot_dimension_numbers<[1], [0], [0], [1], [0, 0, 1, 1], [], []>} : vector<256x36xbf16>, vector<36x16xbf16>, vector<256x16xf32> -> vector<256x16xf32>
    %c0_4 = arith.constant 0 : index
    %c0_5 = arith.constant 0 : index
    %5 = vector.load %arg3[%c0_4, %c0_5] : memref<1x16xf32, #tpu.memory_space<vmem>>, vector<1x16xf32>
    %6 = vector.broadcast %5 : vector<1x16xf32> to vector<256x16xf32>
    %7 = arith.addf %4, %6 : vector<256x16xf32>
    %cst_6 = arith.constant 0.000000e+00 : f32
    %8 = vector.broadcast %cst_6 : f32 to vector<256x16xf32>
    %9 = arith.maximumf %7, %8 : vector<256x16xf32>
    %cst_7 = arith.constant dense<0.000000e+00> : vector<16xf32>
    %10 = vector.multi_reduction <add>, %9, %cst_7 [0] : vector<256x16xf32> to vector<16xf32>
    %11 = vector.shape_cast %10 : vector<16xf32> to vector<1x16xf32>
    %cst_8 = arith.constant 2.560000e+02 : f32
    %12 = vector.broadcast %cst_8 : f32 to vector<1x16xf32>
    %13 = arith.divf %11, %12 : vector<1x16xf32>
    %14 = arith.truncf %13 : vector<1x16xf32> to vector<1x16xbf16>
    %c0_9 = arith.constant 0 : index
    %c0_10 = arith.constant 0 : index
    %15 = vector.load %arg4[%c0_9, %c0_10] : memref<16x32xbf16, #tpu.memory_space<vmem>>, vector<16x32xbf16>
    %cst_11 = arith.constant dense<0.000000e+00> : vector<1x32xf32>
    %16 = tpu.matmul %14, %15, %cst_11 {dimension_numbers = #tpu.dot_dimension_numbers<[1], [0], [0], [1], [0, 0, 1, 1], [], []>} : vector<1x16xbf16>, vector<16x32xbf16>, vector<1x32xf32> -> vector<1x32xf32>
    %c0_12 = arith.constant 0 : index
    %c0_13 = arith.constant 0 : index
    %17 = vector.load %arg5[%c0_12, %c0_13] : memref<1x32xf32, #tpu.memory_space<vmem>>, vector<1x32xf32>
    %18 = arith.addf %16, %17 : vector<1x32xf32>
    %c0_14 = arith.constant 0 : index
    %c0_15 = arith.constant 0 : index
    %c0_16 = arith.constant 0 : index
    %19 = vector.load %arg6[%c0_14, %c0_15, %c0_16] : memref<1x1x32xf32, #tpu.memory_space<vmem>>, vector<1x1x32xf32>
    %20 = vector.shape_cast %19 : vector<1x1x32xf32> to vector<1x32xf32>
    %21 = vector.shape_cast %18 : vector<1x32xf32> to vector<1x1x32xf32>
    tpu.vector_store %arg6[%c0_14, %c0_15, %c0_16], %21 {strides = array<i32>} : memref<1x1x32xf32, #tpu.memory_space<vmem>>, vector<1x1x32xf32>,
    return
  }
  func.func @transform_0(%arg0: i32) -> (i32, i32, i32) {
    %c0_i32 = arith.constant 0 : i32
    %c0_i32_0 = arith.constant 0 : i32
    %c0_i32_1 = arith.constant 0 : i32
    return %arg0, %c0_i32, %c0_i32_0 : i32, i32, i32
  }
  func.func @transform_1(%arg0: i32) -> (i32, i32) {
    %c0_i32 = arith.constant 0 : i32
    %c0_i32_0 = arith.constant 0 : i32
    %c0_i32_1 = arith.constant 0 : i32
    return %c0_i32, %c0_i32_0 : i32, i32
  }
  func.func @transform_2(%arg0: i32) -> (i32, i32) {
    %c0_i32 = arith.constant 0 : i32
    %c0_i32_0 = arith.constant 0 : i32
    %c0_i32_1 = arith.constant 0 : i32
    return %c0_i32, %c0_i32_0 : i32, i32
  }
  func.func @transform_3(%arg0: i32) -> (i32, i32) {
    %c0_i32 = arith.constant 0 : i32
    %c0_i32_0 = arith.constant 0 : i32
    %c0_i32_1 = arith.constant 0 : i32
    return %c0_i32, %c0_i32_0 : i32, i32
  }
  func.func @transform_4(%arg0: i32) -> (i32, i32) {
    %c0_i32 = arith.constant 0 : i32
    %c0_i32_0 = arith.constant 0 : i32
    %c0_i32_1 = arith.constant 0 : i32
    return %c0_i32, %c0_i32_0 : i32, i32
  }
  func.func @transform_5(%arg0: i32) -> (i32, i32, i32) {
    %c0_i32 = arith.constant 0 : i32
    %c0_i32_0 = arith.constant 0 : i32
    %c0_i32_1 = arith.constant 0 : i32
    return %arg0, %c0_i32, %c0_i32_0 : i32, i32, i32
  }
}

module attributes {stable_mosaic.version = 11 : i64} {
  func.func @kernel(%arg0: i32, %arg1: memref<16x64xf32, #tpu.memory_space<vmem>>, %arg2: memref<1x64xf32, #tpu.memory_space<vmem>>, %arg3: memref<1x64xf32, #tpu.memory_space<vmem>>, %arg4: memref<64x64xbf16, #tpu.memory_space<vmem>>, %arg5: memref<1x64xf32, #tpu.memory_space<vmem>>, %arg6: memref<16x64xf32, #tpu.memory_space<vmem>>) attributes {dimension_semantics = [#tpu.dimension_semantics<parallel>], iteration_bounds = array<i64: 1>, scalar_prefetch = 0 : i64, scratch_operands = 0 : i64, tpu.core_type = #tpu.core_type<tc>, window_params = [{transform_indices = @transform_0, window_bounds = array<i64: 16, 64>}, {pipeline_mode = #tpu.pipeline_mode<synchronous>, transform_indices = @transform_1, window_bounds = array<i64: 1, 64>}, {pipeline_mode = #tpu.pipeline_mode<synchronous>, transform_indices = @transform_2, window_bounds = array<i64: 1, 64>}, {pipeline_mode = #tpu.pipeline_mode<synchronous>, transform_indices = @transform_3, window_bounds = array<i64: 64, 64>}, {pipeline_mode = #tpu.pipeline_mode<synchronous>, transform_indices = @transform_4, window_bounds = array<i64: 1, 64>}, {transform_indices = @transform_5, window_bounds = array<i64: 16, 64>}]} {
    %c0 = arith.constant 0 : index
    %c0_0 = arith.constant 0 : index
    %0 = vector.load %arg1[%c0, %c0_0] : memref<16x64xf32, #tpu.memory_space<vmem>>, vector<16x64xf32>
    %cst = arith.constant dense<0.000000e+00> : vector<16xf32>
    %1 = vector.multi_reduction <add>, %0, %cst [1] : vector<16x64xf32> to vector<16xf32>
    %2 = vector.shape_cast %1 : vector<16xf32> to vector<16x1xf32>
    %cst_1 = arith.constant 6.400000e+01 : f32
    %3 = vector.broadcast %cst_1 : f32 to vector<16x1xf32>
    %4 = arith.divf %2, %3 : vector<16x1xf32>
    %5 = vector.broadcast %4 : vector<16x1xf32> to vector<16x64xf32>
    %6 = arith.subf %0, %5 : vector<16x64xf32>
    %7 = arith.mulf %6, %6 : vector<16x64xf32>
    %cst_2 = arith.constant dense<0.000000e+00> : vector<16xf32>
    %8 = vector.multi_reduction <add>, %7, %cst_2 [1] : vector<16x64xf32> to vector<16xf32>
    %9 = vector.shape_cast %8 : vector<16xf32> to vector<16x1xf32>
    %cst_3 = arith.constant 6.400000e+01 : f32
    %10 = vector.broadcast %cst_3 : f32 to vector<16x1xf32>
    %11 = arith.divf %9, %10 : vector<16x1xf32>
    %cst_4 = arith.constant 9.99999974E-6 : f32
    %12 = vector.broadcast %cst_4 : f32 to vector<16x1xf32>
    %13 = arith.addf %11, %12 : vector<16x1xf32>
    %14 = math.rsqrt %13 : vector<16x1xf32>
    %15 = vector.broadcast %14 : vector<16x1xf32> to vector<16x64xf32>
    %16 = arith.mulf %6, %15 : vector<16x64xf32>
    %c0_5 = arith.constant 0 : index
    %c0_6 = arith.constant 0 : index
    %17 = vector.load %arg2[%c0_5, %c0_6] : memref<1x64xf32, #tpu.memory_space<vmem>>, vector<1x64xf32>
    %18 = vector.broadcast %17 : vector<1x64xf32> to vector<16x64xf32>
    %19 = arith.mulf %16, %18 : vector<16x64xf32>
    %c0_7 = arith.constant 0 : index
    %c0_8 = arith.constant 0 : index
    %20 = vector.load %arg3[%c0_7, %c0_8] : memref<1x64xf32, #tpu.memory_space<vmem>>, vector<1x64xf32>
    %21 = vector.broadcast %20 : vector<1x64xf32> to vector<16x64xf32>
    %22 = arith.addf %19, %21 : vector<16x64xf32>
    %23 = arith.truncf %22 : vector<16x64xf32> to vector<16x64xbf16>
    %c0_9 = arith.constant 0 : index
    %c0_10 = arith.constant 0 : index
    %24 = vector.load %arg4[%c0_9, %c0_10] : memref<64x64xbf16, #tpu.memory_space<vmem>>, vector<64x64xbf16>
    %cst_11 = arith.constant dense<0.000000e+00> : vector<16x64xf32>
    %25 = tpu.matmul %23, %24, %cst_11 {dimension_numbers = #tpu.dot_dimension_numbers<[1], [0], [0], [1], [0, 0, 1, 1], [], []>} : vector<16x64xbf16>, vector<64x64xbf16>, vector<16x64xf32> -> vector<16x64xf32>
    %c0_12 = arith.constant 0 : index
    %c0_13 = arith.constant 0 : index
    %26 = vector.load %arg5[%c0_12, %c0_13] : memref<1x64xf32, #tpu.memory_space<vmem>>, vector<1x64xf32>
    %27 = vector.broadcast %26 : vector<1x64xf32> to vector<16x64xf32>
    %28 = arith.addf %25, %27 : vector<16x64xf32>
    %29 = arith.negf %28 : vector<16x64xf32>
    %30 = math.exp %29 : vector<16x64xf32>
    %cst_14 = arith.constant 1.000000e+00 : f32
    %31 = vector.broadcast %cst_14 : f32 to vector<16x64xf32>
    %32 = arith.addf %31, %30 : vector<16x64xf32>
    %33 = arith.divf %31, %32 : vector<16x64xf32>
    %34 = arith.mulf %28, %33 : vector<16x64xf32>
    %c0_15 = arith.constant 0 : index
    %c0_16 = arith.constant 0 : index
    %35 = vector.load %arg6[%c0_15, %c0_16] : memref<16x64xf32, #tpu.memory_space<vmem>>, vector<16x64xf32>
    tpu.vector_store %arg6[%c0_15, %c0_16], %34 {strides = array<i32>} : memref<16x64xf32, #tpu.memory_space<vmem>>, vector<16x64xf32>,
    return
  }
  func.func @transform_0(%arg0: i32) -> (i32, i32) {
    %c0_i32 = arith.constant 0 : i32
    %c0_i32_0 = arith.constant 0 : i32
    return %arg0, %c0_i32 : i32, i32
  }
  func.func @transform_1(%arg0: i32) -> (i32, i32) {
    %c0_i32 = arith.constant 0 : i32
    %c0_i32_0 = arith.constant 0 : i32
    %c0_i32_1 = arith.constant 0 : i32
    return %c0_i32, %c0_i32_0 : i32, i32
  }
  func.func @transform_2(%arg0: i32) -> (i32, i32) {
    %c0_i32 = arith.constant 0 : i32
    %c0_i32_0 = arith.constant 0 : i32
    %c0_i32_1 = arith.constant 0 : i32
    return %c0_i32, %c0_i32_0 : i32, i32
  }
  func.func @transform_3(%arg0: i32) -> (i32, i32) {
    %c0_i32 = arith.constant 0 : i32
    %c0_i32_0 = arith.constant 0 : i32
    %c0_i32_1 = arith.constant 0 : i32
    return %c0_i32, %c0_i32_0 : i32, i32
  }
  func.func @transform_4(%arg0: i32) -> (i32, i32) {
    %c0_i32 = arith.constant 0 : i32
    %c0_i32_0 = arith.constant 0 : i32
    %c0_i32_1 = arith.constant 0 : i32
    return %c0_i32, %c0_i32_0 : i32, i32
  }
  func.func @transform_5(%arg0: i32) -> (i32, i32) {
    %c0_i32 = arith.constant 0 : i32
    %c0_i32_0 = arith.constant 0 : i32
    return %arg0, %c0_i32 : i32, i32
  }
}

module attributes {stable_mosaic.version = 11 : i64} {
  func.func @kernel(%arg0: i32, %arg1: memref<16x64xf32, #tpu.memory_space<vmem>>, %arg2: memref<1x64xf32, #tpu.memory_space<vmem>>, %arg3: memref<1x64xf32, #tpu.memory_space<vmem>>, %arg4: memref<64x192xbf16, #tpu.memory_space<vmem>>, %arg5: memref<1x192xf32, #tpu.memory_space<vmem>>, %arg6: memref<16x192xf32, #tpu.memory_space<vmem>>) attributes {dimension_semantics = [#tpu.dimension_semantics<parallel>], iteration_bounds = array<i64: 1>, scalar_prefetch = 0 : i64, scratch_operands = 0 : i64, tpu.core_type = #tpu.core_type<tc>, window_params = [{transform_indices = @transform_0, window_bounds = array<i64: 16, 64>}, {pipeline_mode = #tpu.pipeline_mode<synchronous>, transform_indices = @transform_1, window_bounds = array<i64: 1, 64>}, {pipeline_mode = #tpu.pipeline_mode<synchronous>, transform_indices = @transform_2, window_bounds = array<i64: 1, 64>}, {pipeline_mode = #tpu.pipeline_mode<synchronous>, transform_indices = @transform_3, window_bounds = array<i64: 64, 192>}, {pipeline_mode = #tpu.pipeline_mode<synchronous>, transform_indices = @transform_4, window_bounds = array<i64: 1, 192>}, {transform_indices = @transform_5, window_bounds = array<i64: 16, 192>}]} {
    %c0 = arith.constant 0 : index
    %c0_0 = arith.constant 0 : index
    %0 = vector.load %arg1[%c0, %c0_0] : memref<16x64xf32, #tpu.memory_space<vmem>>, vector<16x64xf32>
    %cst = arith.constant dense<0.000000e+00> : vector<16xf32>
    %1 = vector.multi_reduction <add>, %0, %cst [1] : vector<16x64xf32> to vector<16xf32>
    %2 = vector.shape_cast %1 : vector<16xf32> to vector<16x1xf32>
    %cst_1 = arith.constant 6.400000e+01 : f32
    %3 = vector.broadcast %cst_1 : f32 to vector<16x1xf32>
    %4 = arith.divf %2, %3 : vector<16x1xf32>
    %5 = vector.broadcast %4 : vector<16x1xf32> to vector<16x64xf32>
    %6 = arith.subf %0, %5 : vector<16x64xf32>
    %7 = arith.mulf %6, %6 : vector<16x64xf32>
    %cst_2 = arith.constant dense<0.000000e+00> : vector<16xf32>
    %8 = vector.multi_reduction <add>, %7, %cst_2 [1] : vector<16x64xf32> to vector<16xf32>
    %9 = vector.shape_cast %8 : vector<16xf32> to vector<16x1xf32>
    %cst_3 = arith.constant 6.400000e+01 : f32
    %10 = vector.broadcast %cst_3 : f32 to vector<16x1xf32>
    %11 = arith.divf %9, %10 : vector<16x1xf32>
    %cst_4 = arith.constant 9.99999974E-6 : f32
    %12 = vector.broadcast %cst_4 : f32 to vector<16x1xf32>
    %13 = arith.addf %11, %12 : vector<16x1xf32>
    %14 = math.rsqrt %13 : vector<16x1xf32>
    %15 = vector.broadcast %14 : vector<16x1xf32> to vector<16x64xf32>
    %16 = arith.mulf %6, %15 : vector<16x64xf32>
    %c0_5 = arith.constant 0 : index
    %c0_6 = arith.constant 0 : index
    %17 = vector.load %arg2[%c0_5, %c0_6] : memref<1x64xf32, #tpu.memory_space<vmem>>, vector<1x64xf32>
    %18 = vector.broadcast %17 : vector<1x64xf32> to vector<16x64xf32>
    %19 = arith.mulf %16, %18 : vector<16x64xf32>
    %c0_7 = arith.constant 0 : index
    %c0_8 = arith.constant 0 : index
    %20 = vector.load %arg3[%c0_7, %c0_8] : memref<1x64xf32, #tpu.memory_space<vmem>>, vector<1x64xf32>
    %21 = vector.broadcast %20 : vector<1x64xf32> to vector<16x64xf32>
    %22 = arith.addf %19, %21 : vector<16x64xf32>
    %23 = arith.truncf %22 : vector<16x64xf32> to vector<16x64xbf16>
    %c0_9 = arith.constant 0 : index
    %c0_10 = arith.constant 0 : index
    %24 = vector.load %arg4[%c0_9, %c0_10] : memref<64x192xbf16, #tpu.memory_space<vmem>>, vector<64x192xbf16>
    %cst_11 = arith.constant dense<0.000000e+00> : vector<16x192xf32>
    %25 = tpu.matmul %23, %24, %cst_11 {dimension_numbers = #tpu.dot_dimension_numbers<[1], [0], [0], [1], [0, 0, 1, 1], [], []>} : vector<16x64xbf16>, vector<64x192xbf16>, vector<16x192xf32> -> vector<16x192xf32>
    %c0_12 = arith.constant 0 : index
    %c0_13 = arith.constant 0 : index
    %26 = vector.load %arg5[%c0_12, %c0_13] : memref<1x192xf32, #tpu.memory_space<vmem>>, vector<1x192xf32>
    %27 = vector.broadcast %26 : vector<1x192xf32> to vector<16x192xf32>
    %28 = arith.addf %25, %27 : vector<16x192xf32>
    %c0_14 = arith.constant 0 : index
    %c0_15 = arith.constant 0 : index
    %29 = vector.load %arg6[%c0_14, %c0_15] : memref<16x192xf32, #tpu.memory_space<vmem>>, vector<16x192xf32>
    tpu.vector_store %arg6[%c0_14, %c0_15], %28 {strides = array<i32>} : memref<16x192xf32, #tpu.memory_space<vmem>>, vector<16x192xf32>,
    return
  }
  func.func @transform_0(%arg0: i32) -> (i32, i32) {
    %c0_i32 = arith.constant 0 : i32
    %c0_i32_0 = arith.constant 0 : i32
    return %arg0, %c0_i32 : i32, i32
  }
  func.func @transform_1(%arg0: i32) -> (i32, i32) {
    %c0_i32 = arith.constant 0 : i32
    %c0_i32_0 = arith.constant 0 : i32
    %c0_i32_1 = arith.constant 0 : i32
    return %c0_i32, %c0_i32_0 : i32, i32
  }
  func.func @transform_2(%arg0: i32) -> (i32, i32) {
    %c0_i32 = arith.constant 0 : i32
    %c0_i32_0 = arith.constant 0 : i32
    %c0_i32_1 = arith.constant 0 : i32
    return %c0_i32, %c0_i32_0 : i32, i32
  }
  func.func @transform_3(%arg0: i32) -> (i32, i32) {
    %c0_i32 = arith.constant 0 : i32
    %c0_i32_0 = arith.constant 0 : i32
    %c0_i32_1 = arith.constant 0 : i32
    return %c0_i32, %c0_i32_0 : i32, i32
  }
  func.func @transform_4(%arg0: i32) -> (i32, i32) {
    %c0_i32 = arith.constant 0 : i32
    %c0_i32_0 = arith.constant 0 : i32
    %c0_i32_1 = arith.constant 0 : i32
    return %c0_i32, %c0_i32_0 : i32, i32
  }
  func.func @transform_5(%arg0: i32) -> (i32, i32) {
    %c0_i32 = arith.constant 0 : i32
    %c0_i32_0 = arith.constant 0 : i32
    return %arg0, %c0_i32 : i32, i32
  }
}

module attributes {stable_mosaic.version = 11 : i64} {
  func.func @kernel(%arg0: i32, %arg1: memref<16x64xf32, #tpu.memory_space<vmem>>, %arg2: memref<64x64xbf16, #tpu.memory_space<vmem>>, %arg3: memref<1x64xf32, #tpu.memory_space<vmem>>, %arg4: memref<16x64xf32, #tpu.memory_space<vmem>>, %arg5: memref<16x64xf32, #tpu.memory_space<vmem>>) attributes {dimension_semantics = [#tpu.dimension_semantics<parallel>], iteration_bounds = array<i64: 1>, scalar_prefetch = 0 : i64, scratch_operands = 0 : i64, tpu.core_type = #tpu.core_type<tc>, window_params = [{transform_indices = @transform_0, window_bounds = array<i64: 16, 64>}, {pipeline_mode = #tpu.pipeline_mode<synchronous>, transform_indices = @transform_1, window_bounds = array<i64: 64, 64>}, {pipeline_mode = #tpu.pipeline_mode<synchronous>, transform_indices = @transform_2, window_bounds = array<i64: 1, 64>}, {transform_indices = @transform_3, window_bounds = array<i64: 16, 64>}, {transform_indices = @transform_4, window_bounds = array<i64: 16, 64>}]} {
    %c0 = arith.constant 0 : index
    %c0_0 = arith.constant 0 : index
    %0 = vector.load %arg1[%c0, %c0_0] : memref<16x64xf32, #tpu.memory_space<vmem>>, vector<16x64xf32>
    %1 = arith.truncf %0 : vector<16x64xf32> to vector<16x64xbf16>
    %c0_1 = arith.constant 0 : index
    %c0_2 = arith.constant 0 : index
    %2 = vector.load %arg2[%c0_1, %c0_2] : memref<64x64xbf16, #tpu.memory_space<vmem>>, vector<64x64xbf16>
    %cst = arith.constant dense<0.000000e+00> : vector<16x64xf32>
    %3 = tpu.matmul %1, %2, %cst {dimension_numbers = #tpu.dot_dimension_numbers<[1], [0], [0], [1], [0, 0, 1, 1], [], []>} : vector<16x64xbf16>, vector<64x64xbf16>, vector<16x64xf32> -> vector<16x64xf32>
    %c0_3 = arith.constant 0 : index
    %c0_4 = arith.constant 0 : index
    %4 = vector.load %arg3[%c0_3, %c0_4] : memref<1x64xf32, #tpu.memory_space<vmem>>, vector<1x64xf32>
    %5 = vector.broadcast %4 : vector<1x64xf32> to vector<16x64xf32>
    %6 = arith.addf %3, %5 : vector<16x64xf32>
    %cst_5 = arith.constant 5.000000e-01 : f32
    %7 = vector.broadcast %cst_5 : f32 to vector<16x64xf32>
    %8 = arith.mulf %6, %7 : vector<16x64xf32>
    %c0_6 = arith.constant 0 : index
    %c0_7 = arith.constant 0 : index
    %9 = vector.load %arg4[%c0_6, %c0_7] : memref<16x64xf32, #tpu.memory_space<vmem>>, vector<16x64xf32>
    %10 = arith.addf %8, %9 : vector<16x64xf32>
    %c0_8 = arith.constant 0 : index
    %c0_9 = arith.constant 0 : index
    %11 = vector.load %arg5[%c0_8, %c0_9] : memref<16x64xf32, #tpu.memory_space<vmem>>, vector<16x64xf32>
    tpu.vector_store %arg5[%c0_8, %c0_9], %10 {strides = array<i32>} : memref<16x64xf32, #tpu.memory_space<vmem>>, vector<16x64xf32>,
    return
  }
  func.func @transform_0(%arg0: i32) -> (i32, i32) {
    %c0_i32 = arith.constant 0 : i32
    %c0_i32_0 = arith.constant 0 : i32
    return %arg0, %c0_i32 : i32, i32
  }
  func.func @transform_1(%arg0: i32) -> (i32, i32) {
    %c0_i32 = arith.constant 0 : i32
    %c0_i32_0 = arith.constant 0 : i32
    %c0_i32_1 = arith.constant 0 : i32
    return %c0_i32, %c0_i32_0 : i32, i32
  }
  func.func @transform_2(%arg0: i32) -> (i32, i32) {
    %c0_i32 = arith.constant 0 : i32
    %c0_i32_0 = arith.constant 0 : i32
    %c0_i32_1 = arith.constant 0 : i32
    return %c0_i32, %c0_i32_0 : i32, i32
  }
  func.func @transform_3(%arg0: i32) -> (i32, i32) {
    %c0_i32 = arith.constant 0 : i32
    %c0_i32_0 = arith.constant 0 : i32
    return %arg0, %c0_i32 : i32, i32
  }
  func.func @transform_4(%arg0: i32) -> (i32, i32) {
    %c0_i32 = arith.constant 0 : i32
    %c0_i32_0 = arith.constant 0 : i32
    return %arg0, %c0_i32 : i32, i32
  }
}

module attributes {stable_mosaic.version = 11 : i64} {
  func.func @_attention_kernel(%arg0: i32, %arg1: memref<1x4x8x16xf32, #tpu.memory_space<vmem>>, %arg2: memref<1x4x8x16xf32, #tpu.memory_space<vmem>>, %arg3: memref<1x4x8x16xf32, #tpu.memory_space<vmem>>, %arg4: memref<4x16x64xbf16, #tpu.memory_space<vmem>>, %arg5: memref<1x64xf32, #tpu.memory_space<vmem>>, %arg6: memref<1x8x64xf32, #tpu.memory_space<vmem>>, %arg7: memref<1x8x64xf32, #tpu.memory_space<vmem>>) attributes {dimension_semantics = [#tpu.dimension_semantics<parallel>], iteration_bounds = array<i64: 2>, scalar_prefetch = 0 : i64, scratch_operands = 0 : i64, tpu.core_type = #tpu.core_type<tc>, window_params = [{transform_indices = @transform_0, window_bounds = array<i64: 1, 4, 8, 16>}, {transform_indices = @transform_1, window_bounds = array<i64: 1, 4, 8, 16>}, {transform_indices = @transform_2, window_bounds = array<i64: 1, 4, 8, 16>}, {pipeline_mode = #tpu.pipeline_mode<synchronous>, transform_indices = @transform_3, window_bounds = array<i64: 4, 16, 64>}, {pipeline_mode = #tpu.pipeline_mode<synchronous>, transform_indices = @transform_4, window_bounds = array<i64: 1, 64>}, {transform_indices = @transform_5, window_bounds = array<i64: 1, 8, 64>}, {transform_indices = @transform_6, window_bounds = array<i64: 1, 8, 64>}]} {
    %c0 = arith.constant 0 : index
    %c0_0 = arith.constant 0 : index
    %c0_1 = arith.constant 0 : index
    %0 = vector.load %arg6[%c0, %c0_0, %c0_1] : memref<1x8x64xf32, #tpu.memory_space<vmem>>, vector<1x8x64xf32>
    %1 = vector.shape_cast %0 : vector<1x8x64xf32> to vector<8x64xf32>
    %c0_2 = arith.constant 0 : index
    %c0_3 = arith.constant 0 : index
    %2 = vector.load %arg5[%c0_2, %c0_3] : memref<1x64xf32, #tpu.memory_space<vmem>>, vector<1x64xf32>
    %3 = vector.broadcast %2 : vector<1x64xf32> to vector<8x64xf32>
    %4 = arith.addf %1, %3 : vector<8x64xf32>
    %c0_4 = arith.constant 0 : index
    %c0_5 = arith.constant 0 : index
    %c0_6 = arith.constant 0 : index
    %c0_7 = arith.constant 0 : index
    %5 = vector.load %arg1[%c0_4, %c0_5, %c0_6, %c0_7] : memref<1x4x8x16xf32, #tpu.memory_space<vmem>>, vector<1x1x8x16xf32>
    %6 = vector.shape_cast %5 : vector<1x1x8x16xf32> to vector<8x16xf32>
    %7 = arith.truncf %6 : vector<8x16xf32> to vector<8x16xbf16>
    %c0_8 = arith.constant 0 : index
    %c0_9 = arith.constant 0 : index
    %c0_10 = arith.constant 0 : index
    %c0_11 = arith.constant 0 : index
    %8 = vector.load %arg2[%c0_8, %c0_9, %c0_10, %c0_11] : memref<1x4x8x16xf32, #tpu.memory_space<vmem>>, vector<1x1x8x16xf32>
    %9 = vector.shape_cast %8 : vector<1x1x8x16xf32> to vector<8x16xf32>
    %10 = arith.truncf %9 : vector<8x16xf32> to vector<8x16xbf16>
    %c0_12 = arith.constant 0 : index
    %c0_13 = arith.constant 0 : index
    %c0_14 = arith.constant 0 : index
    %c0_15 = arith.constant 0 : index
    %11 = vector.load %arg3[%c0_12, %c0_13, %c0_14, %c0_15] : memref<1x4x8x16xf32, #tpu.memory_space<vmem>>, vector<1x1x8x16xf32>
    %12 = vector.shape_cast %11 : vector<1x1x8x16xf32> to vector<8x16xf32>
    %13 = arith.truncf %12 : vector<8x16xf32> to vector<8x16xbf16>
    %cst = arith.constant dense<0.000000e+00> : vector<8x8xf32>
    %14 = tpu.matmul %7, %10, %cst {dimension_numbers = #tpu.dot_dimension_numbers<[1], [1], [0], [0], [0, 0, 1, 0], [], []>} : vector<8x16xbf16>, vector<8x16xbf16>, vector<8x8xf32> -> vector<8x8xf32>
    %cst_16 = arith.constant 2.500000e-01 : f32
    %15 = vector.broadcast %cst_16 : f32 to vector<8x8xf32>
    %16 = arith.mulf %14, %15 : vector<8x8xf32>
    %cst_17 = arith.constant dense<0xFF800000> : vector<8xf32>
    %17 = vector.multi_reduction <maximumf>, %16, %cst_17 [1] : vector<8x8xf32> to vector<8xf32>
    %18 = vector.shape_cast %17 : vector<8xf32> to vector<8x1xf32>
    %19 = vector.broadcast %18 : vector<8x1xf32> to vector<8x8xf32>
    %20 = arith.subf %16, %19 : vector<8x8xf32>
    %21 = math.exp %20 : vector<8x8xf32>
    %cst_18 = arith.constant dense<0.000000e+00> : vector<8xf32>
    %22 = vector.multi_reduction <add>, %21, %cst_18 [1] : vector<8x8xf32> to vector<8xf32>
    %23 = vector.shape_cast %22 : vector<8xf32> to vector<8x1xf32>
    %24 = tpu.reciprocal %23 {approx = true} : vector<8x1xf32> -> vector<8x1xf32>
    %25 = vector.broadcast %24 : vector<8x1xf32> to vector<8x8xf32>
    %26 = arith.mulf %21, %25 : vector<8x8xf32>
    %27 = arith.truncf %26 : vector<8x8xf32> to vector<8x8xbf16>
    %cst_19 = arith.constant dense<0.000000e+00> : vector<8x16xf32>
    %28 = tpu.matmul %27, %13, %cst_19 {dimension_numbers = #tpu.dot_dimension_numbers<[1], [0], [0], [1], [0, 0, 1, 1], [], []>} : vector<8x8xbf16>, vector<8x16xbf16>, vector<8x16xf32> -> vector<8x16xf32>
    %29 = arith.truncf %28 : vector<8x16xf32> to vector<8x16xbf16>
    %c0_20 = arith.constant 0 : index
    %c0_21 = arith.constant 0 : index
    %c0_22 = arith.constant 0 : index
    %30 = vector.load %arg4[%c0_20, %c0_21, %c0_22] : memref<4x16x64xbf16, #tpu.memory_space<vmem>>, vector<1x16x64xbf16>
    %31 = vector.shape_cast %30 : vector<1x16x64xbf16> to vector<16x64xbf16>
    %cst_23 = arith.constant dense<0.000000e+00> : vector<8x64xf32>
    %32 = tpu.matmul %29, %31, %cst_23 {dimension_numbers = #tpu.dot_dimension_numbers<[1], [0], [0], [1], [0, 0, 1, 1], [], []>} : vector<8x16xbf16>, vector<16x64xbf16>, vector<8x64xf32> -> vector<8x64xf32>
    %33 = arith.addf %4, %32 : vector<8x64xf32>
    %c0_24 = arith.constant 0 : index
    %c1 = arith.constant 1 : index
    %c0_25 = arith.constant 0 : index
    %c0_26 = arith.constant 0 : index
    %34 = vector.load %arg1[%c0_24, %c1, %c0_25, %c0_26] : memref<1x4x8x16xf32, #tpu.memory_space<vmem>>, vector<1x1x8x16xf32>
    %35 = vector.shape_cast %34 : vector<1x1x8x16xf32> to vector<8x16xf32>
    %36 = arith.truncf %35 : vector<8x16xf32> to vector<8x16xbf16>
    %c0_27 = arith.constant 0 : index
    %c1_28 = arith.constant 1 : index
    %c0_29 = arith.constant 0 : index
    %c0_30 = arith.constant 0 : index
    %37 = vector.load %arg2[%c0_27, %c1_28, %c0_29, %c0_30] : memref<1x4x8x16xf32, #tpu.memory_space<vmem>>, vector<1x1x8x16xf32>
    %38 = vector.shape_cast %37 : vector<1x1x8x16xf32> to vector<8x16xf32>
    %39 = arith.truncf %38 : vector<8x16xf32> to vector<8x16xbf16>
    %c0_31 = arith.constant 0 : index
    %c1_32 = arith.constant 1 : index
    %c0_33 = arith.constant 0 : index
    %c0_34 = arith.constant 0 : index
    %40 = vector.load %arg3[%c0_31, %c1_32, %c0_33, %c0_34] : memref<1x4x8x16xf32, #tpu.memory_space<vmem>>, vector<1x1x8x16xf32>
    %41 = vector.shape_cast %40 : vector<1x1x8x16xf32> to vector<8x16xf32>
    %42 = arith.truncf %41 : vector<8x16xf32> to vector<8x16xbf16>
    %cst_35 = arith.constant dense<0.000000e+00> : vector<8x8xf32>
    %43 = tpu.matmul %36, %39, %cst_35 {dimension_numbers = #tpu.dot_dimension_numbers<[1], [1], [0], [0], [0, 0, 1, 0], [], []>} : vector<8x16xbf16>, vector<8x16xbf16>, vector<8x8xf32> -> vector<8x8xf32>
    %cst_36 = arith.constant 2.500000e-01 : f32
    %44 = vector.broadcast %cst_36 : f32 to vector<8x8xf32>
    %45 = arith.mulf %43, %44 : vector<8x8xf32>
    %cst_37 = arith.constant dense<0xFF800000> : vector<8xf32>
    %46 = vector.multi_reduction <maximumf>, %45, %cst_37 [1] : vector<8x8xf32> to vector<8xf32>
    %47 = vector.shape_cast %46 : vector<8xf32> to vector<8x1xf32>
    %48 = vector.broadcast %47 : vector<8x1xf32> to vector<8x8xf32>
    %49 = arith.subf %45, %48 : vector<8x8xf32>
    %50 = math.exp %49 : vector<8x8xf32>
    %cst_38 = arith.constant dense<0.000000e+00> : vector<8xf32>
    %51 = vector.multi_reduction <add>, %50, %cst_38 [1] : vector<8x8xf32> to vector<8xf32>
    %52 = vector.shape_cast %51 : vector<8xf32> to vector<8x1xf32>
    %53 = tpu.reciprocal %52 {approx = true} : vector<8x1xf32> -> vector<8x1xf32>
    %54 = vector.broadcast %53 : vector<8x1xf32> to vector<8x8xf32>
    %55 = arith.mulf %50, %54 : vector<8x8xf32>
    %56 = arith.truncf %55 : vector<8x8xf32> to vector<8x8xbf16>
    %cst_39 = arith.constant dense<0.000000e+00> : vector<8x16xf32>
    %57 = tpu.matmul %56, %42, %cst_39 {dimension_numbers = #tpu.dot_dimension_numbers<[1], [0], [0], [1], [0, 0, 1, 1], [], []>} : vector<8x8xbf16>, vector<8x16xbf16>, vector<8x16xf32> -> vector<8x16xf32>
    %58 = arith.truncf %57 : vector<8x16xf32> to vector<8x16xbf16>
    %c1_40 = arith.constant 1 : index
    %c0_41 = arith.constant 0 : index
    %c0_42 = arith.constant 0 : index
    %59 = vector.load %arg4[%c1_40, %c0_41, %c0_42] : memref<4x16x64xbf16, #tpu.memory_space<vmem>>, vector<1x16x64xbf16>
    %60 = vector.shape_cast %59 : vector<1x16x64xbf16> to vector<16x64xbf16>
    %cst_43 = arith.constant dense<0.000000e+00> : vector<8x64xf32>
    %61 = tpu.matmul %58, %60, %cst_43 {dimension_numbers = #tpu.dot_dimension_numbers<[1], [0], [0], [1], [0, 0, 1, 1], [], []>} : vector<8x16xbf16>, vector<16x64xbf16>, vector<8x64xf32> -> vector<8x64xf32>
    %62 = arith.addf %33, %61 : vector<8x64xf32>
    %c0_44 = arith.constant 0 : index
    %c2 = arith.constant 2 : index
    %c0_45 = arith.constant 0 : index
    %c0_46 = arith.constant 0 : index
    %63 = vector.load %arg1[%c0_44, %c2, %c0_45, %c0_46] : memref<1x4x8x16xf32, #tpu.memory_space<vmem>>, vector<1x1x8x16xf32>
    %64 = vector.shape_cast %63 : vector<1x1x8x16xf32> to vector<8x16xf32>
    %65 = arith.truncf %64 : vector<8x16xf32> to vector<8x16xbf16>
    %c0_47 = arith.constant 0 : index
    %c2_48 = arith.constant 2 : index
    %c0_49 = arith.constant 0 : index
    %c0_50 = arith.constant 0 : index
    %66 = vector.load %arg2[%c0_47, %c2_48, %c0_49, %c0_50] : memref<1x4x8x16xf32, #tpu.memory_space<vmem>>, vector<1x1x8x16xf32>
    %67 = vector.shape_cast %66 : vector<1x1x8x16xf32> to vector<8x16xf32>
    %68 = arith.truncf %67 : vector<8x16xf32> to vector<8x16xbf16>
    %c0_51 = arith.constant 0 : index
    %c2_52 = arith.constant 2 : index
    %c0_53 = arith.constant 0 : index
    %c0_54 = arith.constant 0 : index
    %69 = vector.load %arg3[%c0_51, %c2_52, %c0_53, %c0_54] : memref<1x4x8x16xf32, #tpu.memory_space<vmem>>, vector<1x1x8x16xf32>
    %70 = vector.shape_cast %69 : vector<1x1x8x16xf32> to vector<8x16xf32>
    %71 = arith.truncf %70 : vector<8x16xf32> to vector<8x16xbf16>
    %cst_55 = arith.constant dense<0.000000e+00> : vector<8x8xf32>
    %72 = tpu.matmul %65, %68, %cst_55 {dimension_numbers = #tpu.dot_dimension_numbers<[1], [1], [0], [0], [0, 0, 1, 0], [], []>} : vector<8x16xbf16>, vector<8x16xbf16>, vector<8x8xf32> -> vector<8x8xf32>
    %cst_56 = arith.constant 2.500000e-01 : f32
    %73 = vector.broadcast %cst_56 : f32 to vector<8x8xf32>
    %74 = arith.mulf %72, %73 : vector<8x8xf32>
    %cst_57 = arith.constant dense<0xFF800000> : vector<8xf32>
    %75 = vector.multi_reduction <maximumf>, %74, %cst_57 [1] : vector<8x8xf32> to vector<8xf32>
    %76 = vector.shape_cast %75 : vector<8xf32> to vector<8x1xf32>
    %77 = vector.broadcast %76 : vector<8x1xf32> to vector<8x8xf32>
    %78 = arith.subf %74, %77 : vector<8x8xf32>
    %79 = math.exp %78 : vector<8x8xf32>
    %cst_58 = arith.constant dense<0.000000e+00> : vector<8xf32>
    %80 = vector.multi_reduction <add>, %79, %cst_58 [1] : vector<8x8xf32> to vector<8xf32>
    %81 = vector.shape_cast %80 : vector<8xf32> to vector<8x1xf32>
    %82 = tpu.reciprocal %81 {approx = true} : vector<8x1xf32> -> vector<8x1xf32>
    %83 = vector.broadcast %82 : vector<8x1xf32> to vector<8x8xf32>
    %84 = arith.mulf %79, %83 : vector<8x8xf32>
    %85 = arith.truncf %84 : vector<8x8xf32> to vector<8x8xbf16>
    %cst_59 = arith.constant dense<0.000000e+00> : vector<8x16xf32>
    %86 = tpu.matmul %85, %71, %cst_59 {dimension_numbers = #tpu.dot_dimension_numbers<[1], [0], [0], [1], [0, 0, 1, 1], [], []>} : vector<8x8xbf16>, vector<8x16xbf16>, vector<8x16xf32> -> vector<8x16xf32>
    %87 = arith.truncf %86 : vector<8x16xf32> to vector<8x16xbf16>
    %c2_60 = arith.constant 2 : index
    %c0_61 = arith.constant 0 : index
    %c0_62 = arith.constant 0 : index
    %88 = vector.load %arg4[%c2_60, %c0_61, %c0_62] : memref<4x16x64xbf16, #tpu.memory_space<vmem>>, vector<1x16x64xbf16>
    %89 = vector.shape_cast %88 : vector<1x16x64xbf16> to vector<16x64xbf16>
    %cst_63 = arith.constant dense<0.000000e+00> : vector<8x64xf32>
    %90 = tpu.matmul %87, %89, %cst_63 {dimension_numbers = #tpu.dot_dimension_numbers<[1], [0], [0], [1], [0, 0, 1, 1], [], []>} : vector<8x16xbf16>, vector<16x64xbf16>, vector<8x64xf32> -> vector<8x64xf32>
    %91 = arith.addf %62, %90 : vector<8x64xf32>
    %c0_64 = arith.constant 0 : index
    %c3 = arith.constant 3 : index
    %c0_65 = arith.constant 0 : index
    %c0_66 = arith.constant 0 : index
    %92 = vector.load %arg1[%c0_64, %c3, %c0_65, %c0_66] : memref<1x4x8x16xf32, #tpu.memory_space<vmem>>, vector<1x1x8x16xf32>
    %93 = vector.shape_cast %92 : vector<1x1x8x16xf32> to vector<8x16xf32>
    %94 = arith.truncf %93 : vector<8x16xf32> to vector<8x16xbf16>
    %c0_67 = arith.constant 0 : index
    %c3_68 = arith.constant 3 : index
    %c0_69 = arith.constant 0 : index
    %c0_70 = arith.constant 0 : index
    %95 = vector.load %arg2[%c0_67, %c3_68, %c0_69, %c0_70] : memref<1x4x8x16xf32, #tpu.memory_space<vmem>>, vector<1x1x8x16xf32>
    %96 = vector.shape_cast %95 : vector<1x1x8x16xf32> to vector<8x16xf32>
    %97 = arith.truncf %96 : vector<8x16xf32> to vector<8x16xbf16>
    %c0_71 = arith.constant 0 : index
    %c3_72 = arith.constant 3 : index
    %c0_73 = arith.constant 0 : index
    %c0_74 = arith.constant 0 : index
    %98 = vector.load %arg3[%c0_71, %c3_72, %c0_73, %c0_74] : memref<1x4x8x16xf32, #tpu.memory_space<vmem>>, vector<1x1x8x16xf32>
    %99 = vector.shape_cast %98 : vector<1x1x8x16xf32> to vector<8x16xf32>
    %100 = arith.truncf %99 : vector<8x16xf32> to vector<8x16xbf16>
    %cst_75 = arith.constant dense<0.000000e+00> : vector<8x8xf32>
    %101 = tpu.matmul %94, %97, %cst_75 {dimension_numbers = #tpu.dot_dimension_numbers<[1], [1], [0], [0], [0, 0, 1, 0], [], []>} : vector<8x16xbf16>, vector<8x16xbf16>, vector<8x8xf32> -> vector<8x8xf32>
    %cst_76 = arith.constant 2.500000e-01 : f32
    %102 = vector.broadcast %cst_76 : f32 to vector<8x8xf32>
    %103 = arith.mulf %101, %102 : vector<8x8xf32>
    %cst_77 = arith.constant dense<0xFF800000> : vector<8xf32>
    %104 = vector.multi_reduction <maximumf>, %103, %cst_77 [1] : vector<8x8xf32> to vector<8xf32>
    %105 = vector.shape_cast %104 : vector<8xf32> to vector<8x1xf32>
    %106 = vector.broadcast %105 : vector<8x1xf32> to vector<8x8xf32>
    %107 = arith.subf %103, %106 : vector<8x8xf32>
    %108 = math.exp %107 : vector<8x8xf32>
    %cst_78 = arith.constant dense<0.000000e+00> : vector<8xf32>
    %109 = vector.multi_reduction <add>, %108, %cst_78 [1] : vector<8x8xf32> to vector<8xf32>
    %110 = vector.shape_cast %109 : vector<8xf32> to vector<8x1xf32>
    %111 = tpu.reciprocal %110 {approx = true} : vector<8x1xf32> -> vector<8x1xf32>
    %112 = vector.broadcast %111 : vector<8x1xf32> to vector<8x8xf32>
    %113 = arith.mulf %108, %112 : vector<8x8xf32>
    %114 = arith.truncf %113 : vector<8x8xf32> to vector<8x8xbf16>
    %cst_79 = arith.constant dense<0.000000e+00> : vector<8x16xf32>
    %115 = tpu.matmul %114, %100, %cst_79 {dimension_numbers = #tpu.dot_dimension_numbers<[1], [0], [0], [1], [0, 0, 1, 1], [], []>} : vector<8x8xbf16>, vector<8x16xbf16>, vector<8x16xf32> -> vector<8x16xf32>
    %116 = arith.truncf %115 : vector<8x16xf32> to vector<8x16xbf16>
    %c3_80 = arith.constant 3 : index
    %c0_81 = arith.constant 0 : index
    %c0_82 = arith.constant 0 : index
    %117 = vector.load %arg4[%c3_80, %c0_81, %c0_82] : memref<4x16x64xbf16, #tpu.memory_space<vmem>>, vector<1x16x64xbf16>
    %118 = vector.shape_cast %117 : vector<1x16x64xbf16> to vector<16x64xbf16>
    %cst_83 = arith.constant dense<0.000000e+00> : vector<8x64xf32>
    %119 = tpu.matmul %116, %118, %cst_83 {dimension_numbers = #tpu.dot_dimension_numbers<[1], [0], [0], [1], [0, 0, 1, 1], [], []>} : vector<8x16xbf16>, vector<16x64xbf16>, vector<8x64xf32> -> vector<8x64xf32>
    %120 = arith.addf %91, %119 : vector<8x64xf32>
    %c0_84 = arith.constant 0 : index
    %c0_85 = arith.constant 0 : index
    %c0_86 = arith.constant 0 : index
    %121 = vector.load %arg7[%c0_84, %c0_85, %c0_86] : memref<1x8x64xf32, #tpu.memory_space<vmem>>, vector<1x8x64xf32>
    %122 = vector.shape_cast %121 : vector<1x8x64xf32> to vector<8x64xf32>
    %123 = vector.shape_cast %120 : vector<8x64xf32> to vector<1x8x64xf32>
    tpu.vector_store %arg7[%c0_84, %c0_85, %c0_86], %123 {strides = array<i32>} : memref<1x8x64xf32, #tpu.memory_space<vmem>>, vector<1x8x64xf32>,
    return
  }
  func.func @transform_0(%arg0: i32) -> (i32, i32, i32, i32) {
    %c0_i32 = arith.constant 0 : i32
    %c0_i32_0 = arith.constant 0 : i32
    %c0_i32_1 = arith.constant 0 : i32
    %c0_i32_2 = arith.constant 0 : i32
    return %arg0, %c0_i32, %c0_i32_0, %c0_i32_1 : i32, i32, i32, i32
  }
  func.func @transform_1(%arg0: i32) -> (i32, i32, i32, i32) {
    %c0_i32 = arith.constant 0 : i32
    %c0_i32_0 = arith.constant 0 : i32
    %c0_i32_1 = arith.constant 0 : i32
    %c0_i32_2 = arith.constant 0 : i32
    return %arg0, %c0_i32, %c0_i32_0, %c0_i32_1 : i32, i32, i32, i32
  }
  func.func @transform_2(%arg0: i32) -> (i32, i32, i32, i32) {
    %c0_i32 = arith.constant 0 : i32
    %c0_i32_0 = arith.constant 0 : i32
    %c0_i32_1 = arith.constant 0 : i32
    %c0_i32_2 = arith.constant 0 : i32
    return %arg0, %c0_i32, %c0_i32_0, %c0_i32_1 : i32, i32, i32, i32
  }
  func.func @transform_3(%arg0: i32) -> (i32, i32, i32) {
    %c0_i32 = arith.constant 0 : i32
    %c0_i32_0 = arith.constant 0 : i32
    %c0_i32_1 = arith.constant 0 : i32
    %c0_i32_2 = arith.constant 0 : i32
    return %c0_i32, %c0_i32_0, %c0_i32_1 : i32, i32, i32
  }
  func.func @transform_4(%arg0: i32) -> (i32, i32) {
    %c0_i32 = arith.constant 0 : i32
    %c0_i32_0 = arith.constant 0 : i32
    %c0_i32_1 = arith.constant 0 : i32
    return %c0_i32, %c0_i32_0 : i32, i32
  }
  func.func @transform_5(%arg0: i32) -> (i32, i32, i32) {
    %c0_i32 = arith.constant 0 : i32
    %c0_i32_0 = arith.constant 0 : i32
    %c0_i32_1 = arith.constant 0 : i32
    return %arg0, %c0_i32, %c0_i32_0 : i32, i32, i32
  }
  func.func @transform_6(%arg0: i32) -> (i32, i32, i32) {
    %c0_i32 = arith.constant 0 : i32
    %c0_i32_0 = arith.constant 0 : i32
    %c0_i32_1 = arith.constant 0 : i32
    return %arg0, %c0_i32, %c0_i32_0 : i32, i32, i32
  }
}

module attributes {stable_mosaic.version = 11 : i64} {
  func.func @kernel(%arg0: i32, %arg1: memref<16x64xf32, #tpu.memory_space<vmem>>, %arg2: memref<1x64xf32, #tpu.memory_space<vmem>>, %arg3: memref<1x64xf32, #tpu.memory_space<vmem>>, %arg4: memref<64x64xbf16, #tpu.memory_space<vmem>>, %arg5: memref<1x64xf32, #tpu.memory_space<vmem>>, %arg6: memref<64x64xbf16, #tpu.memory_space<vmem>>, %arg7: memref<1x64xf32, #tpu.memory_space<vmem>>, %arg8: memref<16x64xf32, #tpu.memory_space<vmem>>) attributes {dimension_semantics = [#tpu.dimension_semantics<parallel>], iteration_bounds = array<i64: 1>, scalar_prefetch = 0 : i64, scratch_operands = 0 : i64, tpu.core_type = #tpu.core_type<tc>, window_params = [{transform_indices = @transform_0, window_bounds = array<i64: 16, 64>}, {pipeline_mode = #tpu.pipeline_mode<synchronous>, transform_indices = @transform_1, window_bounds = array<i64: 1, 64>}, {pipeline_mode = #tpu.pipeline_mode<synchronous>, transform_indices = @transform_2, window_bounds = array<i64: 1, 64>}, {pipeline_mode = #tpu.pipeline_mode<synchronous>, transform_indices = @transform_3, window_bounds = array<i64: 64, 64>}, {pipeline_mode = #tpu.pipeline_mode<synchronous>, transform_indices = @transform_4, window_bounds = array<i64: 1, 64>}, {pipeline_mode = #tpu.pipeline_mode<synchronous>, transform_indices = @transform_5, window_bounds = array<i64: 64, 64>}, {pipeline_mode = #tpu.pipeline_mode<synchronous>, transform_indices = @transform_6, window_bounds = array<i64: 1, 64>}, {transform_indices = @transform_7, window_bounds = array<i64: 16, 64>}]} {
    %c0 = arith.constant 0 : index
    %c0_0 = arith.constant 0 : index
    %0 = vector.load %arg1[%c0, %c0_0] : memref<16x64xf32, #tpu.memory_space<vmem>>, vector<16x64xf32>
    %cst = arith.constant dense<0.000000e+00> : vector<16xf32>
    %1 = vector.multi_reduction <add>, %0, %cst [1] : vector<16x64xf32> to vector<16xf32>
    %2 = vector.shape_cast %1 : vector<16xf32> to vector<16x1xf32>
    %cst_1 = arith.constant 6.400000e+01 : f32
    %3 = vector.broadcast %cst_1 : f32 to vector<16x1xf32>
    %4 = arith.divf %2, %3 : vector<16x1xf32>
    %5 = vector.broadcast %4 : vector<16x1xf32> to vector<16x64xf32>
    %6 = arith.subf %0, %5 : vector<16x64xf32>
    %7 = arith.mulf %6, %6 : vector<16x64xf32>
    %cst_2 = arith.constant dense<0.000000e+00> : vector<16xf32>
    %8 = vector.multi_reduction <add>, %7, %cst_2 [1] : vector<16x64xf32> to vector<16xf32>
    %9 = vector.shape_cast %8 : vector<16xf32> to vector<16x1xf32>
    %cst_3 = arith.constant 6.400000e+01 : f32
    %10 = vector.broadcast %cst_3 : f32 to vector<16x1xf32>
    %11 = arith.divf %9, %10 : vector<16x1xf32>
    %cst_4 = arith.constant 9.99999974E-6 : f32
    %12 = vector.broadcast %cst_4 : f32 to vector<16x1xf32>
    %13 = arith.addf %11, %12 : vector<16x1xf32>
    %14 = math.rsqrt %13 : vector<16x1xf32>
    %15 = vector.broadcast %14 : vector<16x1xf32> to vector<16x64xf32>
    %16 = arith.mulf %6, %15 : vector<16x64xf32>
    %c0_5 = arith.constant 0 : index
    %c0_6 = arith.constant 0 : index
    %17 = vector.load %arg2[%c0_5, %c0_6] : memref<1x64xf32, #tpu.memory_space<vmem>>, vector<1x64xf32>
    %18 = vector.broadcast %17 : vector<1x64xf32> to vector<16x64xf32>
    %19 = arith.mulf %16, %18 : vector<16x64xf32>
    %c0_7 = arith.constant 0 : index
    %c0_8 = arith.constant 0 : index
    %20 = vector.load %arg3[%c0_7, %c0_8] : memref<1x64xf32, #tpu.memory_space<vmem>>, vector<1x64xf32>
    %21 = vector.broadcast %20 : vector<1x64xf32> to vector<16x64xf32>
    %22 = arith.addf %19, %21 : vector<16x64xf32>
    %23 = arith.truncf %22 : vector<16x64xf32> to vector<16x64xbf16>
    %c0_9 = arith.constant 0 : index
    %c0_10 = arith.constant 0 : index
    %24 = vector.load %arg4[%c0_9, %c0_10] : memref<64x64xbf16, #tpu.memory_space<vmem>>, vector<64x64xbf16>
    %cst_11 = arith.constant dense<0.000000e+00> : vector<16x64xf32>
    %25 = tpu.matmul %23, %24, %cst_11 {dimension_numbers = #tpu.dot_dimension_numbers<[1], [0], [0], [1], [0, 0, 1, 1], [], []>} : vector<16x64xbf16>, vector<64x64xbf16>, vector<16x64xf32> -> vector<16x64xf32>
    %c0_12 = arith.constant 0 : index
    %c0_13 = arith.constant 0 : index
    %26 = vector.load %arg5[%c0_12, %c0_13] : memref<1x64xf32, #tpu.memory_space<vmem>>, vector<1x64xf32>
    %27 = vector.broadcast %26 : vector<1x64xf32> to vector<16x64xf32>
    %28 = arith.addf %25, %27 : vector<16x64xf32>
    %c0_14 = arith.constant 0 : index
    %c0_15 = arith.constant 0 : index
    %29 = vector.load %arg6[%c0_14, %c0_15] : memref<64x64xbf16, #tpu.memory_space<vmem>>, vector<64x64xbf16>
    %cst_16 = arith.constant dense<0.000000e+00> : vector<16x64xf32>
    %30 = tpu.matmul %23, %29, %cst_16 {dimension_numbers = #tpu.dot_dimension_numbers<[1], [0], [0], [1], [0, 0, 1, 1], [], []>} : vector<16x64xbf16>, vector<64x64xbf16>, vector<16x64xf32> -> vector<16x64xf32>
    %c0_17 = arith.constant 0 : index
    %c0_18 = arith.constant 0 : index
    %31 = vector.load %arg7[%c0_17, %c0_18] : memref<1x64xf32, #tpu.memory_space<vmem>>, vector<1x64xf32>
    %32 = vector.broadcast %31 : vector<1x64xf32> to vector<16x64xf32>
    %33 = arith.addf %30, %32 : vector<16x64xf32>
    %34 = arith.negf %33 : vector<16x64xf32>
    %35 = math.exp %34 : vector<16x64xf32>
    %cst_19 = arith.constant 1.000000e+00 : f32
    %36 = vector.broadcast %cst_19 : f32 to vector<16x64xf32>
    %37 = arith.addf %36, %35 : vector<16x64xf32>
    %38 = arith.divf %36, %37 : vector<16x64xf32>
    %39 = arith.mulf %28, %38 : vector<16x64xf32>
    %c0_20 = arith.constant 0 : index
    %c0_21 = arith.constant 0 : index
    %40 = vector.load %arg8[%c0_20, %c0_21] : memref<16x64xf32, #tpu.memory_space<vmem>>, vector<16x64xf32>
    tpu.vector_store %arg8[%c0_20, %c0_21], %39 {strides = array<i32>} : memref<16x64xf32, #tpu.memory_space<vmem>>, vector<16x64xf32>,
    return
  }
  func.func @transform_0(%arg0: i32) -> (i32, i32) {
    %c0_i32 = arith.constant 0 : i32
    %c0_i32_0 = arith.constant 0 : i32
    return %arg0, %c0_i32 : i32, i32
  }
  func.func @transform_1(%arg0: i32) -> (i32, i32) {
    %c0_i32 = arith.constant 0 : i32
    %c0_i32_0 = arith.constant 0 : i32
    %c0_i32_1 = arith.constant 0 : i32
    return %c0_i32, %c0_i32_0 : i32, i32
  }
  func.func @transform_2(%arg0: i32) -> (i32, i32) {
    %c0_i32 = arith.constant 0 : i32
    %c0_i32_0 = arith.constant 0 : i32
    %c0_i32_1 = arith.constant 0 : i32
    return %c0_i32, %c0_i32_0 : i32, i32
  }
  func.func @transform_3(%arg0: i32) -> (i32, i32) {
    %c0_i32 = arith.constant 0 : i32
    %c0_i32_0 = arith.constant 0 : i32
    %c0_i32_1 = arith.constant 0 : i32
    return %c0_i32, %c0_i32_0 : i32, i32
  }
  func.func @transform_4(%arg0: i32) -> (i32, i32) {
    %c0_i32 = arith.constant 0 : i32
    %c0_i32_0 = arith.constant 0 : i32
    %c0_i32_1 = arith.constant 0 : i32
    return %c0_i32, %c0_i32_0 : i32, i32
  }
  func.func @transform_5(%arg0: i32) -> (i32, i32) {
    %c0_i32 = arith.constant 0 : i32
    %c0_i32_0 = arith.constant 0 : i32
    %c0_i32_1 = arith.constant 0 : i32
    return %c0_i32, %c0_i32_0 : i32, i32
  }
  func.func @transform_6(%arg0: i32) -> (i32, i32) {
    %c0_i32 = arith.constant 0 : i32
    %c0_i32_0 = arith.constant 0 : i32
    %c0_i32_1 = arith.constant 0 : i32
    return %c0_i32, %c0_i32_0 : i32, i32
  }
  func.func @transform_7(%arg0: i32) -> (i32, i32) {
    %c0_i32 = arith.constant 0 : i32
    %c0_i32_0 = arith.constant 0 : i32
    return %arg0, %c0_i32 : i32, i32
  }
}

module attributes {stable_mosaic.version = 11 : i64} {
  func.func @_dwconv_silu_kernel(%arg0: memref<2x14x64xf32, #tpu.memory_space<vmem>>, %arg1: memref<7x1x64xf32, #tpu.memory_space<vmem>>, %arg2: memref<1x64xf32, #tpu.memory_space<vmem>>, %arg3: memref<2x8x64xf32, #tpu.memory_space<vmem>>) attributes {dimension_semantics = [], scalar_prefetch = 0 : i64, scratch_operands = 0 : i64, tpu.core_type = #tpu.core_type<tc>} {
    %c0 = arith.constant 0 : index
    %c0_0 = arith.constant 0 : index
    %c0_1 = arith.constant 0 : index
    %0 = vector.load %arg0[%c0, %c0_0, %c0_1] : memref<2x14x64xf32, #tpu.memory_space<vmem>>, vector<2x14x64xf32>
    %1 = vector.extract_strided_slice %0 {offsets = [0, 0, 0], sizes = [2, 8, 64], strides = [1, 1, 1]} : vector<2x14x64xf32> to vector<2x8x64xf32>
    %c0_2 = arith.constant 0 : index
    %c0_3 = arith.constant 0 : index
    %c0_4 = arith.constant 0 : index
    %2 = vector.load %arg1[%c0_2, %c0_3, %c0_4] : memref<7x1x64xf32, #tpu.memory_space<vmem>>, vector<1x1x64xf32>
    %3 = vector.shape_cast %2 : vector<1x1x64xf32> to vector<1x64xf32>
    %4 = vector.shape_cast %3 : vector<1x64xf32> to vector<1x1x64xf32>
    %5 = vector.broadcast %4 : vector<1x1x64xf32> to vector<2x8x64xf32>
    %6 = arith.mulf %1, %5 : vector<2x8x64xf32>
    %7 = vector.extract_strided_slice %0 {offsets = [0, 1, 0], sizes = [2, 8, 64], strides = [1, 1, 1]} : vector<2x14x64xf32> to vector<2x8x64xf32>
    %c1 = arith.constant 1 : index
    %c0_5 = arith.constant 0 : index
    %c0_6 = arith.constant 0 : index
    %8 = vector.load %arg1[%c1, %c0_5, %c0_6] : memref<7x1x64xf32, #tpu.memory_space<vmem>>, vector<1x1x64xf32>
    %9 = vector.shape_cast %8 : vector<1x1x64xf32> to vector<1x64xf32>
    %10 = vector.shape_cast %9 : vector<1x64xf32> to vector<1x1x64xf32>
    %11 = vector.broadcast %10 : vector<1x1x64xf32> to vector<2x8x64xf32>
    %12 = arith.mulf %7, %11 : vector<2x8x64xf32>
    %13 = arith.addf %6, %12 : vector<2x8x64xf32>
    %14 = vector.extract_strided_slice %0 {offsets = [0, 2, 0], sizes = [2, 8, 64], strides = [1, 1, 1]} : vector<2x14x64xf32> to vector<2x8x64xf32>
    %c2 = arith.constant 2 : index
    %c0_7 = arith.constant 0 : index
    %c0_8 = arith.constant 0 : index
    %15 = vector.load %arg1[%c2, %c0_7, %c0_8] : memref<7x1x64xf32, #tpu.memory_space<vmem>>, vector<1x1x64xf32>
    %16 = vector.shape_cast %15 : vector<1x1x64xf32> to vector<1x64xf32>
    %17 = vector.shape_cast %16 : vector<1x64xf32> to vector<1x1x64xf32>
    %18 = vector.broadcast %17 : vector<1x1x64xf32> to vector<2x8x64xf32>
    %19 = arith.mulf %14, %18 : vector<2x8x64xf32>
    %20 = arith.addf %13, %19 : vector<2x8x64xf32>
    %21 = vector.extract_strided_slice %0 {offsets = [0, 3, 0], sizes = [2, 8, 64], strides = [1, 1, 1]} : vector<2x14x64xf32> to vector<2x8x64xf32>
    %c3 = arith.constant 3 : index
    %c0_9 = arith.constant 0 : index
    %c0_10 = arith.constant 0 : index
    %22 = vector.load %arg1[%c3, %c0_9, %c0_10] : memref<7x1x64xf32, #tpu.memory_space<vmem>>, vector<1x1x64xf32>
    %23 = vector.shape_cast %22 : vector<1x1x64xf32> to vector<1x64xf32>
    %24 = vector.shape_cast %23 : vector<1x64xf32> to vector<1x1x64xf32>
    %25 = vector.broadcast %24 : vector<1x1x64xf32> to vector<2x8x64xf32>
    %26 = arith.mulf %21, %25 : vector<2x8x64xf32>
    %27 = arith.addf %20, %26 : vector<2x8x64xf32>
    %28 = vector.extract_strided_slice %0 {offsets = [0, 4, 0], sizes = [2, 8, 64], strides = [1, 1, 1]} : vector<2x14x64xf32> to vector<2x8x64xf32>
    %c4 = arith.constant 4 : index
    %c0_11 = arith.constant 0 : index
    %c0_12 = arith.constant 0 : index
    %29 = vector.load %arg1[%c4, %c0_11, %c0_12] : memref<7x1x64xf32, #tpu.memory_space<vmem>>, vector<1x1x64xf32>
    %30 = vector.shape_cast %29 : vector<1x1x64xf32> to vector<1x64xf32>
    %31 = vector.shape_cast %30 : vector<1x64xf32> to vector<1x1x64xf32>
    %32 = vector.broadcast %31 : vector<1x1x64xf32> to vector<2x8x64xf32>
    %33 = arith.mulf %28, %32 : vector<2x8x64xf32>
    %34 = arith.addf %27, %33 : vector<2x8x64xf32>
    %35 = vector.extract_strided_slice %0 {offsets = [0, 5, 0], sizes = [2, 8, 64], strides = [1, 1, 1]} : vector<2x14x64xf32> to vector<2x8x64xf32>
    %c5 = arith.constant 5 : index
    %c0_13 = arith.constant 0 : index
    %c0_14 = arith.constant 0 : index
    %36 = vector.load %arg1[%c5, %c0_13, %c0_14] : memref<7x1x64xf32, #tpu.memory_space<vmem>>, vector<1x1x64xf32>
    %37 = vector.shape_cast %36 : vector<1x1x64xf32> to vector<1x64xf32>
    %38 = vector.shape_cast %37 : vector<1x64xf32> to vector<1x1x64xf32>
    %39 = vector.broadcast %38 : vector<1x1x64xf32> to vector<2x8x64xf32>
    %40 = arith.mulf %35, %39 : vector<2x8x64xf32>
    %41 = arith.addf %34, %40 : vector<2x8x64xf32>
    %42 = vector.extract_strided_slice %0 {offsets = [0, 6, 0], sizes = [2, 8, 64], strides = [1, 1, 1]} : vector<2x14x64xf32> to vector<2x8x64xf32>
    %c6 = arith.constant 6 : index
    %c0_15 = arith.constant 0 : index
    %c0_16 = arith.constant 0 : index
    %43 = vector.load %arg1[%c6, %c0_15, %c0_16] : memref<7x1x64xf32, #tpu.memory_space<vmem>>, vector<1x1x64xf32>
    %44 = vector.shape_cast %43 : vector<1x1x64xf32> to vector<1x64xf32>
    %45 = vector.shape_cast %44 : vector<1x64xf32> to vector<1x1x64xf32>
    %46 = vector.broadcast %45 : vector<1x1x64xf32> to vector<2x8x64xf32>
    %47 = arith.mulf %42, %46 : vector<2x8x64xf32>
    %48 = arith.addf %41, %47 : vector<2x8x64xf32>
    %c0_17 = arith.constant 0 : index
    %c0_18 = arith.constant 0 : index
    %49 = vector.load %arg2[%c0_17, %c0_18] : memref<1x64xf32, #tpu.memory_space<vmem>>, vector<1x64xf32>
    %50 = vector.shape_cast %49 : vector<1x64xf32> to vector<1x1x64xf32>
    %51 = vector.broadcast %50 : vector<1x1x64xf32> to vector<2x8x64xf32>
    %52 = arith.addf %48, %51 : vector<2x8x64xf32>
    %53 = arith.negf %52 : vector<2x8x64xf32>
    %54 = math.exp %53 : vector<2x8x64xf32>
    %cst = arith.constant 1.000000e+00 : f32
    %55 = vector.broadcast %cst : f32 to vector<2x8x64xf32>
    %56 = arith.addf %55, %54 : vector<2x8x64xf32>
    %57 = arith.divf %55, %56 : vector<2x8x64xf32>
    %58 = arith.mulf %52, %57 : vector<2x8x64xf32>
    %c0_19 = arith.constant 0 : index
    %c0_20 = arith.constant 0 : index
    %c0_21 = arith.constant 0 : index
    %59 = vector.load %arg3[%c0_19, %c0_20, %c0_21] : memref<2x8x64xf32, #tpu.memory_space<vmem>>, vector<2x8x64xf32>
    tpu.vector_store %arg3[%c0_19, %c0_20, %c0_21], %58 {strides = array<i32>} : memref<2x8x64xf32, #tpu.memory_space<vmem>>, vector<2x8x64xf32>,
    return
  }
}

module attributes {stable_mosaic.version = 11 : i64} {
  func.func @kernel(%arg0: i32, %arg1: memref<16x64xf32, #tpu.memory_space<vmem>>, %arg2: memref<64x64xbf16, #tpu.memory_space<vmem>>, %arg3: memref<1x64xf32, #tpu.memory_space<vmem>>, %arg4: memref<16x64xf32, #tpu.memory_space<vmem>>, %arg5: memref<16x64xf32, #tpu.memory_space<vmem>>) attributes {dimension_semantics = [#tpu.dimension_semantics<parallel>], iteration_bounds = array<i64: 1>, scalar_prefetch = 0 : i64, scratch_operands = 0 : i64, tpu.core_type = #tpu.core_type<tc>, window_params = [{transform_indices = @transform_0, window_bounds = array<i64: 16, 64>}, {pipeline_mode = #tpu.pipeline_mode<synchronous>, transform_indices = @transform_1, window_bounds = array<i64: 64, 64>}, {pipeline_mode = #tpu.pipeline_mode<synchronous>, transform_indices = @transform_2, window_bounds = array<i64: 1, 64>}, {transform_indices = @transform_3, window_bounds = array<i64: 16, 64>}, {transform_indices = @transform_4, window_bounds = array<i64: 16, 64>}]} {
    %c0 = arith.constant 0 : index
    %c0_0 = arith.constant 0 : index
    %0 = vector.load %arg1[%c0, %c0_0] : memref<16x64xf32, #tpu.memory_space<vmem>>, vector<16x64xf32>
    %1 = arith.truncf %0 : vector<16x64xf32> to vector<16x64xbf16>
    %c0_1 = arith.constant 0 : index
    %c0_2 = arith.constant 0 : index
    %2 = vector.load %arg2[%c0_1, %c0_2] : memref<64x64xbf16, #tpu.memory_space<vmem>>, vector<64x64xbf16>
    %cst = arith.constant dense<0.000000e+00> : vector<16x64xf32>
    %3 = tpu.matmul %1, %2, %cst {dimension_numbers = #tpu.dot_dimension_numbers<[1], [0], [0], [1], [0, 0, 1, 1], [], []>} : vector<16x64xbf16>, vector<64x64xbf16>, vector<16x64xf32> -> vector<16x64xf32>
    %c0_3 = arith.constant 0 : index
    %c0_4 = arith.constant 0 : index
    %4 = vector.load %arg3[%c0_3, %c0_4] : memref<1x64xf32, #tpu.memory_space<vmem>>, vector<1x64xf32>
    %5 = vector.broadcast %4 : vector<1x64xf32> to vector<16x64xf32>
    %6 = arith.addf %3, %5 : vector<16x64xf32>
    %cst_5 = arith.constant 1.000000e+00 : f32
    %7 = vector.broadcast %cst_5 : f32 to vector<16x64xf32>
    %8 = arith.mulf %6, %7 : vector<16x64xf32>
    %c0_6 = arith.constant 0 : index
    %c0_7 = arith.constant 0 : index
    %9 = vector.load %arg4[%c0_6, %c0_7] : memref<16x64xf32, #tpu.memory_space<vmem>>, vector<16x64xf32>
    %10 = arith.addf %8, %9 : vector<16x64xf32>
    %c0_8 = arith.constant 0 : index
    %c0_9 = arith.constant 0 : index
    %11 = vector.load %arg5[%c0_8, %c0_9] : memref<16x64xf32, #tpu.memory_space<vmem>>, vector<16x64xf32>
    tpu.vector_store %arg5[%c0_8, %c0_9], %10 {strides = array<i32>} : memref<16x64xf32, #tpu.memory_space<vmem>>, vector<16x64xf32>,
    return
  }
  func.func @transform_0(%arg0: i32) -> (i32, i32) {
    %c0_i32 = arith.constant 0 : i32
    %c0_i32_0 = arith.constant 0 : i32
    return %arg0, %c0_i32 : i32, i32
  }
  func.func @transform_1(%arg0: i32) -> (i32, i32) {
    %c0_i32 = arith.constant 0 : i32
    %c0_i32_0 = arith.constant 0 : i32
    %c0_i32_1 = arith.constant 0 : i32
    return %c0_i32, %c0_i32_0 : i32, i32
  }
  func.func @transform_2(%arg0: i32) -> (i32, i32) {
    %c0_i32 = arith.constant 0 : i32
    %c0_i32_0 = arith.constant 0 : i32
    %c0_i32_1 = arith.constant 0 : i32
    return %c0_i32, %c0_i32_0 : i32, i32
  }
  func.func @transform_3(%arg0: i32) -> (i32, i32) {
    %c0_i32 = arith.constant 0 : i32
    %c0_i32_0 = arith.constant 0 : i32
    return %arg0, %c0_i32 : i32, i32
  }
  func.func @transform_4(%arg0: i32) -> (i32, i32) {
    %c0_i32 = arith.constant 0 : i32
    %c0_i32_0 = arith.constant 0 : i32
    return %arg0, %c0_i32 : i32, i32
  }
}

module attributes {stable_mosaic.version = 11 : i64} {
  func.func @kernel(%arg0: i32, %arg1: memref<16x64xf32, #tpu.memory_space<vmem>>, %arg2: memref<64x64xbf16, #tpu.memory_space<vmem>>, %arg3: memref<1x64xf32, #tpu.memory_space<vmem>>, %arg4: memref<16x64xf32, #tpu.memory_space<vmem>>, %arg5: memref<1x64xf32, #tpu.memory_space<vmem>>, %arg6: memref<1x64xf32, #tpu.memory_space<vmem>>, %arg7: memref<16x64xf32, #tpu.memory_space<vmem>>) attributes {dimension_semantics = [#tpu.dimension_semantics<parallel>], iteration_bounds = array<i64: 1>, scalar_prefetch = 0 : i64, scratch_operands = 0 : i64, tpu.core_type = #tpu.core_type<tc>, window_params = [{transform_indices = @transform_0, window_bounds = array<i64: 16, 64>}, {pipeline_mode = #tpu.pipeline_mode<synchronous>, transform_indices = @transform_1, window_bounds = array<i64: 64, 64>}, {pipeline_mode = #tpu.pipeline_mode<synchronous>, transform_indices = @transform_2, window_bounds = array<i64: 1, 64>}, {transform_indices = @transform_3, window_bounds = array<i64: 16, 64>}, {pipeline_mode = #tpu.pipeline_mode<synchronous>, transform_indices = @transform_4, window_bounds = array<i64: 1, 64>}, {pipeline_mode = #tpu.pipeline_mode<synchronous>, transform_indices = @transform_5, window_bounds = array<i64: 1, 64>}, {transform_indices = @transform_6, window_bounds = array<i64: 16, 64>}]} {
    %c0 = arith.constant 0 : index
    %c0_0 = arith.constant 0 : index
    %0 = vector.load %arg1[%c0, %c0_0] : memref<16x64xf32, #tpu.memory_space<vmem>>, vector<16x64xf32>
    %1 = arith.truncf %0 : vector<16x64xf32> to vector<16x64xbf16>
    %c0_1 = arith.constant 0 : index
    %c0_2 = arith.constant 0 : index
    %2 = vector.load %arg2[%c0_1, %c0_2] : memref<64x64xbf16, #tpu.memory_space<vmem>>, vector<64x64xbf16>
    %cst = arith.constant dense<0.000000e+00> : vector<16x64xf32>
    %3 = tpu.matmul %1, %2, %cst {dimension_numbers = #tpu.dot_dimension_numbers<[1], [0], [0], [1], [0, 0, 1, 1], [], []>} : vector<16x64xbf16>, vector<64x64xbf16>, vector<16x64xf32> -> vector<16x64xf32>
    %c0_3 = arith.constant 0 : index
    %c0_4 = arith.constant 0 : index
    %4 = vector.load %arg3[%c0_3, %c0_4] : memref<1x64xf32, #tpu.memory_space<vmem>>, vector<1x64xf32>
    %5 = vector.broadcast %4 : vector<1x64xf32> to vector<16x64xf32>
    %6 = arith.addf %3, %5 : vector<16x64xf32>
    %cst_5 = arith.constant 5.000000e-01 : f32
    %7 = vector.broadcast %cst_5 : f32 to vector<16x64xf32>
    %8 = arith.mulf %6, %7 : vector<16x64xf32>
    %c0_6 = arith.constant 0 : index
    %c0_7 = arith.constant 0 : index
    %9 = vector.load %arg4[%c0_6, %c0_7] : memref<16x64xf32, #tpu.memory_space<vmem>>, vector<16x64xf32>
    %10 = arith.addf %8, %9 : vector<16x64xf32>
    %cst_8 = arith.constant dense<0.000000e+00> : vector<16xf32>
    %11 = vector.multi_reduction <add>, %10, %cst_8 [1] : vector<16x64xf32> to vector<16xf32>
    %12 = vector.shape_cast %11 : vector<16xf32> to vector<16x1xf32>
    %cst_9 = arith.constant 6.400000e+01 : f32
    %13 = vector.broadcast %cst_9 : f32 to vector<16x1xf32>
    %14 = arith.divf %12, %13 : vector<16x1xf32>
    %15 = vector.broadcast %14 : vector<16x1xf32> to vector<16x64xf32>
    %16 = arith.subf %10, %15 : vector<16x64xf32>
    %17 = arith.mulf %16, %16 : vector<16x64xf32>
    %cst_10 = arith.constant dense<0.000000e+00> : vector<16xf32>
    %18 = vector.multi_reduction <add>, %17, %cst_10 [1] : vector<16x64xf32> to vector<16xf32>
    %19 = vector.shape_cast %18 : vector<16xf32> to vector<16x1xf32>
    %cst_11 = arith.constant 6.400000e+01 : f32
    %20 = vector.broadcast %cst_11 : f32 to vector<16x1xf32>
    %21 = arith.divf %19, %20 : vector<16x1xf32>
    %cst_12 = arith.constant 9.99999974E-6 : f32
    %22 = vector.broadcast %cst_12 : f32 to vector<16x1xf32>
    %23 = arith.addf %21, %22 : vector<16x1xf32>
    %24 = math.rsqrt %23 : vector<16x1xf32>
    %25 = vector.broadcast %24 : vector<16x1xf32> to vector<16x64xf32>
    %26 = arith.mulf %16, %25 : vector<16x64xf32>
    %c0_13 = arith.constant 0 : index
    %c0_14 = arith.constant 0 : index
    %27 = vector.load %arg5[%c0_13, %c0_14] : memref<1x64xf32, #tpu.memory_space<vmem>>, vector<1x64xf32>
    %28 = vector.broadcast %27 : vector<1x64xf32> to vector<16x64xf32>
    %29 = arith.mulf %26, %28 : vector<16x64xf32>
    %c0_15 = arith.constant 0 : index
    %c0_16 = arith.constant 0 : index
    %30 = vector.load %arg6[%c0_15, %c0_16] : memref<1x64xf32, #tpu.memory_space<vmem>>, vector<1x64xf32>
    %31 = vector.broadcast %30 : vector<1x64xf32> to vector<16x64xf32>
    %32 = arith.addf %29, %31 : vector<16x64xf32>
    %c0_17 = arith.constant 0 : index
    %c0_18 = arith.constant 0 : index
    %33 = vector.load %arg7[%c0_17, %c0_18] : memref<16x64xf32, #tpu.memory_space<vmem>>, vector<16x64xf32>
    tpu.vector_store %arg7[%c0_17, %c0_18], %32 {strides = array<i32>} : memref<16x64xf32, #tpu.memory_space<vmem>>, vector<16x64xf32>,
    return
  }
  func.func @transform_0(%arg0: i32) -> (i32, i32) {
    %c0_i32 = arith.constant 0 : i32
    %c0_i32_0 = arith.constant 0 : i32
    return %arg0, %c0_i32 : i32, i32
  }
  func.func @transform_1(%arg0: i32) -> (i32, i32) {
    %c0_i32 = arith.constant 0 : i32
    %c0_i32_0 = arith.constant 0 : i32
    %c0_i32_1 = arith.constant 0 : i32
    return %c0_i32, %c0_i32_0 : i32, i32
  }
  func.func @transform_2(%arg0: i32) -> (i32, i32) {
    %c0_i32 = arith.constant 0 : i32
    %c0_i32_0 = arith.constant 0 : i32
    %c0_i32_1 = arith.constant 0 : i32
    return %c0_i32, %c0_i32_0 : i32, i32
  }
  func.func @transform_3(%arg0: i32) -> (i32, i32) {
    %c0_i32 = arith.constant 0 : i32
    %c0_i32_0 = arith.constant 0 : i32
    return %arg0, %c0_i32 : i32, i32
  }
  func.func @transform_4(%arg0: i32) -> (i32, i32) {
    %c0_i32 = arith.constant 0 : i32
    %c0_i32_0 = arith.constant 0 : i32
    %c0_i32_1 = arith.constant 0 : i32
    return %c0_i32, %c0_i32_0 : i32, i32
  }
  func.func @transform_5(%arg0: i32) -> (i32, i32) {
    %c0_i32 = arith.constant 0 : i32
    %c0_i32_0 = arith.constant 0 : i32
    %c0_i32_1 = arith.constant 0 : i32
    return %c0_i32, %c0_i32_0 : i32, i32
  }
  func.func @transform_6(%arg0: i32) -> (i32, i32) {
    %c0_i32 = arith.constant 0 : i32
    %c0_i32_0 = arith.constant 0 : i32
    return %arg0, %c0_i32 : i32, i32
  }
}

module attributes {stable_mosaic.version = 11 : i64} {
  func.func @kernel(%arg0: i32, %arg1: memref<16x64xf32, #tpu.memory_space<vmem>>, %arg2: memref<1x64xf32, #tpu.memory_space<vmem>>, %arg3: memref<1x64xf32, #tpu.memory_space<vmem>>, %arg4: memref<64x64xbf16, #tpu.memory_space<vmem>>, %arg5: memref<1x64xf32, #tpu.memory_space<vmem>>, %arg6: memref<16x64xf32, #tpu.memory_space<vmem>>) attributes {dimension_semantics = [#tpu.dimension_semantics<parallel>], iteration_bounds = array<i64: 1>, scalar_prefetch = 0 : i64, scratch_operands = 0 : i64, tpu.core_type = #tpu.core_type<tc>, window_params = [{transform_indices = @transform_0, window_bounds = array<i64: 16, 64>}, {pipeline_mode = #tpu.pipeline_mode<synchronous>, transform_indices = @transform_1, window_bounds = array<i64: 1, 64>}, {pipeline_mode = #tpu.pipeline_mode<synchronous>, transform_indices = @transform_2, window_bounds = array<i64: 1, 64>}, {pipeline_mode = #tpu.pipeline_mode<synchronous>, transform_indices = @transform_3, window_bounds = array<i64: 64, 64>}, {pipeline_mode = #tpu.pipeline_mode<synchronous>, transform_indices = @transform_4, window_bounds = array<i64: 1, 64>}, {transform_indices = @transform_5, window_bounds = array<i64: 16, 64>}]} {
    %c0 = arith.constant 0 : index
    %c0_0 = arith.constant 0 : index
    %0 = vector.load %arg1[%c0, %c0_0] : memref<16x64xf32, #tpu.memory_space<vmem>>, vector<16x64xf32>
    %cst = arith.constant dense<0.000000e+00> : vector<16xf32>
    %1 = vector.multi_reduction <add>, %0, %cst [1] : vector<16x64xf32> to vector<16xf32>
    %2 = vector.shape_cast %1 : vector<16xf32> to vector<16x1xf32>
    %cst_1 = arith.constant 6.400000e+01 : f32
    %3 = vector.broadcast %cst_1 : f32 to vector<16x1xf32>
    %4 = arith.divf %2, %3 : vector<16x1xf32>
    %5 = vector.broadcast %4 : vector<16x1xf32> to vector<16x64xf32>
    %6 = arith.subf %0, %5 : vector<16x64xf32>
    %7 = arith.mulf %6, %6 : vector<16x64xf32>
    %cst_2 = arith.constant dense<0.000000e+00> : vector<16xf32>
    %8 = vector.multi_reduction <add>, %7, %cst_2 [1] : vector<16x64xf32> to vector<16xf32>
    %9 = vector.shape_cast %8 : vector<16xf32> to vector<16x1xf32>
    %cst_3 = arith.constant 6.400000e+01 : f32
    %10 = vector.broadcast %cst_3 : f32 to vector<16x1xf32>
    %11 = arith.divf %9, %10 : vector<16x1xf32>
    %cst_4 = arith.constant 9.99999974E-6 : f32
    %12 = vector.broadcast %cst_4 : f32 to vector<16x1xf32>
    %13 = arith.addf %11, %12 : vector<16x1xf32>
    %14 = math.rsqrt %13 : vector<16x1xf32>
    %15 = vector.broadcast %14 : vector<16x1xf32> to vector<16x64xf32>
    %16 = arith.mulf %6, %15 : vector<16x64xf32>
    %c0_5 = arith.constant 0 : index
    %c0_6 = arith.constant 0 : index
    %17 = vector.load %arg2[%c0_5, %c0_6] : memref<1x64xf32, #tpu.memory_space<vmem>>, vector<1x64xf32>
    %18 = vector.broadcast %17 : vector<1x64xf32> to vector<16x64xf32>
    %19 = arith.mulf %16, %18 : vector<16x64xf32>
    %c0_7 = arith.constant 0 : index
    %c0_8 = arith.constant 0 : index
    %20 = vector.load %arg3[%c0_7, %c0_8] : memref<1x64xf32, #tpu.memory_space<vmem>>, vector<1x64xf32>
    %21 = vector.broadcast %20 : vector<1x64xf32> to vector<16x64xf32>
    %22 = arith.addf %19, %21 : vector<16x64xf32>
    %23 = arith.truncf %22 : vector<16x64xf32> to vector<16x64xbf16>
    %c0_9 = arith.constant 0 : index
    %c0_10 = arith.constant 0 : index
    %24 = vector.load %arg4[%c0_9, %c0_10] : memref<64x64xbf16, #tpu.memory_space<vmem>>, vector<64x64xbf16>
    %cst_11 = arith.constant dense<0.000000e+00> : vector<16x64xf32>
    %25 = tpu.matmul %23, %24, %cst_11 {dimension_numbers = #tpu.dot_dimension_numbers<[1], [0], [0], [1], [0, 0, 1, 1], [], []>} : vector<16x64xbf16>, vector<64x64xbf16>, vector<16x64xf32> -> vector<16x64xf32>
    %c0_12 = arith.constant 0 : index
    %c0_13 = arith.constant 0 : index
    %26 = vector.load %arg5[%c0_12, %c0_13] : memref<1x64xf32, #tpu.memory_space<vmem>>, vector<1x64xf32>
    %27 = vector.broadcast %26 : vector<1x64xf32> to vector<16x64xf32>
    %28 = arith.addf %25, %27 : vector<16x64xf32>
    %29 = arith.negf %28 : vector<16x64xf32>
    %30 = math.exp %29 : vector<16x64xf32>
    %cst_14 = arith.constant 1.000000e+00 : f32
    %31 = vector.broadcast %cst_14 : f32 to vector<16x64xf32>
    %32 = arith.addf %31, %30 : vector<16x64xf32>
    %33 = arith.divf %31, %32 : vector<16x64xf32>
    %34 = arith.mulf %28, %33 : vector<16x64xf32>
    %c0_15 = arith.constant 0 : index
    %c0_16 = arith.constant 0 : index
    %35 = vector.load %arg6[%c0_15, %c0_16] : memref<16x64xf32, #tpu.memory_space<vmem>>, vector<16x64xf32>
    tpu.vector_store %arg6[%c0_15, %c0_16], %34 {strides = array<i32>} : memref<16x64xf32, #tpu.memory_space<vmem>>, vector<16x64xf32>,
    return
  }
  func.func @transform_0(%arg0: i32) -> (i32, i32) {
    %c0_i32 = arith.constant 0 : i32
    %c0_i32_0 = arith.constant 0 : i32
    return %arg0, %c0_i32 : i32, i32
  }
  func.func @transform_1(%arg0: i32) -> (i32, i32) {
    %c0_i32 = arith.constant 0 : i32
    %c0_i32_0 = arith.constant 0 : i32
    %c0_i32_1 = arith.constant 0 : i32
    return %c0_i32, %c0_i32_0 : i32, i32
  }
  func.func @transform_2(%arg0: i32) -> (i32, i32) {
    %c0_i32 = arith.constant 0 : i32
    %c0_i32_0 = arith.constant 0 : i32
    %c0_i32_1 = arith.constant 0 : i32
    return %c0_i32, %c0_i32_0 : i32, i32
  }
  func.func @transform_3(%arg0: i32) -> (i32, i32) {
    %c0_i32 = arith.constant 0 : i32
    %c0_i32_0 = arith.constant 0 : i32
    %c0_i32_1 = arith.constant 0 : i32
    return %c0_i32, %c0_i32_0 : i32, i32
  }
  func.func @transform_4(%arg0: i32) -> (i32, i32) {
    %c0_i32 = arith.constant 0 : i32
    %c0_i32_0 = arith.constant 0 : i32
    %c0_i32_1 = arith.constant 0 : i32
    return %c0_i32, %c0_i32_0 : i32, i32
  }
  func.func @transform_5(%arg0: i32) -> (i32, i32) {
    %c0_i32 = arith.constant 0 : i32
    %c0_i32_0 = arith.constant 0 : i32
    return %arg0, %c0_i32 : i32, i32
  }
}

module attributes {stable_mosaic.version = 11 : i64} {
  func.func @kernel(%arg0: i32, %arg1: memref<16x64xf32, #tpu.memory_space<vmem>>, %arg2: memref<64x64xbf16, #tpu.memory_space<vmem>>, %arg3: memref<1x64xf32, #tpu.memory_space<vmem>>, %arg4: memref<16x64xf32, #tpu.memory_space<vmem>>, %arg5: memref<1x64xf32, #tpu.memory_space<vmem>>, %arg6: memref<1x64xf32, #tpu.memory_space<vmem>>, %arg7: memref<16x64xf32, #tpu.memory_space<vmem>>) attributes {dimension_semantics = [#tpu.dimension_semantics<parallel>], iteration_bounds = array<i64: 1>, scalar_prefetch = 0 : i64, scratch_operands = 0 : i64, tpu.core_type = #tpu.core_type<tc>, window_params = [{transform_indices = @transform_0, window_bounds = array<i64: 16, 64>}, {pipeline_mode = #tpu.pipeline_mode<synchronous>, transform_indices = @transform_1, window_bounds = array<i64: 64, 64>}, {pipeline_mode = #tpu.pipeline_mode<synchronous>, transform_indices = @transform_2, window_bounds = array<i64: 1, 64>}, {transform_indices = @transform_3, window_bounds = array<i64: 16, 64>}, {pipeline_mode = #tpu.pipeline_mode<synchronous>, transform_indices = @transform_4, window_bounds = array<i64: 1, 64>}, {pipeline_mode = #tpu.pipeline_mode<synchronous>, transform_indices = @transform_5, window_bounds = array<i64: 1, 64>}, {transform_indices = @transform_6, window_bounds = array<i64: 16, 64>}]} {
    %c0 = arith.constant 0 : index
    %c0_0 = arith.constant 0 : index
    %0 = vector.load %arg1[%c0, %c0_0] : memref<16x64xf32, #tpu.memory_space<vmem>>, vector<16x64xf32>
    %1 = arith.truncf %0 : vector<16x64xf32> to vector<16x64xbf16>
    %c0_1 = arith.constant 0 : index
    %c0_2 = arith.constant 0 : index
    %2 = vector.load %arg2[%c0_1, %c0_2] : memref<64x64xbf16, #tpu.memory_space<vmem>>, vector<64x64xbf16>
    %cst = arith.constant dense<0.000000e+00> : vector<16x64xf32>
    %3 = tpu.matmul %1, %2, %cst {dimension_numbers = #tpu.dot_dimension_numbers<[1], [0], [0], [1], [0, 0, 1, 1], [], []>} : vector<16x64xbf16>, vector<64x64xbf16>, vector<16x64xf32> -> vector<16x64xf32>
    %c0_3 = arith.constant 0 : index
    %c0_4 = arith.constant 0 : index
    %4 = vector.load %arg3[%c0_3, %c0_4] : memref<1x64xf32, #tpu.memory_space<vmem>>, vector<1x64xf32>
    %5 = vector.broadcast %4 : vector<1x64xf32> to vector<16x64xf32>
    %6 = arith.addf %3, %5 : vector<16x64xf32>
    %cst_5 = arith.constant 5.000000e-01 : f32
    %7 = vector.broadcast %cst_5 : f32 to vector<16x64xf32>
    %8 = arith.mulf %6, %7 : vector<16x64xf32>
    %c0_6 = arith.constant 0 : index
    %c0_7 = arith.constant 0 : index
    %9 = vector.load %arg4[%c0_6, %c0_7] : memref<16x64xf32, #tpu.memory_space<vmem>>, vector<16x64xf32>
    %10 = arith.addf %8, %9 : vector<16x64xf32>
    %cst_8 = arith.constant dense<0.000000e+00> : vector<16xf32>
    %11 = vector.multi_reduction <add>, %10, %cst_8 [1] : vector<16x64xf32> to vector<16xf32>
    %12 = vector.shape_cast %11 : vector<16xf32> to vector<16x1xf32>
    %cst_9 = arith.constant 6.400000e+01 : f32
    %13 = vector.broadcast %cst_9 : f32 to vector<16x1xf32>
    %14 = arith.divf %12, %13 : vector<16x1xf32>
    %15 = vector.broadcast %14 : vector<16x1xf32> to vector<16x64xf32>
    %16 = arith.subf %10, %15 : vector<16x64xf32>
    %17 = arith.mulf %16, %16 : vector<16x64xf32>
    %cst_10 = arith.constant dense<0.000000e+00> : vector<16xf32>
    %18 = vector.multi_reduction <add>, %17, %cst_10 [1] : vector<16x64xf32> to vector<16xf32>
    %19 = vector.shape_cast %18 : vector<16xf32> to vector<16x1xf32>
    %cst_11 = arith.constant 6.400000e+01 : f32
    %20 = vector.broadcast %cst_11 : f32 to vector<16x1xf32>
    %21 = arith.divf %19, %20 : vector<16x1xf32>
    %cst_12 = arith.constant 9.99999974E-6 : f32
    %22 = vector.broadcast %cst_12 : f32 to vector<16x1xf32>
    %23 = arith.addf %21, %22 : vector<16x1xf32>
    %24 = math.rsqrt %23 : vector<16x1xf32>
    %25 = vector.broadcast %24 : vector<16x1xf32> to vector<16x64xf32>
    %26 = arith.mulf %16, %25 : vector<16x64xf32>
    %c0_13 = arith.constant 0 : index
    %c0_14 = arith.constant 0 : index
    %27 = vector.load %arg5[%c0_13, %c0_14] : memref<1x64xf32, #tpu.memory_space<vmem>>, vector<1x64xf32>
    %28 = vector.broadcast %27 : vector<1x64xf32> to vector<16x64xf32>
    %29 = arith.mulf %26, %28 : vector<16x64xf32>
    %c0_15 = arith.constant 0 : index
    %c0_16 = arith.constant 0 : index
    %30 = vector.load %arg6[%c0_15, %c0_16] : memref<1x64xf32, #tpu.memory_space<vmem>>, vector<1x64xf32>
    %31 = vector.broadcast %30 : vector<1x64xf32> to vector<16x64xf32>
    %32 = arith.addf %29, %31 : vector<16x64xf32>
    %c0_17 = arith.constant 0 : index
    %c0_18 = arith.constant 0 : index
    %33 = vector.load %arg7[%c0_17, %c0_18] : memref<16x64xf32, #tpu.memory_space<vmem>>, vector<16x64xf32>
    tpu.vector_store %arg7[%c0_17, %c0_18], %32 {strides = array<i32>} : memref<16x64xf32, #tpu.memory_space<vmem>>, vector<16x64xf32>,
    return
  }
  func.func @transform_0(%arg0: i32) -> (i32, i32) {
    %c0_i32 = arith.constant 0 : i32
    %c0_i32_0 = arith.constant 0 : i32
    return %arg0, %c0_i32 : i32, i32
  }
  func.func @transform_1(%arg0: i32) -> (i32, i32) {
    %c0_i32 = arith.constant 0 : i32
    %c0_i32_0 = arith.constant 0 : i32
    %c0_i32_1 = arith.constant 0 : i32
    return %c0_i32, %c0_i32_0 : i32, i32
  }
  func.func @transform_2(%arg0: i32) -> (i32, i32) {
    %c0_i32 = arith.constant 0 : i32
    %c0_i32_0 = arith.constant 0 : i32
    %c0_i32_1 = arith.constant 0 : i32
    return %c0_i32, %c0_i32_0 : i32, i32
  }
  func.func @transform_3(%arg0: i32) -> (i32, i32) {
    %c0_i32 = arith.constant 0 : i32
    %c0_i32_0 = arith.constant 0 : i32
    return %arg0, %c0_i32 : i32, i32
  }
  func.func @transform_4(%arg0: i32) -> (i32, i32) {
    %c0_i32 = arith.constant 0 : i32
    %c0_i32_0 = arith.constant 0 : i32
    %c0_i32_1 = arith.constant 0 : i32
    return %c0_i32, %c0_i32_0 : i32, i32
  }
  func.func @transform_5(%arg0: i32) -> (i32, i32) {
    %c0_i32 = arith.constant 0 : i32
    %c0_i32_0 = arith.constant 0 : i32
    %c0_i32_1 = arith.constant 0 : i32
    return %c0_i32, %c0_i32_0 : i32, i32
  }
  func.func @transform_6(%arg0: i32) -> (i32, i32) {
    %c0_i32 = arith.constant 0 : i32
    %c0_i32_0 = arith.constant 0 : i32
    return %arg0, %c0_i32 : i32, i32
  }
}

module attributes {stable_mosaic.version = 11 : i64} {
  func.func @_dwconv_silu_kernel(%arg0: memref<2x14x64xf32, #tpu.memory_space<vmem>>, %arg1: memref<7x1x64xf32, #tpu.memory_space<vmem>>, %arg2: memref<1x64xf32, #tpu.memory_space<vmem>>, %arg3: memref<2x8x64xf32, #tpu.memory_space<vmem>>) attributes {dimension_semantics = [], scalar_prefetch = 0 : i64, scratch_operands = 0 : i64, tpu.core_type = #tpu.core_type<tc>} {
    %c0 = arith.constant 0 : index
    %c0_0 = arith.constant 0 : index
    %c0_1 = arith.constant 0 : index
    %0 = vector.load %arg0[%c0, %c0_0, %c0_1] : memref<2x14x64xf32, #tpu.memory_space<vmem>>, vector<2x14x64xf32>
    %1 = vector.extract_strided_slice %0 {offsets = [0, 0, 0], sizes = [2, 8, 64], strides = [1, 1, 1]} : vector<2x14x64xf32> to vector<2x8x64xf32>
    %c0_2 = arith.constant 0 : index
    %c0_3 = arith.constant 0 : index
    %c0_4 = arith.constant 0 : index
    %2 = vector.load %arg1[%c0_2, %c0_3, %c0_4] : memref<7x1x64xf32, #tpu.memory_space<vmem>>, vector<1x1x64xf32>
    %3 = vector.shape_cast %2 : vector<1x1x64xf32> to vector<1x64xf32>
    %4 = vector.shape_cast %3 : vector<1x64xf32> to vector<1x1x64xf32>
    %5 = vector.broadcast %4 : vector<1x1x64xf32> to vector<2x8x64xf32>
    %6 = arith.mulf %1, %5 : vector<2x8x64xf32>
    %7 = vector.extract_strided_slice %0 {offsets = [0, 1, 0], sizes = [2, 8, 64], strides = [1, 1, 1]} : vector<2x14x64xf32> to vector<2x8x64xf32>
    %c1 = arith.constant 1 : index
    %c0_5 = arith.constant 0 : index
    %c0_6 = arith.constant 0 : index
    %8 = vector.load %arg1[%c1, %c0_5, %c0_6] : memref<7x1x64xf32, #tpu.memory_space<vmem>>, vector<1x1x64xf32>
    %9 = vector.shape_cast %8 : vector<1x1x64xf32> to vector<1x64xf32>
    %10 = vector.shape_cast %9 : vector<1x64xf32> to vector<1x1x64xf32>
    %11 = vector.broadcast %10 : vector<1x1x64xf32> to vector<2x8x64xf32>
    %12 = arith.mulf %7, %11 : vector<2x8x64xf32>
    %13 = arith.addf %6, %12 : vector<2x8x64xf32>
    %14 = vector.extract_strided_slice %0 {offsets = [0, 2, 0], sizes = [2, 8, 64], strides = [1, 1, 1]} : vector<2x14x64xf32> to vector<2x8x64xf32>
    %c2 = arith.constant 2 : index
    %c0_7 = arith.constant 0 : index
    %c0_8 = arith.constant 0 : index
    %15 = vector.load %arg1[%c2, %c0_7, %c0_8] : memref<7x1x64xf32, #tpu.memory_space<vmem>>, vector<1x1x64xf32>
    %16 = vector.shape_cast %15 : vector<1x1x64xf32> to vector<1x64xf32>
    %17 = vector.shape_cast %16 : vector<1x64xf32> to vector<1x1x64xf32>
    %18 = vector.broadcast %17 : vector<1x1x64xf32> to vector<2x8x64xf32>
    %19 = arith.mulf %14, %18 : vector<2x8x64xf32>
    %20 = arith.addf %13, %19 : vector<2x8x64xf32>
    %21 = vector.extract_strided_slice %0 {offsets = [0, 3, 0], sizes = [2, 8, 64], strides = [1, 1, 1]} : vector<2x14x64xf32> to vector<2x8x64xf32>
    %c3 = arith.constant 3 : index
    %c0_9 = arith.constant 0 : index
    %c0_10 = arith.constant 0 : index
    %22 = vector.load %arg1[%c3, %c0_9, %c0_10] : memref<7x1x64xf32, #tpu.memory_space<vmem>>, vector<1x1x64xf32>
    %23 = vector.shape_cast %22 : vector<1x1x64xf32> to vector<1x64xf32>
    %24 = vector.shape_cast %23 : vector<1x64xf32> to vector<1x1x64xf32>
    %25 = vector.broadcast %24 : vector<1x1x64xf32> to vector<2x8x64xf32>
    %26 = arith.mulf %21, %25 : vector<2x8x64xf32>
    %27 = arith.addf %20, %26 : vector<2x8x64xf32>
    %28 = vector.extract_strided_slice %0 {offsets = [0, 4, 0], sizes = [2, 8, 64], strides = [1, 1, 1]} : vector<2x14x64xf32> to vector<2x8x64xf32>
    %c4 = arith.constant 4 : index
    %c0_11 = arith.constant 0 : index
    %c0_12 = arith.constant 0 : index
    %29 = vector.load %arg1[%c4, %c0_11, %c0_12] : memref<7x1x64xf32, #tpu.memory_space<vmem>>, vector<1x1x64xf32>
    %30 = vector.shape_cast %29 : vector<1x1x64xf32> to vector<1x64xf32>
    %31 = vector.shape_cast %30 : vector<1x64xf32> to vector<1x1x64xf32>
    %32 = vector.broadcast %31 : vector<1x1x64xf32> to vector<2x8x64xf32>
    %33 = arith.mulf %28, %32 : vector<2x8x64xf32>
    %34 = arith.addf %27, %33 : vector<2x8x64xf32>
    %35 = vector.extract_strided_slice %0 {offsets = [0, 5, 0], sizes = [2, 8, 64], strides = [1, 1, 1]} : vector<2x14x64xf32> to vector<2x8x64xf32>
    %c5 = arith.constant 5 : index
    %c0_13 = arith.constant 0 : index
    %c0_14 = arith.constant 0 : index
    %36 = vector.load %arg1[%c5, %c0_13, %c0_14] : memref<7x1x64xf32, #tpu.memory_space<vmem>>, vector<1x1x64xf32>
    %37 = vector.shape_cast %36 : vector<1x1x64xf32> to vector<1x64xf32>
    %38 = vector.shape_cast %37 : vector<1x64xf32> to vector<1x1x64xf32>
    %39 = vector.broadcast %38 : vector<1x1x64xf32> to vector<2x8x64xf32>
    %40 = arith.mulf %35, %39 : vector<2x8x64xf32>
    %41 = arith.addf %34, %40 : vector<2x8x64xf32>
    %42 = vector.extract_strided_slice %0 {offsets = [0, 6, 0], sizes = [2, 8, 64], strides = [1, 1, 1]} : vector<2x14x64xf32> to vector<2x8x64xf32>
    %c6 = arith.constant 6 : index
    %c0_15 = arith.constant 0 : index
    %c0_16 = arith.constant 0 : index
    %43 = vector.load %arg1[%c6, %c0_15, %c0_16] : memref<7x1x64xf32, #tpu.memory_space<vmem>>, vector<1x1x64xf32>
    %44 = vector.shape_cast %43 : vector<1x1x64xf32> to vector<1x64xf32>
    %45 = vector.shape_cast %44 : vector<1x64xf32> to vector<1x1x64xf32>
    %46 = vector.broadcast %45 : vector<1x1x64xf32> to vector<2x8x64xf32>
    %47 = arith.mulf %42, %46 : vector<2x8x64xf32>
    %48 = arith.addf %41, %47 : vector<2x8x64xf32>
    %c0_17 = arith.constant 0 : index
    %c0_18 = arith.constant 0 : index
    %49 = vector.load %arg2[%c0_17, %c0_18] : memref<1x64xf32, #tpu.memory_space<vmem>>, vector<1x64xf32>
    %50 = vector.shape_cast %49 : vector<1x64xf32> to vector<1x1x64xf32>
    %51 = vector.broadcast %50 : vector<1x1x64xf32> to vector<2x8x64xf32>
    %52 = arith.addf %48, %51 : vector<2x8x64xf32>
    %53 = arith.negf %52 : vector<2x8x64xf32>
    %54 = math.exp %53 : vector<2x8x64xf32>
    %cst = arith.constant 1.000000e+00 : f32
    %55 = vector.broadcast %cst : f32 to vector<2x8x64xf32>
    %56 = arith.addf %55, %54 : vector<2x8x64xf32>
    %57 = arith.divf %55, %56 : vector<2x8x64xf32>
    %58 = arith.mulf %52, %57 : vector<2x8x64xf32>
    %c0_19 = arith.constant 0 : index
    %c0_20 = arith.constant 0 : index
    %c0_21 = arith.constant 0 : index
    %59 = vector.load %arg3[%c0_19, %c0_20, %c0_21] : memref<2x8x64xf32, #tpu.memory_space<vmem>>, vector<2x8x64xf32>
    tpu.vector_store %arg3[%c0_19, %c0_20, %c0_21], %58 {strides = array<i32>} : memref<2x8x64xf32, #tpu.memory_space<vmem>>, vector<2x8x64xf32>,
    return
  }
}

module attributes {stable_mosaic.version = 11 : i64} {
  func.func @kernel(%arg0: i32, %arg1: memref<2x64xf32, #tpu.memory_space<vmem>>, %arg2: memref<64x128xbf16, #tpu.memory_space<vmem>>, %arg3: memref<1x128xf32, #tpu.memory_space<vmem>>, %arg4: memref<2x128xf32, #tpu.memory_space<vmem>>) attributes {dimension_semantics = [#tpu.dimension_semantics<parallel>], iteration_bounds = array<i64: 1>, scalar_prefetch = 0 : i64, scratch_operands = 0 : i64, tpu.core_type = #tpu.core_type<tc>, window_params = [{transform_indices = @transform_0, window_bounds = array<i64: 2, 64>}, {pipeline_mode = #tpu.pipeline_mode<synchronous>, transform_indices = @transform_1, window_bounds = array<i64: 64, 128>}, {pipeline_mode = #tpu.pipeline_mode<synchronous>, transform_indices = @transform_2, window_bounds = array<i64: 1, 128>}, {transform_indices = @transform_3, window_bounds = array<i64: 2, 128>}]} {
    %c0 = arith.constant 0 : index
    %c0_0 = arith.constant 0 : index
    %0 = vector.load %arg1[%c0, %c0_0] : memref<2x64xf32, #tpu.memory_space<vmem>>, vector<2x64xf32>
    %1 = arith.truncf %0 : vector<2x64xf32> to vector<2x64xbf16>
    %c0_1 = arith.constant 0 : index
    %c0_2 = arith.constant 0 : index
    %2 = vector.load %arg2[%c0_1, %c0_2] : memref<64x128xbf16, #tpu.memory_space<vmem>>, vector<64x128xbf16>
    %cst = arith.constant dense<0.000000e+00> : vector<2x128xf32>
    %3 = tpu.matmul %1, %2, %cst {dimension_numbers = #tpu.dot_dimension_numbers<[1], [0], [0], [1], [0, 0, 1, 1], [], []>} : vector<2x64xbf16>, vector<64x128xbf16>, vector<2x128xf32> -> vector<2x128xf32>
    %c0_3 = arith.constant 0 : index
    %c0_4 = arith.constant 0 : index
    %4 = vector.load %arg3[%c0_3, %c0_4] : memref<1x128xf32, #tpu.memory_space<vmem>>, vector<1x128xf32>
    %5 = vector.broadcast %4 : vector<1x128xf32> to vector<2x128xf32>
    %6 = arith.addf %3, %5 : vector<2x128xf32>
    %c0_5 = arith.constant 0 : index
    %c0_6 = arith.constant 0 : index
    %7 = vector.load %arg4[%c0_5, %c0_6] : memref<2x128xf32, #tpu.memory_space<vmem>>, vector<2x128xf32>
    tpu.vector_store %arg4[%c0_5, %c0_6], %6 {strides = array<i32>} : memref<2x128xf32, #tpu.memory_space<vmem>>, vector<2x128xf32>,
    return
  }
  func.func @transform_0(%arg0: i32) -> (i32, i32) {
    %c0_i32 = arith.constant 0 : i32
    %c0_i32_0 = arith.constant 0 : i32
    return %arg0, %c0_i32 : i32, i32
  }
  func.func @transform_1(%arg0: i32) -> (i32, i32) {
    %c0_i32 = arith.constant 0 : i32
    %c0_i32_0 = arith.constant 0 : i32
    %c0_i32_1 = arith.constant 0 : i32
    return %c0_i32, %c0_i32_0 : i32, i32
  }
  func.func @transform_2(%arg0: i32) -> (i32, i32) {
    %c0_i32 = arith.constant 0 : i32
    %c0_i32_0 = arith.constant 0 : i32
    %c0_i32_1 = arith.constant 0 : i32
    return %c0_i32, %c0_i32_0 : i32, i32
  }
  func.func @transform_3(%arg0: i32) -> (i32, i32) {
    %c0_i32 = arith.constant 0 : i32
    %c0_i32_0 = arith.constant 0 : i32
    return %arg0, %c0_i32 : i32, i32
  }
}

</mosaic_0001>

<llo_original>
// kernel: conformer_vision_forward.21
$region0: #{conformer_vision_forward.21}
  #allocation0 [shape = 'u32[]', space=smem, size = 0x4, offset = 0x4, fixed_abs, tag = 'smem constant byte address 0x4 - core index']
  #allocation1 [shape = 'u32[144,128]{1,0:T(1,128)}', space=vmem, size = 0x12000, scoped, tag = 'internal scratch']
  %s0 = inlined_call_operand.vmem [shape: f32[16,256,36], index: 0, kind: input, shape index: {}]
  %s1 = inlined_call_operand.vmem [shape: bf16[36,16], index: 1, kind: input, shape index: {}]
  %s2 = inlined_call_operand.vmem [shape: f32[1,16], index: 2, kind: input, shape index: {}]
  %s3 = inlined_call_operand.vmem [shape: bf16[16,32], index: 3, kind: input, shape index: {}]
  %s4 = inlined_call_operand.vmem [shape: f32[1,32], index: 4, kind: input, shape index: {}]
  %s5 = inlined_call_operand.vmem [shape: f32[16,1,32], index: 5, kind: output, shape index: {}]
  %s6 = sld [smem:[#allocation0]]
  $region53: #{conformer_vision_forward.21} parent=0
    _
  %s8 = ssub.s32 1, %s6
  %s9 = scalar_select 0, %s8, %s6
  loop: start=0, step=1, limit=18
  $region2: #{conformer_vision_forward.21} parent=0 // loop_pre_header
    _
  $region3: #{conformer_vision_forward.21} parent=0 // loop_header
    %s11 = sphi 0, %s15
    %p12 = scmp.ge.s32.totalorder %s11, 18
    %s21 = sphi 0, %s23
    %s24 = sphi 0, %s21
    %s25 = sphi 0, %s24
    %s41 = sphi 0, %s25
    %s45 = sphi 0, %s45
    %s47 = sphi 0, %s45
    %s48 = sphi 0, %s47
    %s62 = sphi 0, %s48
    %s66 = sphi 0, %s66
    %s68 = sphi 0, %s66
    %s69 = sphi 0, %s68
    %s83 = sphi 0, %s69
    %s87 = sphi 0, %s87
    %s89 = sphi 0, %s87
    %s90 = sphi 0, %s89
    %s104 = sphi 0, %s90
    %s108 = sphi 0, %s108
    %s110 = sphi 0, %s108
    %s111 = sphi 0, %s110
    %s125 = sphi 0, %s111
    %s131 = sphi 0, %s133
    %s134 = sphi 0, %s131
    %s135 = sphi 0, %s134
    %s151 = sphi 0, %s135
  $region4: #{conformer_vision_forward.21} parent=0 // loop_header_branch
    %14 = sbr.rel (%p12) target = $region8
  $region5: #{conformer_vision_forward.21} parent=0 // loop_body
    %s16 = ssub.s32 %s11, 1
    %s17 = ssub.s32 %s11, 2
    %s18 = sadd.s32 %s11, 1
    %s19 = ssub.s32 %s11, %s18
    %p20 = scmp.eq.s32.totalorder %s19, 0
    %s22 = sadd.s32 %s21, 1
    %s23 = scalar_select %p20, %s21, %s22
    %p26 = pneg %p20
    %p27 = scmp.eq.s32.totalorder %s11, 15
    %p28 = por %p26, %p27
    %p29 = scmp.ne.s32.totalorder %s21, %s24
    %p30 = scmp.eq.s32.totalorder %s11, 0
    %p31 = por %p29, %p30
    %p32 = scmp.ne.s32.totalorder %s21, %s24
    %p33 = scmp.eq.s32.totalorder %s16, 15
    %p34 = por %p32, %p33
    %p35 = scmp.ne.s32.totalorder %s24, %s25
    %p36 = scmp.eq.s32.totalorder %s16, 0
    %p37 = por %p35, %p36
    %p38 = scmp.ne.s32.totalorder %s24, %s25
    %p39 = scmp.eq.s32.totalorder %s17, 15
    %p40 = por %p38, %p39
    %p42 = scmp.ne.s32.totalorder %s25, %s41
    %p43 = scmp.eq.s32.totalorder %s17, 0
    %p44 = por %p42, %p43
    %s46 = sadd.s32 %s45, 1
    %p49 = scmp.eq.s32.totalorder %s11, 15
    %p50 = scmp.ne.s32.totalorder %s45, %s47
    %p51 = scmp.eq.s32.totalorder %s11, 0
    %p52 = por %p50, %p51
    %p53 = scmp.ne.s32.totalorder %s45, %s47
    %p54 = scmp.eq.s32.totalorder %s16, 15
    %p55 = por %p53, %p54
    %p56 = scmp.ne.s32.totalorder %s47, %s48
    %p57 = scmp.eq.s32.totalorder %s16, 0
    %p58 = por %p56, %p57
    %p59 = scmp.ne.s32.totalorder %s47, %s48
    %p60 = scmp.eq.s32.totalorder %s17, 15
    %p61 = por %p59, %p60
    %p63 = scmp.ne.s32.totalorder %s48, %s62
    %p64 = scmp.eq.s32.totalorder %s17, 0
    %p65 = por %p63, %p64
    %s67 = sadd.s32 %s66, 1
    %p70 = scmp.eq.s32.totalorder %s11, 15
    %p71 = scmp.ne.s32.totalorder %s66, %s68
    %p72 = scmp.eq.s32.totalorder %s11, 0
    %p73 = por %p71, %p72
    %p74 = scmp.ne.s32.totalorder %s66, %s68
    %p75 = scmp.eq.s32.totalorder %s16, 15
    %p76 = por %p74, %p75
    %p77 = scmp.ne.s32.totalorder %s68, %s69
    %p78 = scmp.eq.s32.totalorder %s16, 0
    %p79 = por %p77, %p78
    %p80 = scmp.ne.s32.totalorder %s68, %s69
    %p81 = scmp.eq.s32.totalorder %s17, 15
    %p82 = por %p80, %p81
    %p84 = scmp.ne.s32.totalorder %s69, %s83
    %p85 = scmp.eq.s32.totalorder %s17, 0
    %p86 = por %p84, %p85
    %s88 = sadd.s32 %s87, 1
    %p91 = scmp.eq.s32.totalorder %s11, 15
    %p92 = scmp.ne.s32.totalorder %s87, %s89
    %p93 = scmp.eq.s32.totalorder %s11, 0
    %p94 = por %p92, %p93
    %p95 = scmp.ne.s32.totalorder %s87, %s89
    %p96 = scmp.eq.s32.totalorder %s16, 15
    %p97 = por %p95, %p96
    %p98 = scmp.ne.s32.totalorder %s89, %s90
    %p99 = scmp.eq.s32.totalorder %s16, 0
    %p100 = por %p98, %p99
    %p101 = scmp.ne.s32.totalorder %s89, %s90
    %p102 = scmp.eq.s32.totalorder %s17, 15
    %p103 = por %p101, %p102
    %p105 = scmp.ne.s32.totalorder %s90, %s104
    %p106 = scmp.eq.s32.totalorder %s17, 0
    %p107 = por %p105, %p106
    %s109 = sadd.s32 %s108, 1
    %p112 = scmp.eq.s32.totalorder %s11, 15
    %p113 = scmp.ne.s32.totalorder %s108, %s110
    %p114 = scmp.eq.s32.totalorder %s11, 0
    %p115 = por %p113, %p114
    %p116 = scmp.ne.s32.totalorder %s108, %s110
    %p117 = scmp.eq.s32.totalorder %s16, 15
    %p118 = por %p116, %p117
    %p119 = scmp.ne.s32.totalorder %s110, %s111
    %p120 = scmp.eq.s32.totalorder %s16, 0
    %p121 = por %p119, %p120
    %p122 = scmp.ne.s32.totalorder %s110, %s111
    %p123 = scmp.eq.s32.totalorder %s17, 15
    %p124 = por %p122, %p123
    %p126 = scmp.ne.s32.totalorder %s111, %s125
    %p127 = scmp.eq.s32.totalorder %s17, 0
    %p128 = por %p126, %p127
    %s129 = ssub.s32 %s11, %s18
    %p130 = scmp.eq.s32.totalorder %s129, 0
    %s132 = sadd.s32 %s131, 1
    %s133 = scalar_select %p130, %s131, %s132
    %p136 = pneg %p130
    %p137 = scmp.eq.s32.totalorder %s11, 15
    %p138 = por %p136, %p137
    %p139 = scmp.ne.s32.totalorder %s131, %s134
    %p140 = scmp.eq.s32.totalorder %s11, 0
    %p141 = por %p139, %p140
    %p142 = scmp.ne.s32.totalorder %s131, %s134
    %p143 = scmp.eq.s32.totalorder %s16, 15
    %p144 = por %p142, %p143
    %p145 = scmp.ne.s32.totalorder %s134, %s135
    %p146 = scmp.eq.s32.totalorder %s16, 0
    %p147 = por %p145, %p146
    %p148 = scmp.ne.s32.totalorder %s134, %s135
    %p149 = scmp.eq.s32.totalorder %s17, 15
    %p150 = por %p148, %p149
    %p152 = scmp.ne.s32.totalorder %s135, %s151
    %p153 = scmp.eq.s32.totalorder %s17, 0
    %p154 = por %p152, %p153
    %p155 = scmp.le.s32.totalorder 1, %s11
    %p156 = scmp.lt.s32.totalorder %s11, 17
    %p157 = pnand %p155, %p156
    %p158 = pneg %p157
    // Predicated region
    $region9: #{conformer_vision_forward.21} parent=5 // pred_check
      _
    $region10: #{conformer_vision_forward.21} parent=5 // pred_check_branch
      %160 = sbr.rel (%p157) target = $region12
    $region11: #{conformer_vision_forward.21} parent=5 // pred_region
      %s161 = ssub.s32 %s11, 1
      // Predicated region
      $region13: #{conformer_vision_forward.21} parent=11 // pred_check
        %p162 = pneg %p58
      $region14: #{conformer_vision_forward.21} parent=11 // pred_check_branch
        %164 = sbr.rel (%p162) target = $region16
      $region15: #{conformer_vision_forward.21} parent=11 // pred_region
        _
      $region16: #{conformer_vision_forward.21} parent=11 // pred_fallthru
        _
      // Predicated region
      $region17: #{conformer_vision_forward.21} parent=11 // pred_check
        %p165 = pneg %p79
      $region18: #{conformer_vision_forward.21} parent=11 // pred_check_branch
        %167 = sbr.rel (%p165) target = $region20
      $region19: #{conformer_vision_forward.21} parent=11 // pred_region
        _
      $region20: #{conformer_vision_forward.21} parent=11 // pred_fallthru
        _
      // Predicated region
      $region21: #{conformer_vision_forward.21} parent=11 // pred_check
        %p168 = pneg %p100
      $region22: #{conformer_vision_forward.21} parent=11 // pred_check_branch
        %170 = sbr.rel (%p168) target = $region24
      $region23: #{conformer_vision_forward.21} parent=11 // pred_region
        _
      $region24: #{conformer_vision_forward.21} parent=11 // pred_fallthru
        _
      // Predicated region
      $region25: #{conformer_vision_forward.21} parent=11 // pred_check
        %p171 = pneg %p121
      $region26: #{conformer_vision_forward.21} parent=11 // pred_check_branch
        %173 = sbr.rel (%p171) target = $region28
      $region27: #{conformer_vision_forward.21} parent=11 // pred_region
        _
      $region28: #{conformer_vision_forward.21} parent=11 // pred_fallthru
        _
    $region12: #{conformer_vision_forward.21} parent=5 // pred_fallthru
      _
    %p174 = scmp.lt.s32.totalorder %s11, 16
    // Predicated region
    $region29: #{conformer_vision_forward.21} parent=5 // pred_check
      %p175 = pneg %p174
    $region30: #{conformer_vision_forward.21} parent=5 // pred_check_branch
      %177 = sbr.rel (%p175) target = $region32
    $region31: #{conformer_vision_forward.21} parent=5 // pred_region
      // Predicated region
      $region33: #{conformer_vision_forward.21} parent=31 // pred_check
        %p178 = pneg %p31
      $region34: #{conformer_vision_forward.21} parent=31 // pred_check_branch
        %180 = sbr.rel (%p178) target = $region36
      $region35: #{conformer_vision_forward.21} parent=31 // pred_region
        %p181 = scmp.lt.s32.totalorder %s11, 15
        %s182 = scalar_select %p181, %s11, 15
        %s183 = smul.addr %s182, 32
        %s184 = smul.addr %s183, 8
        %s185 = scalar_lea.vmem %s0, %s184
      $region36: #{conformer_vision_forward.21} parent=31 // pred_fallthru
        _
    $region32: #{conformer_vision_forward.21} parent=5 // pred_fallthru
      _
    %p186 = scmp.le.s32.totalorder 1, %s11
    %p187 = scmp.lt.s32.totalorder %s11, 17
    %p188 = pnand %p186, %p187
    %p189 = pneg %p188
    // Predicated region
    $region37: #{conformer_vision_forward.21} parent=5 // pred_check
      _
    $region38: #{conformer_vision_forward.21} parent=5 // pred_check_branch
      %191 = sbr.rel (%p188) target = $region40
    $region39: #{conformer_vision_forward.21} parent=5 // pred_region
      %s192 = ssub.s32 %s11, 1
      %p193 = scmp.lt.s32.totalorder %s16, 15
      %s194 = scalar_select %p193, %s16, 15
      %s195 = smul.addr %s194, 32
      %s196 = smul.addr %s195, 8
      %s197 = scalar_lea.vmem %s0, %s196
      %p198 = pneg %p37
      %p199 = pneg %p34
      %p200 = pneg %p58
      %p201 = pneg %p55
      %p202 = pneg %p79
      %p203 = pneg %p76
      %p204 = pneg %p100
      %p205 = pneg %p97
      %p206 = pneg %p121
      %p207 = pneg %p118
      %p208 = pneg %p147
      %p209 = pneg %p144
      %p210 = scmp.lt.s32.totalorder %s16, 15
      %s211 = scalar_select %p210, %s16, 15
      %s212 = scalar_lea.vmem %s5, %s211
      %p213 = scmp.lt.s32.totalorder %s16, 15
      %s214 = scalar_select %p213, %s16, 15
      %s215 = smul.addr %s214, 32
      %s216 = smul.addr %s215, 8
      %s217 = scalar_lea.vmem %s0, %s216
      %p218 = scmp.lt.s32.totalorder %s16, 15
      %s219 = scalar_select %p218, %s16, 15
      %s220 = scalar_lea.vmem %s5, %s219
      %v222 = vld [vmem:[%s217] sm:$0xff]
      %v223 = vld [vmem:[%s217 + $0x8] sm:$0xff]
      %v224 = vld [vmem:[%s217 + $0x10] sm:$0xff]
      %v225 = vld [vmem:[%s217 + $0x18] sm:$0xff]
      %v226 = vld [vmem:[%s217 + $0x20] sm:$0xff]
      %v227 = vld [vmem:[%s217 + $0x28] sm:$0xff]
      %v228 = vld [vmem:[%s217 + $0x30] sm:$0xff]
      %v229 = vld [vmem:[%s217 + $0x38] sm:$0xff]
      %v230 = vld [vmem:[%s217 + $0x40] sm:$0xff]
      %v231 = vld [vmem:[%s217 + $0x48] sm:$0xff]
      %v232 = vld [vmem:[%s217 + $0x50] sm:$0xff]
      %v233 = vld [vmem:[%s217 + $0x58] sm:$0xff]
      %v234 = vld [vmem:[%s217 + $0x60] sm:$0xff]
      %v235 = vld [vmem:[%s217 + $0x68] sm:$0xff]
      %v236 = vld [vmem:[%s217 + $0x70] sm:$0xff]
      %v237 = vld [vmem:[%s217 + $0x78] sm:$0xff]
      %v238 = vld [vmem:[%s217 + $0x80] sm:$0xff]
      %v239 = vld [vmem:[%s217 + $0x88] sm:$0xff]
      %v240 = vld [vmem:[%s217 + $0x90] sm:$0xff]
      %v241 = vld [vmem:[%s217 + $0x98] sm:$0xff]
      %v242 = vld [vmem:[%s217 + $0xa0] sm:$0xff]
      %v243 = vld [vmem:[%s217 + $0xa8] sm:$0xff]
      %v244 = vld [vmem:[%s217 + $0xb0] sm:$0xff]
      %v245 = vld [vmem:[%s217 + $0xb8] sm:$0xff]
      %v246 = vld [vmem:[%s217 + $0xc0] sm:$0xff]
      %v247 = vld [vmem:[%s217 + $0xc8] sm:$0xff]
      %v248 = vld [vmem:[%s217 + $0xd0] sm:$0xff]
      %v249 = vld [vmem:[%s217 + $0xd8] sm:$0xff]
      %v250 = vld [vmem:[%s217 + $0xe0] sm:$0xff]
      %v251 = vld [vmem:[%s217 + $0xe8] sm:$0xff]
      %v252 = vld [vmem:[%s217 + $0xf0] sm:$0xff]
      %v253 = vld [vmem:[%s217 + $0xf8] sm:$0xff]
      %v254 = vpack.c.bf16 %v223, %v222
      %v255 = vpack.c.bf16 %v225, %v224
      %v256 = vpack.c.bf16 %v227, %v226
      %v257 = vpack.c.bf16 %v229, %v228
      %v258 = vpack.c.bf16 %v231, %v230
      %v259 = vpack.c.bf16 %v233, %v232
      %v260 = vpack.c.bf16 %v235, %v234
      %v261 = vpack.c.bf16 %v237, %v236
      %v262 = vpack.c.bf16 %v239, %v238
      %v263 = vpack.c.bf16 %v241, %v240
      %v264 = vpack.c.bf16 %v243, %v242
      %v265 = vpack.c.bf16 %v245, %v244
      %v266 = vpack.c.bf16 %v247, %v246
      %v267 = vpack.c.bf16 %v249, %v248
      %v268 = vpack.c.bf16 %v251, %v250
      %v269 = vpack.c.bf16 %v253, %v252
      %v270 = vld [vmem:[%s1] sm:$0xf]
      %v271 = vld [vmem:[%s1 + $0x4] sm:$0xf]
      %v272 = vld [vmem:[%s1 + $0x8] sm:$0xf]
      %v273 = vld [vmem:[%s1 + $0xc] sm:$0xf]
      %v274 = vld [vmem:[%s1 + $0x10] sm:$0x3]
      %v275 = vld [vmem:[%s2] sm:$0x1]
      %v277 = vlaneseq
      %v278 = vshrl.u32 %v277, 7
      %v279 = vsub.s32 0, %v278
      %v280 = vrot.slane %v275, %v279
      %v287 = vunpack.c.l.b16 %v270
      %v288 = vunpack.c.l.b16 %v271
      %v289 = vunpack.c.l.b16 %v272
      %v290 = vunpack.c.l.b16 %v273
      %v291 = vunpack.c.l.b16 %v274
      %v292 = vpack.c.b16 %v288, %v287
      %v293 = vpack.c.b16 %v290, %v289
      %v294 = vpack.c.b16 %v291, %v291
      %vm297 = vcmask 293888
      %v299 = vsel %vm297, %v254, 0
      %v302 = vsel %vm297, %v255, 0
      %v305 = vsel %vm297, %v256, 0
      %v308 = vsel %vm297, %v257, 0
      %v311 = vsel %vm297, %v258, 0
      %v314 = vsel %vm297, %v259, 0
      %v317 = vsel %vm297, %v260, 0
      %v320 = vsel %vm297, %v261, 0
      %v323 = vsel %vm297, %v262, 0
      %v326 = vsel %vm297, %v263, 0
      %v329 = vsel %vm297, %v264, 0
      %v332 = vsel %vm297, %v265, 0
      %v335 = vsel %vm297, %v266, 0
      %v338 = vsel %vm297, %v267, 0
      %v341 = vsel %vm297, %v268, 0
      %v344 = vsel %vm297, %v269, 0
      %vm346 = vcmask 1041408
      %v348 = vsel %vm346, %v294, 0
      %350 = vmatprep.subr.bf16.mxu0 0
      %351 = vmatpush1.bf16.msra.mxu0 0
      %352 = vmatprep.subr.bf16.mxu0 0
      %353 = vmatpush1.bf16.msra.mxu0 0
      %354 = vmatprep.subr.bf16.mxu0 0
      %355 = vmatpush1.bf16.msra.mxu0 0
      %356 = vmatprep.subr.bf16.mxu0 0
      %357 = vmatpush1.bf16.msra.mxu0 0
      %358 = vmatprep.subr.bf16.mxu0 0
      %359 = vmatpush1.bf16.msra.mxu0 0
      %360 = vmatprep.subr.bf16.mxu0 0
      %361 = vmatpush1.bf16.msra.mxu0 %v348
      %362 = vmatprep.subr.bf16.mxu0 0
      %363 = vmatpush1.bf16.msra.mxu0 %v293
      %364 = vmatprep.subr.bf16.mxu0 0
      %365 = vmatpush1.bf16.msra.mxu0 %v292
      %366 = vmatprep.subr.bf16.mxu0 0
      %367 = vmatpush2.bf16.msra.mxu0 0
      %368 = vmatprep.subr.bf16.mxu0 0
      %369 = vmatpush2.bf16.msra.mxu0 0
      %370 = vmatprep.subr.bf16.mxu0 0
      %371 = vmatpush2.bf16.msra.mxu0 0
      %372 = vmatprep.subr.bf16.mxu0 0
      %373 = vmatpush2.bf16.msra.mxu0 0
      %374 = vmatprep.subr.bf16.mxu0 0
      %375 = vmatpush2.bf16.msra.mxu0 0
      %376 = vmatprep.subr.bf16.mxu0 0
      %377 = vmatpush2.bf16.msra.mxu0 0
      %378 = vmatprep.subr.bf16.mxu0 0
      %379 = vmatpush2.bf16.msra.mxu0 0
      %380 = vmatprep.subr.bf16.mxu0 0
      %381 = vmatpush2.bf16.msra.mxu0 0
      %382 = vmatprep.mubr.bf16.mxu0 0
      %383 = vmatmul.mubr.bf16.gmra.mxu0 %v299
      %v384 = vpop.f32.mrf.mxu0
      %v385 = vadd.f32 %v280, %v384
      %v386 = vpop.f32.mrf.mxu0
      %v387 = vpop.f32.mrf.mxu0
      %v388 = vadd.f32 %v280, %v387
      %v389 = vpop.f32.mrf.mxu0
      %390 = vmatprep.mubr.bf16.mxu0 0
      %391 = vmatmul.mubr.bf16.gmra.mxu0 %v302
      %v392 = vpop.f32.mrf.mxu0
      %v393 = vadd.f32 %v280, %v392
      %v394 = vpop.f32.mrf.mxu0
      %v395 = vpop.f32.mrf.mxu0
      %v396 = vadd.f32 %v280, %v395
      %v397 = vpop.f32.mrf.mxu0
      %398 = vmatprep.mubr.bf16.mxu0 0
      %399 = vmatmul.mubr.bf16.gmra.mxu0 %v305
      %v400 = vpop.f32.mrf.mxu0
      %v401 = vadd.f32 %v280, %v400
      %v402 = vpop.f32.mrf.mxu0
      %v403 = vpop.f32.mrf.mxu0
      %v404 = vadd.f32 %v280, %v403
      %v405 = vpop.f32.mrf.mxu0
      %406 = vmatprep.mubr.bf16.mxu0 0
      %407 = vmatmul.mubr.bf16.gmra.mxu0 %v308
      %v408 = vpop.f32.mrf.mxu0
      %v409 = vadd.f32 %v280, %v408
      %v410 = vpop.f32.mrf.mxu0
      %v411 = vpop.f32.mrf.mxu0
      %v412 = vadd.f32 %v280, %v411
      %v413 = vpop.f32.mrf.mxu0
      %414 = vmatprep.mubr.bf16.mxu0 0
      %415 = vmatmul.mubr.bf16.gmra.mxu0 %v311
      %v416 = vpop.f32.mrf.mxu0
      %v417 = vadd.f32 %v280, %v416
      %v418 = vpop.f32.mrf.mxu0
      %v419 = vpop.f32.mrf.mxu0
      %v420 = vadd.f32 %v280, %v419
      %v421 = vpop.f32.mrf.mxu0
      %422 = vmatprep.mubr.bf16.mxu0 0
      %423 = vmatmul.mubr.bf16.gmra.mxu0 %v314
      %v424 = vpop.f32.mrf.mxu0
      %v425 = vadd.f32 %v280, %v424
      %v426 = vpop.f32.mrf.mxu0
      %v427 = vpop.f32.mrf.mxu0
      %v428 = vadd.f32 %v280, %v427
      %v429 = vpop.f32.mrf.mxu0
      %430 = vmatprep.mubr.bf16.mxu0 0
      %431 = vmatmul.mubr.bf16.gmra.mxu0 %v317
      %v432 = vpop.f32.mrf.mxu0
      %v433 = vadd.f32 %v280, %v432
      %v434 = vpop.f32.mrf.mxu0
      %v435 = vpop.f32.mrf.mxu0
      %v436 = vadd.f32 %v280, %v435
      %v437 = vpop.f32.mrf.mxu0
      %438 = vmatprep.mubr.bf16.mxu0 0
      %439 = vmatmul.mubr.bf16.gmra.mxu0 %v320
      %v440 = vpop.f32.mrf.mxu0
      %v441 = vadd.f32 %v280, %v440
      %v442 = vpop.f32.mrf.mxu0
      %v443 = vpop.f32.mrf.mxu0
      %v444 = vadd.f32 %v280, %v443
      %v445 = vpop.f32.mrf.mxu0
      %446 = vmatprep.mubr.bf16.mxu0 0
      %447 = vmatmul.mubr.bf16.gmra.mxu0 %v323
      %v448 = vpop.f32.mrf.mxu0
      %v449 = vadd.f32 %v280, %v448
      %v450 = vpop.f32.mrf.mxu0
      %v451 = vpop.f32.mrf.mxu0
      %v452 = vadd.f32 %v280, %v451
      %v453 = vpop.f32.mrf.mxu0
      %454 = vmatprep.mubr.bf16.mxu0 0
      %455 = vmatmul.mubr.bf16.gmra.mxu0 %v326
      %v456 = vpop.f32.mrf.mxu0
      %v457 = vadd.f32 %v280, %v456
      %v458 = vpop.f32.mrf.mxu0
      %v459 = vpop.f32.mrf.mxu0
      %v460 = vadd.f32 %v280, %v459
      %v461 = vpop.f32.mrf.mxu0
      %462 = vmatprep.mubr.bf16.mxu0 0
      %463 = vmatmul.mubr.bf16.gmra.mxu0 %v329
      %v464 = vpop.f32.mrf.mxu0
      %v465 = vadd.f32 %v280, %v464
      %v466 = vpop.f32.mrf.mxu0
      %v467 = vpop.f32.mrf.mxu0
      %v468 = vadd.f32 %v280, %v467
      %v469 = vpop.f32.mrf.mxu0
      %470 = vmatprep.mubr.bf16.mxu0 0
      %471 = vmatmul.mubr.bf16.gmra.mxu0 %v332
      %v472 = vpop.f32.mrf.mxu0
      %v473 = vadd.f32 %v280, %v472
      %v474 = vpop.f32.mrf.mxu0
      %v475 = vpop.f32.mrf.mxu0
      %v476 = vadd.f32 %v280, %v475
      %v477 = vpop.f32.mrf.mxu0
      %478 = vmatprep.mubr.bf16.mxu0 0
      %479 = vmatmul.mubr.bf16.gmra.mxu0 %v335
      %v480 = vpop.f32.mrf.mxu0
      %v481 = vadd.f32 %v280, %v480
      %v482 = vpop.f32.mrf.mxu0
      %v483 = vpop.f32.mrf.mxu0
      %v484 = vadd.f32 %v280, %v483
      %v485 = vpop.f32.mrf.mxu0
      %486 = vmatprep.mubr.bf16.mxu0 0
      %487 = vmatmul.mubr.bf16.gmra.mxu0 %v338
      %v488 = vpop.f32.mrf.mxu0
      %v489 = vadd.f32 %v280, %v488
      %v490 = vpop.f32.mrf.mxu0
      %v491 = vpop.f32.mrf.mxu0
      %v492 = vadd.f32 %v280, %v491
      %v493 = vpop.f32.mrf.mxu0
      %494 = vmatprep.mubr.bf16.mxu0 0
      %495 = vmatmul.mubr.bf16.gmra.mxu0 %v341
      %v496 = vpop.f32.mrf.mxu0
      %v497 = vadd.f32 %v280, %v496
      %v498 = vpop.f32.mrf.mxu0
      %v499 = vpop.f32.mrf.mxu0
      %v500 = vadd.f32 %v280, %v499
      %v501 = vpop.f32.mrf.mxu0
      %502 = vmatprep.mubr.bf16.mxu0 0
      %503 = vmatmul.mubr.bf16.gmra.mxu0 %v344
      %v504 = vpop.f32.mrf.mxu0
      %v505 = vadd.f32 %v280, %v504
      %v506 = vpop.f32.mrf.mxu0
      %v507 = vpop.f32.mrf.mxu0
      %v508 = vadd.f32 %v280, %v507
      %v509 = vpop.f32.mrf.mxu0
      %510 = vdwg.mxu0
      %v511 = vmax.f32 %v385, 0.0
      %v512 = vmax.f32 %v388, 0.0
      %v513 = vmax.f32 %v393, 0.0
      %v514 = vmax.f32 %v396, 0.0
      %v515 = vmax.f32 %v401, 0.0
      %v516 = vmax.f32 %v404, 0.0
      %v517 = vmax.f32 %v409, 0.0
      %v518 = vmax.f32 %v412, 0.0
      %v519 = vmax.f32 %v417, 0.0
      %v520 = vmax.f32 %v420, 0.0
      %v521 = vmax.f32 %v425, 0.0
      %v522 = vmax.f32 %v428, 0.0
      %v523 = vmax.f32 %v433, 0.0
      %v524 = vmax.f32 %v436, 0.0
      %v525 = vmax.f32 %v441, 0.0
      %v526 = vmax.f32 %v444, 0.0
      %v527 = vmax.f32 %v449, 0.0
      %v528 = vmax.f32 %v452, 0.0
      %v529 = vmax.f32 %v457, 0.0
      %v530 = vmax.f32 %v460, 0.0
      %v531 = vmax.f32 %v465, 0.0
      %v532 = vmax.f32 %v468, 0.0
      %v533 = vmax.f32 %v473, 0.0
      %v534 = vmax.f32 %v476, 0.0
      %v535 = vmax.f32 %v481, 0.0
      %v536 = vmax.f32 %v484, 0.0
      %v537 = vmax.f32 %v489, 0.0
      %v538 = vmax.f32 %v492, 0.0
      %v539 = vmax.f32 %v497, 0.0
      %v540 = vmax.f32 %v500, 0.0
      %v541 = vmax.f32 %v505, 0.0
      %v542 = vmax.f32 %v508, 0.0
      %vm543 = vcmask 130048
      %v544 = vsel %vm543, %v511, 0.0
      %v545 = vsel %vm543, %v512, 0.0
      %v546 = vadd.f32 %v544, %v545
      %v547 = vsel %vm543, %v513, 0.0
      %v548 = vadd.f32 %v546, %v547
      %v549 = vsel %vm543, %v514, 0.0
      %v550 = vadd.f32 %v548, %v549
      %v551 = vsel %vm543, %v515, 0.0
      %v552 = vadd.f32 %v550, %v551
      %v553 = vsel %vm543, %v516, 0.0
      %v554 = vadd.f32 %v552, %v553
      %v555 = vsel %vm543, %v517, 0.0
      %v556 = vadd.f32 %v554, %v555
      %v557 = vsel %vm543, %v518, 0.0
      %v558 = vadd.f32 %v556, %v557
      %v559 = vsel %vm543, %v519, 0.0
      %v560 = vadd.f32 %v558, %v559
      %v561 = vsel %vm543, %v520, 0.0
      %v562 = vadd.f32 %v560, %v561
      %v563 = vsel %vm543, %v521, 0.0
      %v564 = vadd.f32 %v562, %v563
      %v565 = vsel %vm543, %v522, 0.0
      %v566 = vadd.f32 %v564, %v565
      %v567 = vsel %vm543, %v523, 0.0
      %v568 = vadd.f32 %v566, %v567
      %v569 = vsel %vm543, %v524, 0.0
      %v570 = vadd.f32 %v568, %v569
      %v571 = vsel %vm543, %v525, 0.0
      %v572 = vadd.f32 %v570, %v571
      %v573 = vsel %vm543, %v526, 0.0
      %v574 = vadd.f32 %v572, %v573
      %v575 = vsel %vm543, %v527, 0.0
      %v576 = vadd.f32 %v574, %v575
      %v577 = vsel %vm543, %v528, 0.0
      %v578 = vadd.f32 %v576, %v577
      %v579 = vsel %vm543, %v529, 0.0
      %v580 = vadd.f32 %v578, %v579
      %v581 = vsel %vm543, %v530, 0.0
      %v582 = vadd.f32 %v580, %v581
      %v583 = vsel %vm543, %v531, 0.0
      %v584 = vadd.f32 %v582, %v583
      %v585 = vsel %vm543, %v532, 0.0
      %v586 = vadd.f32 %v584, %v585
      %v587 = vsel %vm543, %v533, 0.0
      %v588 = vadd.f32 %v586, %v587
      %v589 = vsel %vm543, %v534, 0.0
      %v590 = vadd.f32 %v588, %v589
      %v591 = vsel %vm543, %v535, 0.0
      %v592 = vadd.f32 %v590, %v591
      %v593 = vsel %vm543, %v536, 0.0
      %v594 = vadd.f32 %v592, %v593
      %v595 = vsel %vm543, %v537, 0.0
      %v596 = vadd.f32 %v594, %v595
      %v597 = vsel %vm543, %v538, 0.0
      %v598 = vadd.f32 %v596, %v597
      %v599 = vsel %vm543, %v539, 0.0
      %v600 = vadd.f32 %v598, %v599
      %v601 = vsel %vm543, %v540, 0.0
      %v602 = vadd.f32 %v600, %v601
      %v603 = vsel %vm543, %v541, 0.0
      %v604 = vadd.f32 %v602, %v603
      %v605 = vsel %vm543, %v542, 0.0
      %v606 = vadd.f32 %v604, %v605
      %v607 = vrot.slane %v606, 4
      %v608 = vadd.f32 %v606, %v607
      %v609 = vrot.slane %v608, 2
      %v610 = vadd.f32 %v608, %v609
      %v611 = vrot.slane %v610, 1
      %v612 = vadd.f32 %v610, %v611
      %v613 = vrcp.pop 256.0
      %v614 = vmul.f32 %v612, %v613
      %v615 = vpack.c.bf16 %v614, %v614
      %v616 = vld [vmem:[%s3] sm:$0xf]
      %v617 = vld [vmem:[%s3 + $0x4] sm:$0xf]
      %v618 = vld [vmem:[%s4] sm:$0x1]
      %v621 = vunpack.c.l.b16 %v616
      %v622 = vunpack.c.l.b16 %v617
      %v623 = vpack.c.b16 %v622, %v621
      %v626 = vsel %vm543, %v615, 0
      %628 = vmatprep.subr.bf16.mxu0 0
      %629 = vmatpush1.bf16.msra.mxu0 0
      %630 = vmatprep.subr.bf16.mxu0 0
      %631 = vmatpush1.bf16.msra.mxu0 0
      %632 = vmatprep.subr.bf16.mxu0 0
      %633 = vmatpush1.bf16.msra.mxu0 0
      %634 = vmatprep.subr.bf16.mxu0 0
      %635 = vmatpush1.bf16.msra.mxu0 0
      %636 = vmatprep.subr.bf16.mxu0 0
      %637 = vmatpush1.bf16.msra.mxu0 0
      %638 = vmatprep.subr.bf16.mxu0 0
      %639 = vmatpush1.bf16.msra.mxu0 0
      %640 = vmatprep.subr.bf16.mxu0 0
      %641 = vmatpush1.bf16.msra.mxu0 0
      %642 = vmatprep.subr.bf16.mxu0 0
      %643 = vmatpush1.bf16.msra.mxu0 %v623
      %644 = vmatprep.subr.bf16.mxu0 0
      %645 = vmatpush2.bf16.msra.mxu0 0
      %646 = vmatprep.subr.bf16.mxu0 0
      %647 = vmatpush2.bf16.msra.mxu0 0
      %648 = vmatprep.subr.bf16.mxu0 0
      %649 = vmatpush2.bf16.msra.mxu0 0
      %650 = vmatprep.subr.bf16.mxu0 0
      %651 = vmatpush2.bf16.msra.mxu0 0
      %652 = vmatprep.subr.bf16.mxu0 0
      %653 = vmatpush2.bf16.msra.mxu0 0
      %654 = vmatprep.subr.bf16.mxu0 0
      %655 = vmatpush2.bf16.msra.mxu0 0
      %656 = vmatprep.subr.bf16.mxu0 0
      %657 = vmatpush2.bf16.msra.mxu0 0
      %658 = vmatprep.subr.bf16.mxu0 0
      %659 = vmatpush2.bf16.msra.mxu0 0
      %660 = vmatprep.mubr.bf16.mxu0 0
      %661 = vmatmul.mubr.bf16.gmra.mxu0 %v626
      %v662 = vpop.f32.mrf.mxu0
      %v663 = vadd.f32 %v618, %v662
      %v664 = vpop.f32.mrf.mxu0
      %v665 = vpop.f32.mrf.mxu0
      %v666 = vpop.f32.mrf.mxu0
      %667 = vdwg.mxu0
      %vm668 = vcmask 253952
      %669 = vst.msk [vmem:[%s220] sm:$0x1] %vm668, %v663
      %p670 = scmp.lt.s32.totalorder %s16, 15
      %s671 = scalar_select %p670, %s16, 15
      %s672 = scalar_lea.vmem %s5, %s671
      // Predicated region
      $region41: #{conformer_vision_forward.21} parent=39 // pred_check
        %p673 = pneg %p144
      $region42: #{conformer_vision_forward.21} parent=39 // pred_check_branch
        %675 = sbr.rel (%p673) target = $region44
      $region43: #{conformer_vision_forward.21} parent=39 // pred_region
        _
      $region44: #{conformer_vision_forward.21} parent=39 // pred_fallthru
        _
    $region40: #{conformer_vision_forward.21} parent=5 // pred_fallthru
      _
    %p676 = scmp.le.s32.totalorder 2, %s11
    // Predicated region
    $region45: #{conformer_vision_forward.21} parent=5 // pred_check
      %p677 = pneg %p676
    $region46: #{conformer_vision_forward.21} parent=5 // pred_check_branch
      %679 = sbr.rel (%p677) target = $region48
    $region47: #{conformer_vision_forward.21} parent=5 // pred_region
      %s680 = ssub.s32 %s11, 2
      // Predicated region
      $region49: #{conformer_vision_forward.21} parent=47 // pred_check
        %p681 = pneg %p150
      $region50: #{conformer_vision_forward.21} parent=47 // pred_check_branch
        %683 = sbr.rel (%p681) target = $region52
      $region51: #{conformer_vision_forward.21} parent=47 // pred_region
        %p684 = scmp.lt.s32.totalorder %s17, 15
        %s685 = scalar_select %p684, %s17, 15
        %s686 = scalar_lea.vmem %s5, %s685
      $region52: #{conformer_vision_forward.21} parent=47 // pred_fallthru
        _
    $region48: #{conformer_vision_forward.21} parent=5 // pred_fallthru
      _
  $region6: #{conformer_vision_forward.21} parent=0 // loop_footer
    %s15 = sadd.s32 1, %s11
  $region7: #{conformer_vision_forward.21} parent=0 // loop_footer_branch
    %10 = sbr.rel target = $region3
  $region8: #{conformer_vision_forward.21} parent=0 // loop_exit
    _

// kernel: conformer_vision_forward.23
$region0: #{conformer_vision_forward.23}
  #allocation0 [shape = 'u32[]', space=smem, size = 0x4, offset = 0x4, fixed_abs, tag = 'smem constant byte address 0x4 - core index']
  #allocation1 [shape = 'u32[144,128]{1,0:T(1,128)}', space=vmem, size = 0x12000, scoped, tag = 'internal scratch']
  %s0 = inlined_call_operand.vmem [shape: f32[16,64], index: 0, kind: input, shape index: {}]
  %s1 = inlined_call_operand.vmem [shape: f32[1,64], index: 1, kind: input, shape index: {}]
  %s2 = inlined_call_operand.vmem [shape: f32[1,64], index: 2, kind: input, shape index: {}]
  %s3 = inlined_call_operand.vmem [shape: bf16[64,64], index: 3, kind: input, shape index: {}]
  %s4 = inlined_call_operand.vmem [shape: f32[1,64], index: 4, kind: input, shape index: {}]
  %s5 = inlined_call_operand.vmem [shape: f32[16,64], index: 5, kind: output, shape index: {}]
  %s6 = sld [smem:[#allocation0]]
  $region30: #{conformer_vision_forward.23} parent=0
    _
  %s8 = ssub.s32 1, %s6
  %s9 = scalar_select 0, %s8, %s6
  // Predicated region
  $region2: #{conformer_vision_forward.23} parent=0 // pred_check
    _
  $region3: #{conformer_vision_forward.23} parent=0 // pred_check_branch
    %11 = sbr.rel (0) target = $region5
  $region4: #{conformer_vision_forward.23} parent=0 // pred_region
    _
  $region5: #{conformer_vision_forward.23} parent=0 // pred_fallthru
    _
  // Predicated region
  $region6: #{conformer_vision_forward.23} parent=0 // pred_check
    _
  $region7: #{conformer_vision_forward.23} parent=0 // pred_check_branch
    %13 = sbr.rel (0) target = $region9
  $region8: #{conformer_vision_forward.23} parent=0 // pred_region
    _
  $region9: #{conformer_vision_forward.23} parent=0 // pred_fallthru
    _
  // Predicated region
  $region10: #{conformer_vision_forward.23} parent=0 // pred_check
    _
  $region11: #{conformer_vision_forward.23} parent=0 // pred_check_branch
    %15 = sbr.rel (0) target = $region13
  $region12: #{conformer_vision_forward.23} parent=0 // pred_region
    _
  $region13: #{conformer_vision_forward.23} parent=0 // pred_fallthru
    _
  // Predicated region
  $region14: #{conformer_vision_forward.23} parent=0 // pred_check
    _
  $region15: #{conformer_vision_forward.23} parent=0 // pred_check_branch
    %17 = sbr.rel (0) target = $region17
  $region16: #{conformer_vision_forward.23} parent=0 // pred_region
    _
  $region17: #{conformer_vision_forward.23} parent=0 // pred_fallthru
    _
  // Predicated region
  $region18: #{conformer_vision_forward.23} parent=0 // pred_check
    _
  $region19: #{conformer_vision_forward.23} parent=0 // pred_check_branch
    %19 = sbr.rel (0) target = $region21
  $region20: #{conformer_vision_forward.23} parent=0 // pred_region
    _
  $region21: #{conformer_vision_forward.23} parent=0 // pred_fallthru
    _
  %v21 = vld [vmem:[%s0] sm:$0xff]
  %v22 = vld [vmem:[%s0 + $0x8] sm:$0xff]
  %vm23 = vcmask 523264
  %v24 = vsel %vm23, %v21, 0.0
  %25 = vadd.xlane.f32.xlu0 %v24
  %v26 = vpop.xlane.xlu0 %25
  %v27 = vsel %vm23, %v22, 0.0
  %28 = vadd.xlane.f32.xlu0 %v27
  %v29 = vpop.xlane.xlu0 %28
  %v30 = vrcp.pop 64.0
  %v31 = vmul.f32 %v26, %v30
  %v32 = vmul.f32 %v29, %v30
  %v33 = vsub.f32 %v21, %v31
  %v34 = vsub.f32 %v22, %v32
  %v35 = vmul.f32 %v33, %v33
  %v36 = vmul.f32 %v34, %v34
  %v37 = vsel %vm23, %v35, 0.0
  %38 = vadd.xlane.f32.xlu0 %v37
  %v39 = vpop.xlane.xlu0 %38
  %v40 = vsel %vm23, %v36, 0.0
  %41 = vadd.xlane.f32.xlu0 %v40
  %v42 = vpop.xlane.xlu0 %41
  %v43 = vmul.f32 %v39, %v30
  %v44 = vmul.f32 %v42, %v30
  %v45 = vadd.f32 %v43, 1e-05
  %v46 = vadd.f32 %v44, 1e-05
  %v47 = vrsqrt.pop %v45
  %v48 = vrsqrt.pop %v46
  %v49 = vmul.f32 %v33, %v47
  %v50 = vmul.f32 %v34, %v48
  %v51 = vld [vmem:[%s1] sm:$0x1]
  %v53 = vlaneseq
  %v54 = vshrl.u32 %v53, 7
  %v55 = vsub.s32 0, %v54
  %v56 = vrot.slane %v51, %v55
  %v58 = vmul.f32 %v49, %v56
  %v59 = vmul.f32 %v50, %v56
  %v60 = vld [vmem:[%s2] sm:$0x1]
  %v62 = vlaneseq
  %v63 = vshrl.u32 %v62, 7
  %v64 = vsub.s32 0, %v63
  %v65 = vrot.slane %v60, %v64
  %v67 = vadd.f32 %v58, %v65
  %v68 = vadd.f32 %v59, %v65
  %v69 = vpack.c.bf16 %v68, %v67
  %v70 = vld [vmem:[%s3] sm:$0xf]
  %v71 = vld [vmem:[%s3 + $0x4] sm:$0xf]
  %v72 = vld [vmem:[%s3 + $0x8] sm:$0xf]
  %v73 = vld [vmem:[%s3 + $0xc] sm:$0xf]
  %v74 = vld [vmem:[%s3 + $0x10] sm:$0xf]
  %v75 = vld [vmem:[%s3 + $0x14] sm:$0xf]
  %v76 = vld [vmem:[%s3 + $0x18] sm:$0xf]
  %v77 = vld [vmem:[%s3 + $0x1c] sm:$0xf]
  %v78 = vld [vmem:[%s4] sm:$0x1]
  %v80 = vlaneseq
  %v81 = vshrl.u32 %v80, 7
  %v82 = vsub.s32 0, %v81
  %v83 = vrot.slane %v78, %v82
  %v93 = vunpack.c.l.b16 %v70
  %v94 = vunpack.c.l.b16 %v71
  %v95 = vunpack.c.l.b16 %v72
  %v96 = vunpack.c.l.b16 %v73
  %v97 = vunpack.c.l.b16 %v74
  %v98 = vunpack.c.l.b16 %v75
  %v99 = vunpack.c.l.b16 %v76
  %v100 = vunpack.c.l.b16 %v77
  %v101 = vpack.c.b16 %v94, %v93
  %v102 = vpack.c.b16 %v96, %v95
  %v103 = vpack.c.b16 %v98, %v97
  %v104 = vpack.c.b16 %v100, %v99
  %v110 = vsel %vm23, %v69, 0
  %112 = vmatprep.subr.bf16.mxu0 0
  %113 = vmatpush1.bf16.msra.mxu0 0
  %114 = vmatprep.subr.bf16.mxu0 0
  %115 = vmatpush1.bf16.msra.mxu0 0
  %116 = vmatprep.subr.bf16.mxu0 0
  %117 = vmatpush1.bf16.msra.mxu0 0
  %118 = vmatprep.subr.bf16.mxu0 0
  %119 = vmatpush1.bf16.msra.mxu0 0
  %120 = vmatprep.subr.bf16.mxu0 0
  %121 = vmatpush1.bf16.msra.mxu0 %v104
  %122 = vmatprep.subr.bf16.mxu0 0
  %123 = vmatpush1.bf16.msra.mxu0 %v103
  %124 = vmatprep.subr.bf16.mxu0 0
  %125 = vmatpush1.bf16.msra.mxu0 %v102
  %126 = vmatprep.subr.bf16.mxu0 0
  %127 = vmatpush1.bf16.msra.mxu0 %v101
  %128 = vmatprep.subr.bf16.mxu0 0
  %129 = vmatpush2.bf16.msra.mxu0 0
  %130 = vmatprep.subr.bf16.mxu0 0
  %131 = vmatpush2.bf16.msra.mxu0 0
  %132 = vmatprep.subr.bf16.mxu0 0
  %133 = vmatpush2.bf16.msra.mxu0 0
  %134 = vmatprep.subr.bf16.mxu0 0
  %135 = vmatpush2.bf16.msra.mxu0 0
  %136 = vmatprep.subr.bf16.mxu0 0
  %137 = vmatpush2.bf16.msra.mxu0 0
  %138 = vmatprep.subr.bf16.mxu0 0
  %139 = vmatpush2.bf16.msra.mxu0 0
  %140 = vmatprep.subr.bf16.mxu0 0
  %141 = vmatpush2.bf16.msra.mxu0 0
  %142 = vmatprep.subr.bf16.mxu0 0
  %143 = vmatpush2.bf16.msra.mxu0 0
  %144 = vmatprep.mubr.bf16.mxu0 0
  %145 = vmatmul.mubr.bf16.gmra.mxu0 %v110
  %v146 = vpop.f32.mrf.mxu0
  %v147 = vadd.f32 %v83, %v146
  %v148 = vpop.f32.mrf.mxu0
  %v149 = vpop.f32.mrf.mxu0
  %v150 = vadd.f32 %v83, %v149
  %v151 = vpop.f32.mrf.mxu0
  %152 = vdwg.mxu0
  %v153 = vxor.u32 %v147, 2147483648
  %v154 = vxor.u32 %v150, 2147483648
  %v155 = vmul.f32 %v153, 1.442695
  %v156 = vpow.pop %v155
  %v157 = vmul.f32 %v154, 1.442695
  %v158 = vpow.pop %v157
  %v159 = vadd.f32 %v156, 1.0
  %v160 = vadd.f32 %v158, 1.0
  %v161 = vrcp.pop %v159
  %v162 = vmul.f32 1.0, %v161
  %v163 = vrcp.pop %v160
  %v164 = vmul.f32 1.0, %v163
  %v165 = vmul.f32 %v147, %v162
  %v166 = vmul.f32 %v150, %v164
  %167 = vst.msk [vmem:[%s5] sm:$0xff] %vm23, %v165
  %168 = vst.msk [vmem:[%s5 + $0x8] sm:$0xff] %vm23, %v166
  // Predicated region
  $region22: #{conformer_vision_forward.23} parent=0 // pred_check
    _
  $region23: #{conformer_vision_forward.23} parent=0 // pred_check_branch
    %170 = sbr.rel (0) target = $region25
  $region24: #{conformer_vision_forward.23} parent=0 // pred_region
    _
  $region25: #{conformer_vision_forward.23} parent=0 // pred_fallthru
    _
  // Predicated region
  $region26: #{conformer_vision_forward.23} parent=0 // pred_check
    _
  $region27: #{conformer_vision_forward.23} parent=0 // pred_check_branch
    %172 = sbr.rel (0) target = $region29
  $region28: #{conformer_vision_forward.23} parent=0 // pred_region
    _
  $region29: #{conformer_vision_forward.23} parent=0 // pred_fallthru
    _

// kernel: conformer_vision_forward.25
$region0: #{conformer_vision_forward.25}
  #allocation0 [shape = 'u32[]', space=smem, size = 0x4, offset = 0x4, fixed_abs, tag = 'smem constant byte address 0x4 - core index']
  #allocation1 [shape = 'u32[144,128]{1,0:T(1,128)}', space=vmem, size = 0x12000, scoped, tag = 'internal scratch']
  %s0 = inlined_call_operand.vmem [shape: f32[16,64], index: 0, kind: input, shape index: {}]
  %s1 = inlined_call_operand.vmem [shape: f32[1,64], index: 1, kind: input, shape index: {}]
  %s2 = inlined_call_operand.vmem [shape: f32[1,64], index: 2, kind: input, shape index: {}]
  %s3 = inlined_call_operand.vmem [shape: bf16[64,192], index: 3, kind: input, shape index: {}]
  %s4 = inlined_call_operand.vmem [shape: f32[1,192], index: 4, kind: input, shape index: {}]
  %s5 = inlined_call_operand.vmem [shape: f32[16,192], index: 5, kind: output, shape index: {}]
  %s6 = sld [smem:[#allocation0]]
  $region30: #{conformer_vision_forward.25} parent=0
    _
  %s8 = ssub.s32 1, %s6
  %s9 = scalar_select 0, %s8, %s6
  // Predicated region
  $region2: #{conformer_vision_forward.25} parent=0 // pred_check
    _
  $region3: #{conformer_vision_forward.25} parent=0 // pred_check_branch
    %11 = sbr.rel (0) target = $region5
  $region4: #{conformer_vision_forward.25} parent=0 // pred_region
    _
  $region5: #{conformer_vision_forward.25} parent=0 // pred_fallthru
    _
  // Predicated region
  $region6: #{conformer_vision_forward.25} parent=0 // pred_check
    _
  $region7: #{conformer_vision_forward.25} parent=0 // pred_check_branch
    %13 = sbr.rel (0) target = $region9
  $region8: #{conformer_vision_forward.25} parent=0 // pred_region
    _
  $region9: #{conformer_vision_forward.25} parent=0 // pred_fallthru
    _
  // Predicated region
  $region10: #{conformer_vision_forward.25} parent=0 // pred_check
    _
  $region11: #{conformer_vision_forward.25} parent=0 // pred_check_branch
    %15 = sbr.rel (0) target = $region13
  $region12: #{conformer_vision_forward.25} parent=0 // pred_region
    _
  $region13: #{conformer_vision_forward.25} parent=0 // pred_fallthru
    _
  // Predicated region
  $region14: #{conformer_vision_forward.25} parent=0 // pred_check
    _
  $region15: #{conformer_vision_forward.25} parent=0 // pred_check_branch
    %17 = sbr.rel (0) target = $region17
  $region16: #{conformer_vision_forward.25} parent=0 // pred_region
    _
  $region17: #{conformer_vision_forward.25} parent=0 // pred_fallthru
    _
  // Predicated region
  $region18: #{conformer_vision_forward.25} parent=0 // pred_check
    _
  $region19: #{conformer_vision_forward.25} parent=0 // pred_check_branch
    %19 = sbr.rel (0) target = $region21
  $region20: #{conformer_vision_forward.25} parent=0 // pred_region
    _
  $region21: #{conformer_vision_forward.25} parent=0 // pred_fallthru
    _
  %v21 = vld [vmem:[%s0] sm:$0xff]
  %v22 = vld [vmem:[%s0 + $0x8] sm:$0xff]
  %vm23 = vcmask 523264
  %v24 = vsel %vm23, %v21, 0.0
  %25 = vadd.xlane.f32.xlu0 %v24
  %v26 = vpop.xlane.xlu0 %25
  %v27 = vsel %vm23, %v22, 0.0
  %28 = vadd.xlane.f32.xlu0 %v27
  %v29 = vpop.xlane.xlu0 %28
  %v30 = vrcp.pop 64.0
  %v31 = vmul.f32 %v26, %v30
  %v32 = vmul.f32 %v29, %v30
  %v33 = vsub.f32 %v21, %v31
  %v34 = vsub.f32 %v22, %v32
  %v35 = vmul.f32 %v33, %v33
  %v36 = vmul.f32 %v34, %v34
  %v37 = vsel %vm23, %v35, 0.0
  %38 = vadd.xlane.f32.xlu0 %v37
  %v39 = vpop.xlane.xlu0 %38
  %v40 = vsel %vm23, %v36, 0.0
  %41 = vadd.xlane.f32.xlu0 %v40
  %v42 = vpop.xlane.xlu0 %41
  %v43 = vmul.f32 %v39, %v30
  %v44 = vmul.f32 %v42, %v30
  %v45 = vadd.f32 %v43, 1e-05
  %v46 = vadd.f32 %v44, 1e-05
  %v47 = vrsqrt.pop %v45
  %v48 = vrsqrt.pop %v46
  %v49 = vmul.f32 %v33, %v47
  %v50 = vmul.f32 %v34, %v48
  %v51 = vld [vmem:[%s1] sm:$0x1]
  %v53 = vlaneseq
  %v54 = vshrl.u32 %v53, 7
  %v55 = vsub.s32 0, %v54
  %v56 = vrot.slane %v51, %v55
  %v58 = vmul.f32 %v49, %v56
  %v59 = vmul.f32 %v50, %v56
  %v60 = vld [vmem:[%s2] sm:$0x1]
  %v62 = vlaneseq
  %v63 = vshrl.u32 %v62, 7
  %v64 = vsub.s32 0, %v63
  %v65 = vrot.slane %v60, %v64
  %v67 = vadd.f32 %v58, %v65
  %v68 = vadd.f32 %v59, %v65
  %v69 = vpack.c.bf16 %v68, %v67
  %v70 = vld [vmem:[%s3] sm:$0xff]
  %v71 = vld [vmem:[%s3 + $0x8] sm:$0xff]
  %v72 = vld [vmem:[%s3 + $0x10] sm:$0xff]
  %v73 = vld [vmem:[%s3 + $0x18] sm:$0xff]
  %v74 = vld [vmem:[%s3 + $0x20] sm:$0xff]
  %v75 = vld [vmem:[%s3 + $0x28] sm:$0xff]
  %v76 = vld [vmem:[%s3 + $0x30] sm:$0xff]
  %v77 = vld [vmem:[%s3 + $0x38] sm:$0xff]
  %v78 = vld [vmem:[%s4] sm:$0x3]
  %v80 = vlaneseq
  %v81 = vshrl.u32 %v80, 7
  %v82 = vsub.s32 0, %v81
  %v83 = vrot.slane %v78, %v82
  %v84 = vlaneseq
  %v85 = vshrl.u32 %v84, 7
  %v86 = vsub.s32 1, %v85
  %v87 = vrot.slane %v78, %v86
  %v98 = vunpack.c.l.b16 %v70
  %v99 = vunpack.c.h.b16 %v70
  %v100 = vunpack.c.l.b16 %v71
  %v101 = vunpack.c.h.b16 %v71
  %v102 = vunpack.c.l.b16 %v72
  %v103 = vunpack.c.h.b16 %v72
  %v104 = vunpack.c.l.b16 %v73
  %v105 = vunpack.c.h.b16 %v73
  %v106 = vunpack.c.l.b16 %v74
  %v107 = vunpack.c.h.b16 %v74
  %v108 = vunpack.c.l.b16 %v75
  %v109 = vunpack.c.h.b16 %v75
  %v110 = vunpack.c.l.b16 %v76
  %v111 = vunpack.c.h.b16 %v76
  %v112 = vunpack.c.l.b16 %v77
  %v113 = vunpack.c.h.b16 %v77
  %v114 = vpack.c.b16 %v100, %v98
  %v115 = vpack.c.b16 %v101, %v99
  %v116 = vpack.c.b16 %v104, %v102
  %v117 = vpack.c.b16 %v105, %v103
  %v118 = vpack.c.b16 %v108, %v106
  %v119 = vpack.c.b16 %v109, %v107
  %v120 = vpack.c.b16 %v112, %v110
  %v121 = vpack.c.b16 %v113, %v111
  %v131 = vsel %vm23, %v69, 0
  %133 = vmatprep.subr.bf16.mxu0 0
  %134 = vmatpush1.bf16.msra.mxu0 0
  %135 = vmatprep.subr.bf16.mxu0 0
  %136 = vmatpush1.bf16.msra.mxu0 0
  %137 = vmatprep.subr.bf16.mxu0 0
  %138 = vmatpush1.bf16.msra.mxu0 0
  %139 = vmatprep.subr.bf16.mxu0 0
  %140 = vmatpush1.bf16.msra.mxu0 0
  %141 = vmatprep.subr.bf16.mxu0 %v121
  %142 = vmatpush1.bf16.msra.mxu0 %v120
  %143 = vmatprep.subr.bf16.mxu0 %v119
  %144 = vmatpush1.bf16.msra.mxu0 %v118
  %145 = vmatprep.subr.bf16.mxu0 %v117
  %146 = vmatpush1.bf16.msra.mxu0 %v116
  %147 = vmatprep.subr.bf16.mxu0 %v115
  %148 = vmatpush1.bf16.msra.mxu0 %v114
  %149 = vmatprep.subr.bf16.mxu0 0
  %150 = vmatpush2.bf16.msra.mxu0 0
  %151 = vmatprep.subr.bf16.mxu0 0
  %152 = vmatpush2.bf16.msra.mxu0 0
  %153 = vmatprep.subr.bf16.mxu0 0
  %154 = vmatpush2.bf16.msra.mxu0 0
  %155 = vmatprep.subr.bf16.mxu0 0
  %156 = vmatpush2.bf16.msra.mxu0 0
  %157 = vmatprep.subr.bf16.mxu0 0
  %158 = vmatpush2.bf16.msra.mxu0 0
  %159 = vmatprep.subr.bf16.mxu0 0
  %160 = vmatpush2.bf16.msra.mxu0 0
  %161 = vmatprep.subr.bf16.mxu0 0
  %162 = vmatpush2.bf16.msra.mxu0 0
  %163 = vmatprep.subr.bf16.mxu0 0
  %164 = vmatpush2.bf16.msra.mxu0 0
  %165 = vmatprep.mubr.bf16.mxu0 0
  %166 = vmatmul.mubr.bf16.gmra.mxu0 %v131
  %v167 = vpop.f32.mrf.mxu0
  %v168 = vadd.f32 %v83, %v167
  %v169 = vpop.f32.mrf.mxu0
  %v170 = vadd.f32 %v87, %v169
  %v171 = vpop.f32.mrf.mxu0
  %v172 = vadd.f32 %v83, %v171
  %v173 = vpop.f32.mrf.mxu0
  %v174 = vadd.f32 %v87, %v173
  %175 = vdwg.mxu0
  %176 = vst [vmem:[%s5] sm:$0xff] %v168
  %177 = vst.msk [vmem:[%s5 + $0x8] sm:$0xff] %vm23, %v170
  %178 = vst [vmem:[%s5 + $0x10] sm:$0xff] %v172
  %179 = vst.msk [vmem:[%s5 + $0x18] sm:$0xff] %vm23, %v174
  // Predicated region
  $region22: #{conformer_vision_forward.25} parent=0 // pred_check
    _
  $region23: #{conformer_vision_forward.25} parent=0 // pred_check_branch
    %181 = sbr.rel (0) target = $region25
  $region24: #{conformer_vision_forward.25} parent=0 // pred_region
    _
  $region25: #{conformer_vision_forward.25} parent=0 // pred_fallthru
    _
  // Predicated region
  $region26: #{conformer_vision_forward.25} parent=0 // pred_check
    _
  $region27: #{conformer_vision_forward.25} parent=0 // pred_check_branch
    %183 = sbr.rel (0) target = $region29
  $region28: #{conformer_vision_forward.25} parent=0 // pred_region
    _
  $region29: #{conformer_vision_forward.25} parent=0 // pred_fallthru
    _

// kernel: conformer_vision_forward.24
$region0: #{conformer_vision_forward.24}
  #allocation0 [shape = 'u32[]', space=smem, size = 0x4, offset = 0x4, fixed_abs, tag = 'smem constant byte address 0x4 - core index']
  #allocation1 [shape = 'u32[144,128]{1,0:T(1,128)}', space=vmem, size = 0x12000, scoped, tag = 'internal scratch']
  %s0 = inlined_call_operand.vmem [shape: f32[16,64], index: 0, kind: input, shape index: {}]
  %s1 = inlined_call_operand.vmem [shape: bf16[64,64], index: 1, kind: input, shape index: {}]
  %s2 = inlined_call_operand.hbm [shape: f32[1,64], index: 2, kind: input, shape index: {}]
  %s3 = inlined_call_operand.vmem [shape: f32[16,64], index: 3, kind: input, shape index: {}]
  %s4 = inlined_call_operand.vmem [shape: f32[16,64], index: 4, kind: output, shape index: {}]
  %s5 = sld [smem:[#allocation0]]
  $region30: #{conformer_vision_forward.24} parent=0
    _
  %s7 = ssub.s32 1, %s5
  %s8 = scalar_select 0, %s7, %s5
  $region1: #{conformer_vision_forward.24} parent=0
    #allocation2 [shape = 'u8[512]{0}', space=vmem, size = 0x400, scoped, tag = 'input window, operand 2, single buffered']
    #allocation3 [shape = 's32[1]{0}', space=sflag, size = 0x4, scoped, tag = 'scoped memory for conformer_vision_forward.24']
    %9 = vsyncpa [#allocation3], 0
    // Predicated region
    $region2: #{conformer_vision_forward.24} parent=1 // pred_check
      _
    $region3: #{conformer_vision_forward.24} parent=1 // pred_check_branch
      %11 = sbr.rel (0) target = $region5
    $region4: #{conformer_vision_forward.24} parent=1 // pred_region
      _
    $region5: #{conformer_vision_forward.24} parent=1 // pred_fallthru
      _
    // Predicated region
    $region6: #{conformer_vision_forward.24} parent=1 // pred_check
      _
    $region7: #{conformer_vision_forward.24} parent=1 // pred_check_branch
      %13 = sbr.rel (0) target = $region9
    $region8: #{conformer_vision_forward.24} parent=1 // pred_region
      _
    $region9: #{conformer_vision_forward.24} parent=1 // pred_fallthru
      _
    // Predicated region
    $region10: #{conformer_vision_forward.24} parent=1 // pred_check
      _
    $region11: #{conformer_vision_forward.24} parent=1 // pred_check_branch
      %15 = sbr.rel (0) target = $region13
    $region12: #{conformer_vision_forward.24} parent=1 // pred_region
      %s17 = ssub.s32 16, 16
      %18 = vsyncadd [#allocation3], %s17
      %s20 = sshll.u32 [#allocation2], 4
      %s21 = int_to_ptr.vmem [resolvable:$true] %s20
      %23 = dma.hbm_to_vmem [thread:$0]  %s2, 16, %s21, [#allocation3]
    $region13: #{conformer_vision_forward.24} parent=1 // pred_fallthru
      _
    // Predicated region
    $region14: #{conformer_vision_forward.24} parent=1 // pred_check
      _
    $region15: #{conformer_vision_forward.24} parent=1 // pred_check_branch
      %25 = sbr.rel (0) target = $region17
    $region16: #{conformer_vision_forward.24} parent=1 // pred_region
      _
    $region17: #{conformer_vision_forward.24} parent=1 // pred_fallthru
      _
    // Predicated region
    $region18: #{conformer_vision_forward.24} parent=1 // pred_check
      _
    $region19: #{conformer_vision_forward.24} parent=1 // pred_check_branch
      %27 = sbr.rel (0) target = $region21
    $region20: #{conformer_vision_forward.24} parent=1 // pred_region
      %28 = dma.done [#allocation3], 16
    $region21: #{conformer_vision_forward.24} parent=1 // pred_fallthru
      _
    %v30 = vld [vmem:[%s0] sm:$0xff]
    %v31 = vld [vmem:[%s0 + $0x8] sm:$0xff]
    %v32 = vpack.c.bf16 %v31, %v30
    %v33 = vld [vmem:[%s1] sm:$0xf]
    %v34 = vld [vmem:[%s1 + $0x4] sm:$0xf]
    %v35 = vld [vmem:[%s1 + $0x8] sm:$0xf]
    %v36 = vld [vmem:[%s1 + $0xc] sm:$0xf]
    %v37 = vld [vmem:[%s1 + $0x10] sm:$0xf]
    %v38 = vld [vmem:[%s1 + $0x14] sm:$0xf]
    %v39 = vld [vmem:[%s1 + $0x18] sm:$0xf]
    %v40 = vld [vmem:[%s1 + $0x1c] sm:$0xf]
    %v41 = vld [vmem:[#allocation2] sm:$0x1]
    %v43 = vlaneseq
    %v44 = vshrl.u32 %v43, 7
    %v45 = vsub.s32 0, %v44
    %v46 = vrot.slane %v41, %v45
    %v56 = vunpack.c.l.b16 %v33
    %v57 = vunpack.c.l.b16 %v34
    %v58 = vunpack.c.l.b16 %v35
    %v59 = vunpack.c.l.b16 %v36
    %v60 = vunpack.c.l.b16 %v37
    %v61 = vunpack.c.l.b16 %v38
    %v62 = vunpack.c.l.b16 %v39
    %v63 = vunpack.c.l.b16 %v40
    %v64 = vpack.c.b16 %v57, %v56
    %v65 = vpack.c.b16 %v59, %v58
    %v66 = vpack.c.b16 %v61, %v60
    %v67 = vpack.c.b16 %v63, %v62
    %vm72 = vcmask 523264
    %v74 = vsel %vm72, %v32, 0
    %76 = vmatprep.subr.bf16.mxu0 0
    %77 = vmatpush1.bf16.msra.mxu0 0
    %78 = vmatprep.subr.bf16.mxu0 0
    %79 = vmatpush1.bf16.msra.mxu0 0
    %80 = vmatprep.subr.bf16.mxu0 0
    %81 = vmatpush1.bf16.msra.mxu0 0
    %82 = vmatprep.subr.bf16.mxu0 0
    %83 = vmatpush1.bf16.msra.mxu0 0
    %84 = vmatprep.subr.bf16.mxu0 0
    %85 = vmatpush1.bf16.msra.mxu0 %v67
    %86 = vmatprep.subr.bf16.mxu0 0
    %87 = vmatpush1.bf16.msra.mxu0 %v66
    %88 = vmatprep.subr.bf16.mxu0 0
    %89 = vmatpush1.bf16.msra.mxu0 %v65
    %90 = vmatprep.subr.bf16.mxu0 0
    %91 = vmatpush1.bf16.msra.mxu0 %v64
    %92 = vmatprep.subr.bf16.mxu0 0
    %93 = vmatpush2.bf16.msra.mxu0 0
    %94 = vmatprep.subr.bf16.mxu0 0
    %95 = vmatpush2.bf16.msra.mxu0 0
    %96 = vmatprep.subr.bf16.mxu0 0
    %97 = vmatpush2.bf16.msra.mxu0 0
    %98 = vmatprep.subr.bf16.mxu0 0
    %99 = vmatpush2.bf16.msra.mxu0 0
    %100 = vmatprep.subr.bf16.mxu0 0
    %101 = vmatpush2.bf16.msra.mxu0 0
    %102 = vmatprep.subr.bf16.mxu0 0
    %103 = vmatpush2.bf16.msra.mxu0 0
    %104 = vmatprep.subr.bf16.mxu0 0
    %105 = vmatpush2.bf16.msra.mxu0 0
    %106 = vmatprep.subr.bf16.mxu0 0
    %107 = vmatpush2.bf16.msra.mxu0 0
    %108 = vmatprep.mubr.bf16.mxu0 0
    %109 = vmatmul.mubr.bf16.gmra.mxu0 %v74
    %v110 = vpop.f32.mrf.mxu0
    %v111 = vadd.f32 %v46, %v110
    %v112 = vpop.f32.mrf.mxu0
    %v113 = vpop.f32.mrf.mxu0
    %v114 = vadd.f32 %v46, %v113
    %v115 = vpop.f32.mrf.mxu0
    %116 = vdwg.mxu0
    %v117 = vmul.f32 %v111, 0.5
    %v118 = vmul.f32 %v114, 0.5
    %v119 = vld [vmem:[%s3] sm:$0xff]
    %v120 = vld [vmem:[%s3 + $0x8] sm:$0xff]
    %v121 = vadd.f32 %v117, %v119
    %v122 = vadd.f32 %v118, %v120
    %123 = vst.msk [vmem:[%s4] sm:$0xff] %vm72, %v121
    %124 = vst.msk [vmem:[%s4 + $0x8] sm:$0xff] %vm72, %v122
    // Predicated region
    $region22: #{conformer_vision_forward.24} parent=1 // pred_check
      _
    $region23: #{conformer_vision_forward.24} parent=1 // pred_check_branch
      %126 = sbr.rel (0) target = $region25
    $region24: #{conformer_vision_forward.24} parent=1 // pred_region
      _
    $region25: #{conformer_vision_forward.24} parent=1 // pred_fallthru
      _
    // Predicated region
    $region26: #{conformer_vision_forward.24} parent=1 // pred_check
      _
    $region27: #{conformer_vision_forward.24} parent=1 // pred_check_branch
      %128 = sbr.rel (0) target = $region29
    $region28: #{conformer_vision_forward.24} parent=1 // pred_region
      _
    $region29: #{conformer_vision_forward.24} parent=1 // pred_fallthru
      _
    %129 = vsyncpa [#allocation3], 1

// kernel: conformer_vision_forward.27
$region0: #{conformer_vision_forward.27}
  #allocation0 [shape = 'u32[]', space=smem, size = 0x4, offset = 0x4, fixed_abs, tag = 'smem constant byte address 0x4 - core index']
  #allocation1 [shape = 'u32[144,128]{1,0:T(1,128)}', space=vmem, size = 0x12000, scoped, tag = 'internal scratch']
  %s0 = inlined_call_operand.vmem [shape: f32[16,64], index: 0, kind: input, shape index: {}]
  %s1 = inlined_call_operand.hbm [shape: f32[1,64], index: 1, kind: input, shape index: {}]
  %s2 = inlined_call_operand.hbm [shape: f32[1,64], index: 2, kind: input, shape index: {}]
  %s3 = inlined_call_operand.vmem [shape: bf16[64,64], index: 3, kind: input, shape index: {}]
  %s4 = inlined_call_operand.hbm [shape: f32[1,64], index: 4, kind: input, shape index: {}]
  %s5 = inlined_call_operand.vmem [shape: bf16[64,64], index: 5, kind: input, shape index: {}]
  %s6 = inlined_call_operand.hbm [shape: f32[1,64], index: 6, kind: input, shape index: {}]
  %s7 = inlined_call_operand.vmem [shape: f32[16,64], index: 7, kind: output, shape index: {}]
  %s8 = sld [smem:[#allocation0]]
  $region54: #{conformer_vision_forward.27} parent=0
    _
  %s10 = ssub.s32 1, %s8
  %s11 = scalar_select 0, %s10, %s8
  $region1: #{conformer_vision_forward.27} parent=0
    #allocation2 [shape = 'u8[512]{0}', space=vmem, size = 0x400, scoped, tag = 'input window, operand 1, single buffered']
    #allocation3 [shape = 's32[1]{0}', space=sflag, size = 0x4, scoped, tag = 'scoped memory for conformer_vision_forward.27']
    #allocation4 [shape = 'u8[512]{0}', space=vmem, size = 0x400, scoped, tag = 'input window, operand 2, single buffered']
    #allocation5 [shape = 's32[1]{0}', space=sflag, size = 0x4, scoped, tag = 'scoped memory for conformer_vision_forward.27']
    #allocation6 [shape = 'u8[512]{0}', space=vmem, size = 0x400, scoped, tag = 'input window, operand 4, single buffered']
    #allocation7 [shape = 'u8[512]{0}', space=vmem, size = 0x400, scoped, tag = 'input window, operand 6, single buffered']
    #allocation8 [shape = 's32[1]{0}', space=sflag, size = 0x4, scoped, tag = 'scoped memory for conformer_vision_forward.27']
    %12 = vsyncpa [#allocation3], 0
    %13 = vsyncpa [#allocation5], 0
    %14 = vsyncpa [#allocation8], 0
    // Predicated region
    $region2: #{conformer_vision_forward.27} parent=1 // pred_check
      _
    $region3: #{conformer_vision_forward.27} parent=1 // pred_check_branch
      %16 = sbr.rel (0) target = $region5
    $region4: #{conformer_vision_forward.27} parent=1 // pred_region
      _
    $region5: #{conformer_vision_forward.27} parent=1 // pred_fallthru
      _
    // Predicated region
    $region6: #{conformer_vision_forward.27} parent=1 // pred_check
      _
    $region7: #{conformer_vision_forward.27} parent=1 // pred_check_branch
      %18 = sbr.rel (0) target = $region9
    $region8: #{conformer_vision_forward.27} parent=1 // pred_region
      %s20 = ssub.s32 16, 16
      %21 = vsyncadd [#allocation3], %s20
      %s23 = sshll.u32 [#allocation2], 4
      %s24 = int_to_ptr.vmem [resolvable:$true] %s23
      %26 = dma.hbm_to_vmem [thread:$0]  %s1, 16, %s24, [#allocation3]
    $region9: #{conformer_vision_forward.27} parent=1 // pred_fallthru
      _
    // Predicated region
    $region10: #{conformer_vision_forward.27} parent=1 // pred_check
      _
    $region11: #{conformer_vision_forward.27} parent=1 // pred_check_branch
      %28 = sbr.rel (0) target = $region13
    $region12: #{conformer_vision_forward.27} parent=1 // pred_region
      %s30 = ssub.s32 16, 16
      %31 = vsyncadd [#allocation5], %s30
      %s33 = sshll.u32 [#allocation4], 4
      %s34 = int_to_ptr.vmem [resolvable:$true] %s33
      %36 = dma.hbm_to_vmem [thread:$0]  %s2, 16, %s34, [#allocation5]
    $region13: #{conformer_vision_forward.27} parent=1 // pred_fallthru
      _
    // Predicated region
    $region14: #{conformer_vision_forward.27} parent=1 // pred_check
      _
    $region15: #{conformer_vision_forward.27} parent=1 // pred_check_branch
      %38 = sbr.rel (0) target = $region17
    $region16: #{conformer_vision_forward.27} parent=1 // pred_region
      _
    $region17: #{conformer_vision_forward.27} parent=1 // pred_fallthru
      _
    // Predicated region
    $region18: #{conformer_vision_forward.27} parent=1 // pred_check
      _
    $region19: #{conformer_vision_forward.27} parent=1 // pred_check_branch
      %40 = sbr.rel (0) target = $region21
    $region20: #{conformer_vision_forward.27} parent=1 // pred_region
      %s42 = ssub.s32 16, 16
      %43 = vsyncadd [#allocation5], %s42
      %s45 = sshll.u32 [#allocation6], 4
      %s46 = int_to_ptr.vmem [resolvable:$true] %s45
      %48 = dma.hbm_to_vmem [thread:$0]  %s4, 16, %s46, [#allocation5]
    $region21: #{conformer_vision_forward.27} parent=1 // pred_fallthru
      _
    // Predicated region
    $region22: #{conformer_vision_forward.27} parent=1 // pred_check
      _
    $region23: #{conformer_vision_forward.27} parent=1 // pred_check_branch
      %50 = sbr.rel (0) target = $region25
    $region24: #{conformer_vision_forward.27} parent=1 // pred_region
      _
    $region25: #{conformer_vision_forward.27} parent=1 // pred_fallthru
      _
    // Predicated region
    $region26: #{conformer_vision_forward.27} parent=1 // pred_check
      _
    $region27: #{conformer_vision_forward.27} parent=1 // pred_check_branch
      %52 = sbr.rel (0) target = $region29
    $region28: #{conformer_vision_forward.27} parent=1 // pred_region
      %s54 = ssub.s32 16, 16
      %55 = vsyncadd [#allocation8], %s54
      %s57 = sshll.u32 [#allocation7], 4
      %s58 = int_to_ptr.vmem [resolvable:$true] %s57
      %60 = dma.hbm_to_vmem [thread:$0]  %s6, 16, %s58, [#allocation8]
    $region29: #{conformer_vision_forward.27} parent=1 // pred_fallthru
      _
    // Predicated region
    $region30: #{conformer_vision_forward.27} parent=1 // pred_check
      _
    $region31: #{conformer_vision_forward.27} parent=1 // pred_check_branch
      %62 = sbr.rel (0) target = $region33
    $region32: #{conformer_vision_forward.27} parent=1 // pred_region
      %63 = dma.done [#allocation3], 16
    $region33: #{conformer_vision_forward.27} parent=1 // pred_fallthru
      _
    // Predicated region
    $region34: #{conformer_vision_forward.27} parent=1 // pred_check
      _
    $region35: #{conformer_vision_forward.27} parent=1 // pred_check_branch
      %65 = sbr.rel (0) target = $region37
    $region36: #{conformer_vision_forward.27} parent=1 // pred_region
      %66 = dma.done [#allocation5], 16
    $region37: #{conformer_vision_forward.27} parent=1 // pred_fallthru
      _
    // Predicated region
    $region38: #{conformer_vision_forward.27} parent=1 // pred_check
      _
    $region39: #{conformer_vision_forward.27} parent=1 // pred_check_branch
      %68 = sbr.rel (0) target = $region41
    $region40: #{conformer_vision_forward.27} parent=1 // pred_region
      %69 = dma.done [#allocation5], 16
    $region41: #{conformer_vision_forward.27} parent=1 // pred_fallthru
      _
    // Predicated region
    $region42: #{conformer_vision_forward.27} parent=1 // pred_check
      _
    $region43: #{conformer_vision_forward.27} parent=1 // pred_check_branch
      %71 = sbr.rel (0) target = $region45
    $region44: #{conformer_vision_forward.27} parent=1 // pred_region
      %72 = dma.done [#allocation8], 16
    $region45: #{conformer_vision_forward.27} parent=1 // pred_fallthru
      _
    %v74 = vld [vmem:[%s0] sm:$0xff]
    %v75 = vld [vmem:[%s0 + $0x8] sm:$0xff]
    %vm76 = vcmask 523264
    %v77 = vsel %vm76, %v74, 0.0
    %78 = vadd.xlane.f32.xlu0 %v77
    %v79 = vpop.xlane.xlu0 %78
    %v80 = vsel %vm76, %v75, 0.0
    %81 = vadd.xlane.f32.xlu0 %v80
    %v82 = vpop.xlane.xlu0 %81
    %v83 = vrcp.pop 64.0
    %v84 = vmul.f32 %v79, %v83
    %v85 = vmul.f32 %v82, %v83
    %v86 = vsub.f32 %v74, %v84
    %v87 = vsub.f32 %v75, %v85
    %v88 = vmul.f32 %v86, %v86
    %v89 = vmul.f32 %v87, %v87
    %v90 = vsel %vm76, %v88, 0.0
    %91 = vadd.xlane.f32.xlu0 %v90
    %v92 = vpop.xlane.xlu0 %91
    %v93 = vsel %vm76, %v89, 0.0
    %94 = vadd.xlane.f32.xlu0 %v93
    %v95 = vpop.xlane.xlu0 %94
    %v96 = vmul.f32 %v92, %v83
    %v97 = vmul.f32 %v95, %v83
    %v98 = vadd.f32 %v96, 1e-05
    %v99 = vadd.f32 %v97, 1e-05
    %v100 = vrsqrt.pop %v98
    %v101 = vrsqrt.pop %v99
    %v102 = vmul.f32 %v86, %v100
    %v103 = vmul.f32 %v87, %v101
    %v104 = vld [vmem:[#allocation2] sm:$0x1]
    %v106 = vlaneseq
    %v107 = vshrl.u32 %v106, 7
    %v108 = vsub.s32 0, %v107
    %v109 = vrot.slane %v104, %v108
    %v111 = vmul.f32 %v102, %v109
    %v112 = vmul.f32 %v103, %v109
    %v113 = vld [vmem:[#allocation4] sm:$0x1]
    %v115 = vlaneseq
    %v116 = vshrl.u32 %v115, 7
    %v117 = vsub.s32 0, %v116
    %v118 = vrot.slane %v113, %v117
    %v120 = vadd.f32 %v111, %v118
    %v121 = vadd.f32 %v112, %v118
    %v122 = vpack.c.bf16 %v121, %v120
    %v123 = vld [vmem:[%s3] sm:$0xf]
    %v124 = vld [vmem:[%s3 + $0x4] sm:$0xf]
    %v125 = vld [vmem:[%s3 + $0x8] sm:$0xf]
    %v126 = vld [vmem:[%s3 + $0xc] sm:$0xf]
    %v127 = vld [vmem:[%s3 + $0x10] sm:$0xf]
    %v128 = vld [vmem:[%s3 + $0x14] sm:$0xf]
    %v129 = vld [vmem:[%s3 + $0x18] sm:$0xf]
    %v130 = vld [vmem:[%s3 + $0x1c] sm:$0xf]
    %v131 = vld [vmem:[#allocation6] sm:$0x1]
    %v133 = vlaneseq
    %v134 = vshrl.u32 %v133, 7
    %v135 = vsub.s32 0, %v134
    %v136 = vrot.slane %v131, %v135
    %v146 = vunpack.c.l.b16 %v123
    %v147 = vunpack.c.l.b16 %v124
    %v148 = vunpack.c.l.b16 %v125
    %v149 = vunpack.c.l.b16 %v126
    %v150 = vunpack.c.l.b16 %v127
    %v151 = vunpack.c.l.b16 %v128
    %v152 = vunpack.c.l.b16 %v129
    %v153 = vunpack.c.l.b16 %v130
    %v154 = vpack.c.b16 %v147, %v146
    %v155 = vpack.c.b16 %v149, %v148
    %v156 = vpack.c.b16 %v151, %v150
    %v157 = vpack.c.b16 %v153, %v152
    %v163 = vsel %vm76, %v122, 0
    %165 = vmatprep.subr.bf16.mxu0 0
    %166 = vmatpush1.bf16.msra.mxu0 0
    %167 = vmatprep.subr.bf16.mxu0 0
    %168 = vmatpush1.bf16.msra.mxu0 0
    %169 = vmatprep.subr.bf16.mxu0 0
    %170 = vmatpush1.bf16.msra.mxu0 0
    %171 = vmatprep.subr.bf16.mxu0 0
    %172 = vmatpush1.bf16.msra.mxu0 0
    %173 = vmatprep.subr.bf16.mxu0 0
    %174 = vmatpush1.bf16.msra.mxu0 %v157
    %175 = vmatprep.subr.bf16.mxu0 0
    %176 = vmatpush1.bf16.msra.mxu0 %v156
    %177 = vmatprep.subr.bf16.mxu0 0
    %178 = vmatpush1.bf16.msra.mxu0 %v155
    %179 = vmatprep.subr.bf16.mxu0 0
    %180 = vmatpush1.bf16.msra.mxu0 %v154
    %181 = vmatprep.subr.bf16.mxu0 0
    %182 = vmatpush2.bf16.msra.mxu0 0
    %183 = vmatprep.subr.bf16.mxu0 0
    %184 = vmatpush2.bf16.msra.mxu0 0
    %185 = vmatprep.subr.bf16.mxu0 0
    %186 = vmatpush2.bf16.msra.mxu0 0
    %187 = vmatprep.subr.bf16.mxu0 0
    %188 = vmatpush2.bf16.msra.mxu0 0
    %189 = vmatprep.subr.bf16.mxu0 0
    %190 = vmatpush2.bf16.msra.mxu0 0
    %191 = vmatprep.subr.bf16.mxu0 0
    %192 = vmatpush2.bf16.msra.mxu0 0
    %193 = vmatprep.subr.bf16.mxu0 0
    %194 = vmatpush2.bf16.msra.mxu0 0
    %195 = vmatprep.subr.bf16.mxu0 0
    %196 = vmatpush2.bf16.msra.mxu0 0
    %197 = vmatprep.mubr.bf16.mxu0 0
    %198 = vmatmul.mubr.bf16.gmra.mxu0 %v163
    %v199 = vpop.f32.mrf.mxu0
    %v200 = vadd.f32 %v136, %v199
    %v201 = vpop.f32.mrf.mxu0
    %v202 = vpop.f32.mrf.mxu0
    %v203 = vadd.f32 %v136, %v202
    %v204 = vpop.f32.mrf.mxu0
    %205 = vdwg.mxu0
    %v206 = vld [vmem:[%s5] sm:$0xf]
    %v207 = vld [vmem:[%s5 + $0x4] sm:$0xf]
    %v208 = vld [vmem:[%s5 + $0x8] sm:$0xf]
    %v209 = vld [vmem:[%s5 + $0xc] sm:$0xf]
    %v210 = vld [vmem:[%s5 + $0x10] sm:$0xf]
    %v211 = vld [vmem:[%s5 + $0x14] sm:$0xf]
    %v212 = vld [vmem:[%s5 + $0x18] sm:$0xf]
    %v213 = vld [vmem:[%s5 + $0x1c] sm:$0xf]
    %v214 = vld [vmem:[#allocation7] sm:$0x1]
    %v216 = vlaneseq
    %v217 = vshrl.u32 %v216, 7
    %v218 = vsub.s32 0, %v217
    %v219 = vrot.slane %v214, %v218
    %v229 = vunpack.c.l.b16 %v206
    %v230 = vunpack.c.l.b16 %v207
    %v231 = vunpack.c.l.b16 %v208
    %v232 = vunpack.c.l.b16 %v209
    %v233 = vunpack.c.l.b16 %v210
    %v234 = vunpack.c.l.b16 %v211
    %v235 = vunpack.c.l.b16 %v212
    %v236 = vunpack.c.l.b16 %v213
    %v237 = vpack.c.b16 %v230, %v229
    %v238 = vpack.c.b16 %v232, %v231
    %v239 = vpack.c.b16 %v234, %v233
    %v240 = vpack.c.b16 %v236, %v235
    %245 = vmatprep.subr.bf16.mxu0 0
    %246 = vmatpush1.bf16.msra.mxu0 0
    %247 = vmatprep.subr.bf16.mxu0 0
    %248 = vmatpush1.bf16.msra.mxu0 0
    %249 = vmatprep.subr.bf16.mxu0 0
    %250 = vmatpush1.bf16.msra.mxu0 0
    %251 = vmatprep.subr.bf16.mxu0 0
    %252 = vmatpush1.bf16.msra.mxu0 0
    %253 = vmatprep.subr.bf16.mxu0 0
    %254 = vmatpush1.bf16.msra.mxu0 %v240
    %255 = vmatprep.subr.bf16.mxu0 0
    %256 = vmatpush1.bf16.msra.mxu0 %v239
    %257 = vmatprep.subr.bf16.mxu0 0
    %258 = vmatpush1.bf16.msra.mxu0 %v238
    %259 = vmatprep.subr.bf16.mxu0 0
    %260 = vmatpush1.bf16.msra.mxu0 %v237
    %261 = vmatprep.subr.bf16.mxu0 0
    %262 = vmatpush2.bf16.msra.mxu0 0
    %263 = vmatprep.subr.bf16.mxu0 0
    %264 = vmatpush2.bf16.msra.mxu0 0
    %265 = vmatprep.subr.bf16.mxu0 0
    %266 = vmatpush2.bf16.msra.mxu0 0
    %267 = vmatprep.subr.bf16.mxu0 0
    %268 = vmatpush2.bf16.msra.mxu0 0
    %269 = vmatprep.subr.bf16.mxu0 0
    %270 = vmatpush2.bf16.msra.mxu0 0
    %271 = vmatprep.subr.bf16.mxu0 0
    %272 = vmatpush2.bf16.msra.mxu0 0
    %273 = vmatprep.subr.bf16.mxu0 0
    %274 = vmatpush2.bf16.msra.mxu0 0
    %275 = vmatprep.subr.bf16.mxu0 0
    %276 = vmatpush2.bf16.msra.mxu0 0
    %277 = vmatprep.mubr.bf16.mxu0 0
    %278 = vmatmul.mubr.bf16.gmra.mxu0 %v163
    %v279 = vpop.f32.mrf.mxu0
    %v280 = vadd.f32 %v219, %v279
    %v281 = vpop.f32.mrf.mxu0
    %v282 = vpop.f32.mrf.mxu0
    %v283 = vadd.f32 %v219, %v282
    %v284 = vpop.f32.mrf.mxu0
    %285 = vdwg.mxu0
    %v286 = vxor.u32 %v280, 2147483648
    %v287 = vxor.u32 %v283, 2147483648
    %v288 = vmul.f32 %v286, 1.442695
    %v289 = vpow.pop %v288
    %v290 = vmul.f32 %v287, 1.442695
    %v291 = vpow.pop %v290
    %v292 = vadd.f32 %v289, 1.0
    %v293 = vadd.f32 %v291, 1.0
    %v294 = vrcp.pop %v292
    %v295 = vmul.f32 1.0, %v294
    %v296 = vrcp.pop %v293
    %v297 = vmul.f32 1.0, %v296
    %v298 = vmul.f32 %v200, %v295
    %v299 = vmul.f32 %v203, %v297
    %300 = vst.msk [vmem:[%s7] sm:$0xff] %vm76, %v298
    %301 = vst.msk [vmem:[%s7 + $0x8] sm:$0xff] %vm76, %v299
    // Predicated region
    $region46: #{conformer_vision_forward.27} parent=1 // pred_check
      _
    $region47: #{conformer_vision_forward.27} parent=1 // pred_check_branch
      %303 = sbr.rel (0) target = $region49
    $region48: #{conformer_vision_forward.27} parent=1 // pred_region
      _
    $region49: #{conformer_vision_forward.27} parent=1 // pred_fallthru
      _
    // Predicated region
    $region50: #{conformer_vision_forward.27} parent=1 // pred_check
      _
    $region51: #{conformer_vision_forward.27} parent=1 // pred_check_branch
      %305 = sbr.rel (0) target = $region53
    $region52: #{conformer_vision_forward.27} parent=1 // pred_region
      _
    $region53: #{conformer_vision_forward.27} parent=1 // pred_fallthru
      _
    %306 = vsyncpa [#allocation3], 1
    %307 = vsyncpa [#allocation5], 1
    %308 = vsyncpa [#allocation8], 1

// kernel: conformer_vision_forward.26
$region0: #{conformer_vision_forward.26}
  #allocation0 [shape = 'u32[]', space=smem, size = 0x4, offset = 0x4, fixed_abs, tag = 'smem constant byte address 0x4 - core index']
  #allocation1 [shape = 'u32[144,128]{1,0:T(1,128)}', space=vmem, size = 0x12000, scoped, tag = 'internal scratch']
  %s0 = inlined_call_operand.vmem [shape: f32[2,4,8,16], index: 0, kind: input, shape index: {}]
  %s1 = inlined_call_operand.vmem [shape: f32[2,4,8,16], index: 1, kind: input, shape index: {}]
  %s2 = inlined_call_operand.vmem [shape: f32[2,4,8,16], index: 2, kind: input, shape index: {}]
  %s3 = inlined_call_operand.vmem [shape: bf16[4,16,64], index: 3, kind: input, shape index: {}]
  %s4 = inlined_call_operand.hbm [shape: f32[1,64], index: 4, kind: input, shape index: {}]
  %s5 = inlined_call_operand.vmem [shape: f32[2,8,64], index: 5, kind: input, shape index: {}]
  %s6 = inlined_call_operand.vmem [shape: f32[2,8,64], index: 6, kind: output, shape index: {}]
  %s7 = sld [smem:[#allocation0]]
  $region61: #{conformer_vision_forward.26} parent=0
    _
  %s9 = ssub.s32 1, %s7
  %s10 = scalar_select 0, %s9, %s7
  $region1: #{conformer_vision_forward.26} parent=0
    #allocation2 [shape = 'u8[512]{0}', space=vmem, size = 0x400, scoped, tag = 'input window, operand 4, single buffered']
    #allocation3 [shape = 's32[2]{0}', space=sflag, size = 0x8, scoped, tag = 'scoped memory for conformer_vision_forward.26']
    %11 = vsyncpa [#allocation3], 0
    loop: start=0, step=1, limit=4
    $region2: #{conformer_vision_forward.26} parent=1 // loop_pre_header
      _
    $region3: #{conformer_vision_forward.26} parent=1 // loop_header
      %s13 = sphi 0, %s17
      %p14 = scmp.ge.s32.totalorder %s13, 4
      %s23 = sphi 0, %s25
      %s26 = sphi 0, %s23
      %s27 = sphi 0, %s26
      %s43 = sphi 0, %s27
      %s49 = sphi 0, %s51
      %s52 = sphi 0, %s49
      %s53 = sphi 0, %s52
      %s69 = sphi 0, %s53
      %s75 = sphi 0, %s77
      %s78 = sphi 0, %s75
      %s79 = sphi 0, %s78
      %s95 = sphi 0, %s79
      %s99 = sphi 0, %s99
      %s101 = sphi 0, %s99
      %s102 = sphi 0, %s101
      %s116 = sphi 0, %s102
      %s120 = sphi 0, %s120
      %s122 = sphi 0, %s120
      %s123 = sphi 0, %s122
      %s137 = sphi 0, %s123
      %s143 = sphi 0, %s145
      %s146 = sphi 0, %s143
      %s147 = sphi 0, %s146
      %s163 = sphi 0, %s147
      %s169 = sphi 0, %s171
      %s172 = sphi 0, %s169
      %s173 = sphi 0, %s172
      %s189 = sphi 0, %s173
    $region4: #{conformer_vision_forward.26} parent=1 // loop_header_branch
      %16 = sbr.rel (%p14) target = $region8
    $region5: #{conformer_vision_forward.26} parent=1 // loop_body
      %s18 = ssub.s32 %s13, 1
      %s19 = ssub.s32 %s13, 2
      %s20 = sadd.s32 %s13, 1
      %s21 = ssub.s32 %s13, %s20
      %p22 = scmp.eq.s32.totalorder %s21, 0
      %s24 = sadd.s32 %s23, 1
      %s25 = scalar_select %p22, %s23, %s24
      %p28 = pneg %p22
      %p29 = scmp.eq.s32.totalorder %s13, 1
      %p30 = por %p28, %p29
      %p31 = scmp.ne.s32.totalorder %s23, %s26
      %p32 = scmp.eq.s32.totalorder %s13, 0
      %p33 = por %p31, %p32
      %p34 = scmp.ne.s32.totalorder %s23, %s26
      %p35 = scmp.eq.s32.totalorder %s18, 1
      %p36 = por %p34, %p35
      %p37 = scmp.ne.s32.totalorder %s26, %s27
      %p38 = scmp.eq.s32.totalorder %s18, 0
      %p39 = por %p37, %p38
      %p40 = scmp.ne.s32.totalorder %s26, %s27
      %p41 = scmp.eq.s32.totalorder %s19, 1
      %p42 = por %p40, %p41
      %p44 = scmp.ne.s32.totalorder %s27, %s43
      %p45 = scmp.eq.s32.totalorder %s19, 0
      %p46 = por %p44, %p45
      %s47 = ssub.s32 %s13, %s20
      %p48 = scmp.eq.s32.totalorder %s47, 0
      %s50 = sadd.s32 %s49, 1
      %s51 = scalar_select %p48, %s49, %s50
      %p54 = pneg %p48
      %p55 = scmp.eq.s32.totalorder %s13, 1
      %p56 = por %p54, %p55
      %p57 = scmp.ne.s32.totalorder %s49, %s52
      %p58 = scmp.eq.s32.totalorder %s13, 0
      %p59 = por %p57, %p58
      %p60 = scmp.ne.s32.totalorder %s49, %s52
      %p61 = scmp.eq.s32.totalorder %s18, 1
      %p62 = por %p60, %p61
      %p63 = scmp.ne.s32.totalorder %s52, %s53
      %p64 = scmp.eq.s32.totalorder %s18, 0
      %p65 = por %p63, %p64
      %p66 = scmp.ne.s32.totalorder %s52, %s53
      %p67 = scmp.eq.s32.totalorder %s19, 1
      %p68 = por %p66, %p67
      %p70 = scmp.ne.s32.totalorder %s53, %s69
      %p71 = scmp.eq.s32.totalorder %s19, 0
      %p72 = por %p70, %p71
      %s73 = ssub.s32 %s13, %s20
      %p74 = scmp.eq.s32.totalorder %s73, 0
      %s76 = sadd.s32 %s75, 1
      %s77 = scalar_select %p74, %s75, %s76
      %p80 = pneg %p74
      %p81 = scmp.eq.s32.totalorder %s13, 1
      %p82 = por %p80, %p81
      %p83 = scmp.ne.s32.totalorder %s75, %s78
      %p84 = scmp.eq.s32.totalorder %s13, 0
      %p85 = por %p83, %p84
      %p86 = scmp.ne.s32.totalorder %s75, %s78
      %p87 = scmp.eq.s32.totalorder %s18, 1
      %p88 = por %p86, %p87
      %p89 = scmp.ne.s32.totalorder %s78, %s79
      %p90 = scmp.eq.s32.totalorder %s18, 0
      %p91 = por %p89, %p90
      %p92 = scmp.ne.s32.totalorder %s78, %s79
      %p93 = scmp.eq.s32.totalorder %s19, 1
      %p94 = por %p92, %p93
      %p96 = scmp.ne.s32.totalorder %s79, %s95
      %p97 = scmp.eq.s32.totalorder %s19, 0
      %p98 = por %p96, %p97
      %s100 = sadd.s32 %s99, 1
      %p103 = scmp.eq.s32.totalorder %s13, 1
      %p104 = scmp.ne.s32.totalorder %s99, %s101
      %p105 = scmp.eq.s32.totalorder %s13, 0
      %p106 = por %p104, %p105
      %p107 = scmp.ne.s32.totalorder %s99, %s101
      %p108 = scmp.eq.s32.totalorder %s18, 1
      %p109 = por %p107, %p108
      %p110 = scmp.ne.s32.totalorder %s101, %s102
      %p111 = scmp.eq.s32.totalorder %s18, 0
      %p112 = por %p110, %p111
      %p113 = scmp.ne.s32.totalorder %s101, %s102
      %p114 = scmp.eq.s32.totalorder %s19, 1
      %p115 = por %p113, %p114
      %p117 = scmp.ne.s32.totalorder %s102, %s116
      %p118 = scmp.eq.s32.totalorder %s19, 0
      %p119 = por %p117, %p118
      %s121 = sadd.s32 %s120, 1
      %p124 = scmp.eq.s32.totalorder %s13, 1
      %p125 = scmp.ne.s32.totalorder %s120, %s122
      %p126 = scmp.eq.s32.totalorder %s13, 0
      %p127 = por %p125, %p126
      %p128 = scmp.ne.s32.totalorder %s120, %s122
      %p129 = scmp.eq.s32.totalorder %s18, 1
      %p130 = por %p128, %p129
      %p131 = scmp.ne.s32.totalorder %s122, %s123
      %p132 = scmp.eq.s32.totalorder %s18, 0
      %p133 = por %p131, %p132
      %p134 = scmp.ne.s32.totalorder %s122, %s123
      %p135 = scmp.eq.s32.totalorder %s19, 1
      %p136 = por %p134, %p135
      %p138 = scmp.ne.s32.totalorder %s123, %s137
      %p139 = scmp.eq.s32.totalorder %s19, 0
      %p140 = por %p138, %p139
      %s141 = ssub.s32 %s13, %s20
      %p142 = scmp.eq.s32.totalorder %s141, 0
      %s144 = sadd.s32 %s143, 1
      %s145 = scalar_select %p142, %s143, %s144
      %p148 = pneg %p142
      %p149 = scmp.eq.s32.totalorder %s13, 1
      %p150 = por %p148, %p149
      %p151 = scmp.ne.s32.totalorder %s143, %s146
      %p152 = scmp.eq.s32.totalorder %s13, 0
      %p153 = por %p151, %p152
      %p154 = scmp.ne.s32.totalorder %s143, %s146
      %p155 = scmp.eq.s32.totalorder %s18, 1
      %p156 = por %p154, %p155
      %p157 = scmp.ne.s32.totalorder %s146, %s147
      %p158 = scmp.eq.s32.totalorder %s18, 0
      %p159 = por %p157, %p158
      %p160 = scmp.ne.s32.totalorder %s146, %s147
      %p161 = scmp.eq.s32.totalorder %s19, 1
      %p162 = por %p160, %p161
      %p164 = scmp.ne.s32.totalorder %s147, %s163
      %p165 = scmp.eq.s32.totalorder %s19, 0
      %p166 = por %p164, %p165
      %s167 = ssub.s32 %s13, %s20
      %p168 = scmp.eq.s32.totalorder %s167, 0
      %s170 = sadd.s32 %s169, 1
      %s171 = scalar_select %p168, %s169, %s170
      %p174 = pneg %p168
      %p175 = scmp.eq.s32.totalorder %s13, 1
      %p176 = por %p174, %p175
      %p177 = scmp.ne.s32.totalorder %s169, %s172
      %p178 = scmp.eq.s32.totalorder %s13, 0
      %p179 = por %p177, %p178
      %p180 = scmp.ne.s32.totalorder %s169, %s172
      %p181 = scmp.eq.s32.totalorder %s18, 1
      %p182 = por %p180, %p181
      %p183 = scmp.ne.s32.totalorder %s172, %s173
      %p184 = scmp.eq.s32.totalorder %s18, 0
      %p185 = por %p183, %p184
      %p186 = scmp.ne.s32.totalorder %s172, %s173
      %p187 = scmp.eq.s32.totalorder %s19, 1
      %p188 = por %p186, %p187
      %p190 = scmp.ne.s32.totalorder %s173, %s189
      %p191 = scmp.eq.s32.totalorder %s19, 0
      %p192 = por %p190, %p191
      %p193 = scmp.le.s32.totalorder 1, %s13
      %p194 = scmp.lt.s32.totalorder %s13, 3
      %p195 = pnand %p193, %p194
      %p196 = pneg %p195
      // Predicated region
      $region9: #{conformer_vision_forward.26} parent=5 // pred_check
        _
      $region10: #{conformer_vision_forward.26} parent=5 // pred_check_branch
        %198 = sbr.rel (%p195) target = $region12
      $region11: #{conformer_vision_forward.26} parent=5 // pred_region
        %s199 = ssub.s32 %s13, 1
        // Predicated region
        $region13: #{conformer_vision_forward.26} parent=11 // pred_check
          %p200 = pneg %p112
        $region14: #{conformer_vision_forward.26} parent=11 // pred_check_branch
          %202 = sbr.rel (%p200) target = $region16
        $region15: #{conformer_vision_forward.26} parent=11 // pred_region
          _
        $region16: #{conformer_vision_forward.26} parent=11 // pred_fallthru
          _
        // Predicated region
        $region17: #{conformer_vision_forward.26} parent=11 // pred_check
          %p203 = pneg %p133
        $region18: #{conformer_vision_forward.26} parent=11 // pred_check_branch
          %205 = sbr.rel (%p203) target = $region20
        $region19: #{conformer_vision_forward.26} parent=11 // pred_region
          %s207 = ssub.s32 16, 16
          %208 = vsyncadd [#allocation3], %s207
          %s210 = sshll.u32 [#allocation2], 4
          %s211 = int_to_ptr.vmem [resolvable:$true] %s210
          %213 = dma.hbm_to_vmem [thread:$0]  %s4, 16, %s211, [#allocation3]
        $region20: #{conformer_vision_forward.26} parent=11 // pred_fallthru
          _
      $region12: #{conformer_vision_forward.26} parent=5 // pred_fallthru
        _
      %p214 = scmp.lt.s32.totalorder %s13, 2
      // Predicated region
      $region21: #{conformer_vision_forward.26} parent=5 // pred_check
        %p215 = pneg %p214
      $region22: #{conformer_vision_forward.26} parent=5 // pred_check_branch
        %217 = sbr.rel (%p215) target = $region24
      $region23: #{conformer_vision_forward.26} parent=5 // pred_region
        // Predicated region
        $region25: #{conformer_vision_forward.26} parent=23 // pred_check
          %p218 = pneg %p33
        $region26: #{conformer_vision_forward.26} parent=23 // pred_check_branch
          %220 = sbr.rel (%p218) target = $region28
        $region27: #{conformer_vision_forward.26} parent=23 // pred_region
          %p221 = scmp.lt.s32.totalorder %s13, 1
          %s222 = scalar_select %p221, %s13, 1
          %s223 = smul.addr %s222, 4
          %s224 = smul.addr %s223, 8
          %s225 = scalar_lea.vmem %s0, %s224
        $region28: #{conformer_vision_forward.26} parent=23 // pred_fallthru
          _
        // Predicated region
        $region29: #{conformer_vision_forward.26} parent=23 // pred_check
          %p226 = pneg %p59
        $region30: #{conformer_vision_forward.26} parent=23 // pred_check_branch
          %228 = sbr.rel (%p226) target = $region32
        $region31: #{conformer_vision_forward.26} parent=23 // pred_region
          %p229 = scmp.lt.s32.totalorder %s13, 1
          %s230 = scalar_select %p229, %s13, 1
          %s231 = smul.addr %s230, 4
          %s232 = smul.addr %s231, 8
          %s233 = scalar_lea.vmem %s1, %s232
        $region32: #{conformer_vision_forward.26} parent=23 // pred_fallthru
          _
        // Predicated region
        $region33: #{conformer_vision_forward.26} parent=23 // pred_check
          %p234 = pneg %p85
        $region34: #{conformer_vision_forward.26} parent=23 // pred_check_branch
          %236 = sbr.rel (%p234) target = $region36
        $region35: #{conformer_vision_forward.26} parent=23 // pred_region
          %p237 = scmp.lt.s32.totalorder %s13, 1
          %s238 = scalar_select %p237, %s13, 1
          %s239 = smul.addr %s238, 4
          %s240 = smul.addr %s239, 8
          %s241 = scalar_lea.vmem %s2, %s240
        $region36: #{conformer_vision_forward.26} parent=23 // pred_fallthru
          _
        // Predicated region
        $region37: #{conformer_vision_forward.26} parent=23 // pred_check
          %p242 = pneg %p153
        $region38: #{conformer_vision_forward.26} parent=23 // pred_check_branch
          %244 = sbr.rel (%p242) target = $region40
        $region39: #{conformer_vision_forward.26} parent=23 // pred_region
          %p245 = scmp.lt.s32.totalorder %s13, 1
          %s246 = scalar_select %p245, %s13, 1
          %s247 = smul.addr %s246, 8
          %s248 = scalar_lea.vmem %s5, %s247
        $region40: #{conformer_vision_forward.26} parent=23 // pred_fallthru
          _
      $region24: #{conformer_vision_forward.26} parent=5 // pred_fallthru
        _
      %p249 = scmp.le.s32.totalorder 1, %s13
      %p250 = scmp.lt.s32.totalorder %s13, 3
      %p251 = pnand %p249, %p250
      %p252 = pneg %p251
      // Predicated region
      $region41: #{conformer_vision_forward.26} parent=5 // pred_check
        _
      $region42: #{conformer_vision_forward.26} parent=5 // pred_check_branch
        %254 = sbr.rel (%p251) target = $region44
      $region43: #{conformer_vision_forward.26} parent=5 // pred_region
        %s255 = ssub.s32 %s13, 1
        // Predicated region
        $region45: #{conformer_vision_forward.26} parent=43 // pred_check
          %p256 = pneg %p133
        $region46: #{conformer_vision_forward.26} parent=43 // pred_check_branch
          %258 = sbr.rel (%p256) target = $region48
        $region47: #{conformer_vision_forward.26} parent=43 // pred_region
          %259 = dma.done [#allocation3], 16
        $region48: #{conformer_vision_forward.26} parent=43 // pred_fallthru
          _
        %p260 = scmp.lt.s32.totalorder %s18, 1
        %s261 = scalar_select %p260, %s18, 1
        %s262 = smul.addr %s261, 4
        %s263 = smul.addr %s262, 8
        %s264 = scalar_lea.vmem %s0, %s263
        %p265 = pneg %p39
        %p266 = pneg %p36
        %p267 = scmp.lt.s32.totalorder %s18, 1
        %s268 = scalar_select %p267, %s18, 1
        %s269 = smul.addr %s268, 4
        %s270 = smul.addr %s269, 8
        %s271 = scalar_lea.vmem %s1, %s270
        %p272 = pneg %p65
        %p273 = pneg %p62
        %p274 = scmp.lt.s32.totalorder %s18, 1
        %s275 = scalar_select %p274, %s18, 1
        %s276 = smul.addr %s275, 4
        %s277 = smul.addr %s276, 8
        %s278 = scalar_lea.vmem %s2, %s277
        %p279 = pneg %p91
        %p280 = pneg %p88
        %p281 = pneg %p112
        %p282 = pneg %p109
        %p283 = pneg %p133
        %p284 = pneg %p130
        %p285 = scmp.lt.s32.totalorder %s18, 1
        %s286 = scalar_select %p285, %s18, 1
        %s287 = smul.addr %s286, 8
        %s288 = scalar_lea.vmem %s5, %s287
        %p289 = pneg %p159
        %p290 = pneg %p156
        %p291 = pneg %p185
        %p292 = pneg %p182
        %p293 = scmp.lt.s32.totalorder %s18, 1
        %s294 = scalar_select %p293, %s18, 1
        %s295 = smul.addr %s294, 8
        %s296 = scalar_lea.vmem %s6, %s295
        %p297 = scmp.lt.s32.totalorder %s18, 1
        %s298 = scalar_select %p297, %s18, 1
        %s299 = smul.addr %s298, 4
        %s300 = smul.addr %s299, 8
        %s301 = scalar_lea.vmem %s0, %s300
        %p302 = scmp.lt.s32.totalorder %s18, 1
        %s303 = scalar_select %p302, %s18, 1
        %s304 = smul.addr %s303, 4
        %s305 = smul.addr %s304, 8
        %s306 = scalar_lea.vmem %s1, %s305
        %p307 = scmp.lt.s32.totalorder %s18, 1
        %s308 = scalar_select %p307, %s18, 1
        %s309 = smul.addr %s308, 4
        %s310 = smul.addr %s309, 8
        %s311 = scalar_lea.vmem %s2, %s310
        %p312 = scmp.lt.s32.totalorder %s18, 1
        %s313 = scalar_select %p312, %s18, 1
        %s314 = smul.addr %s313, 8
        %s315 = scalar_lea.vmem %s5, %s314
        %p316 = scmp.lt.s32.totalorder %s18, 1
        %s317 = scalar_select %p316, %s18, 1
        %s318 = smul.addr %s317, 8
        %s319 = scalar_lea.vmem %s6, %s318
        %v321 = vld [vmem:[%s315] sm:$0xff]
        %v322 = vld [vmem:[#allocation2] sm:$0x1]
        %v324 = vlaneseq
        %v325 = vshrl.u32 %v324, 7
        %v326 = vsub.s32 0, %v325
        %v327 = vrot.slane %v322, %v326
        %v329 = vadd.f32 %v321, %v327
        %v330 = vld [vmem:[%s301] sm:$0xff]
        %v331 = vpack.c.bf16 %v330, %v330
        %v332 = vld [vmem:[%s306] sm:$0xff]
        %v333 = vpack.c.bf16 %v332, %v332
        %v334 = vld [vmem:[%s311] sm:$0xff]
        %v335 = vpack.c.bf16 %v334, %v334
        %vm336 = vcmask 130048
        %v338 = vsel %vm336, %v331, 0
        %v341 = vsel %vm336, %v333, 0
        %343 = vmatprep.subr.bf16.mxu0 0
        %344 = vmatpush1.bf16.xpose.msra.mxu0 0
        %345 = vmatprep.subr.bf16.mxu0 0
        %346 = vmatpush1.bf16.xpose.msra.mxu0 0
        %347 = vmatprep.subr.bf16.mxu0 0
        %348 = vmatpush1.bf16.xpose.msra.mxu0 0
        %349 = vmatprep.subr.bf16.mxu0 0
        %350 = vmatpush1.bf16.xpose.msra.mxu0 0
        %351 = vmatprep.subr.bf16.mxu0 0
        %352 = vmatpush1.bf16.xpose.msra.mxu0 0
        %353 = vmatprep.subr.bf16.mxu0 0
        %354 = vmatpush1.bf16.xpose.msra.mxu0 0
        %355 = vmatprep.subr.bf16.mxu0 0
        %356 = vmatpush1.bf16.xpose.msra.mxu0 0
        %357 = vmatprep.subr.bf16.mxu0 0
        %358 = vmatpush1.bf16.xpose.msra.mxu0 %v341
        %359 = vmatprep.subr.bf16.mxu0 0
        %360 = vmatpush2.bf16.xpose.msra.mxu0 0
        %361 = vmatprep.subr.bf16.mxu0 0
        %362 = vmatpush2.bf16.xpose.msra.mxu0 0
        %363 = vmatprep.subr.bf16.mxu0 0
        %364 = vmatpush2.bf16.xpose.msra.mxu0 0
        %365 = vmatprep.subr.bf16.mxu0 0
        %366 = vmatpush2.bf16.xpose.msra.mxu0 0
        %367 = vmatprep.subr.bf16.mxu0 0
        %368 = vmatpush2.bf16.xpose.msra.mxu0 0
        %369 = vmatprep.subr.bf16.mxu0 0
        %370 = vmatpush2.bf16.xpose.msra.mxu0 0
        %371 = vmatprep.subr.bf16.mxu0 0
        %372 = vmatpush2.bf16.xpose.msra.mxu0 0
        %373 = vmatprep.subr.bf16.mxu0 0
        %374 = vmatpush2.bf16.xpose.msra.mxu0 0
        %375 = vmatprep.mubr.bf16.mxu0 0
        %376 = vmatmul.mubr.bf16.gmra.mxu0 %v338
        %v377 = vpop.f32.mrf.mxu0
        %v378 = vadd.f32 0.0, %v377
        %v379 = vpop.f32.mrf.mxu0
        %v380 = vpop.f32.mrf.mxu0
        %v381 = vpop.f32.mrf.mxu0
        %382 = vdwg.mxu0
        %v383 = vmul.f32 %v378, 0.25
        %vm384 = vcmask 64512
        %v385 = vsel %vm384, %v383, -inf
        %386 = vmax.xlane.f32.xlu0 %v385
        %v387 = vpop.xlane.xlu0 %386
        %v388 = vsub.f32 %v383, %v387
        %v389 = vmul.f32 %v388, 1.442695
        %v390 = vpow.pop %v389
        %v391 = vsel %vm384, %v390, 0.0
        %392 = vadd.xlane.f32.xlu0 %v391
        %v393 = vpop.xlane.xlu0 %392
        %v394 = vrcp.pop %v393
        %v395 = vmul.f32 %v390, %v394
        %v396 = vpack.c.bf16 %v395, %v395
        %v398 = vsel %vm384, %v396, 0
        %vm400 = vcmask 1043456
        %v402 = vsel %vm400, %v335, 0
        %404 = vmatprep.subr.bf16.mxu0 0
        %405 = vmatpush1.bf16.msra.mxu0 0
        %406 = vmatprep.subr.bf16.mxu0 0
        %407 = vmatpush1.bf16.msra.mxu0 0
        %408 = vmatprep.subr.bf16.mxu0 0
        %409 = vmatpush1.bf16.msra.mxu0 0
        %410 = vmatprep.subr.bf16.mxu0 0
        %411 = vmatpush1.bf16.msra.mxu0 0
        %412 = vmatprep.subr.bf16.mxu0 0
        %413 = vmatpush1.bf16.msra.mxu0 0
        %414 = vmatprep.subr.bf16.mxu0 0
        %415 = vmatpush1.bf16.msra.mxu0 0
        %416 = vmatprep.subr.bf16.mxu0 0
        %417 = vmatpush1.bf16.msra.mxu0 0
        %418 = vmatprep.subr.bf16.mxu0 0
        %419 = vmatpush1.bf16.msra.mxu0 %v402
        %420 = vmatprep.subr.bf16.mxu0 0
        %421 = vmatpush2.bf16.msra.mxu0 0
        %422 = vmatprep.subr.bf16.mxu0 0
        %423 = vmatpush2.bf16.msra.mxu0 0
        %424 = vmatprep.subr.bf16.mxu0 0
        %425 = vmatpush2.bf16.msra.mxu0 0
        %426 = vmatprep.subr.bf16.mxu0 0
        %427 = vmatpush2.bf16.msra.mxu0 0
        %428 = vmatprep.subr.bf16.mxu0 0
        %429 = vmatpush2.bf16.msra.mxu0 0
        %430 = vmatprep.subr.bf16.mxu0 0
        %431 = vmatpush2.bf16.msra.mxu0 0
        %432 = vmatprep.subr.bf16.mxu0 0
        %433 = vmatpush2.bf16.msra.mxu0 0
        %434 = vmatprep.subr.bf16.mxu0 0
        %435 = vmatpush2.bf16.msra.mxu0 0
        %436 = vmatprep.mubr.bf16.mxu0 0
        %437 = vmatmul.mubr.bf16.gmra.mxu0 %v398
        %v438 = vpop.f32.mrf.mxu0
        %v439 = vadd.f32 0.0, %v438
        %v440 = vpop.f32.mrf.mxu0
        %v441 = vpop.f32.mrf.mxu0
        %v442 = vpop.f32.mrf.mxu0
        %443 = vdwg.mxu0
        %v444 = vpack.c.bf16 %v439, %v439
        %v445 = vld [vmem:[%s3] sm:$0xf]
        %v446 = vld [vmem:[%s3 + $0x4] sm:$0xf]
        %v449 = vunpack.c.l.b16 %v445
        %v450 = vunpack.c.l.b16 %v446
        %v451 = vpack.c.b16 %v450, %v449
        %v454 = vsel %vm336, %v444, 0
        %456 = vmatprep.subr.bf16.mxu0 0
        %457 = vmatpush1.bf16.msra.mxu0 0
        %458 = vmatprep.subr.bf16.mxu0 0
        %459 = vmatpush1.bf16.msra.mxu0 0
        %460 = vmatprep.subr.bf16.mxu0 0
        %461 = vmatpush1.bf16.msra.mxu0 0
        %462 = vmatprep.subr.bf16.mxu0 0
        %463 = vmatpush1.bf16.msra.mxu0 0
        %464 = vmatprep.subr.bf16.mxu0 0
        %465 = vmatpush1.bf16.msra.mxu0 0
        %466 = vmatprep.subr.bf16.mxu0 0
        %467 = vmatpush1.bf16.msra.mxu0 0
        %468 = vmatprep.subr.bf16.mxu0 0
        %469 = vmatpush1.bf16.msra.mxu0 0
        %470 = vmatprep.subr.bf16.mxu0 0
        %471 = vmatpush1.bf16.msra.mxu0 %v451
        %472 = vmatprep.subr.bf16.mxu0 0
        %473 = vmatpush2.bf16.msra.mxu0 0
        %474 = vmatprep.subr.bf16.mxu0 0
        %475 = vmatpush2.bf16.msra.mxu0 0
        %476 = vmatprep.subr.bf16.mxu0 0
        %477 = vmatpush2.bf16.msra.mxu0 0
        %478 = vmatprep.subr.bf16.mxu0 0
        %479 = vmatpush2.bf16.msra.mxu0 0
        %480 = vmatprep.subr.bf16.mxu0 0
        %481 = vmatpush2.bf16.msra.mxu0 0
        %482 = vmatprep.subr.bf16.mxu0 0
        %483 = vmatpush2.bf16.msra.mxu0 0
        %484 = vmatprep.subr.bf16.mxu0 0
        %485 = vmatpush2.bf16.msra.mxu0 0
        %486 = vmatprep.subr.bf16.mxu0 0
        %487 = vmatpush2.bf16.msra.mxu0 0
        %488 = vmatprep.mubr.bf16.mxu0 0
        %489 = vmatmul.mubr.bf16.gmra.mxu0 %v454
        %v490 = vpop.f32.mrf.mxu0
        %v491 = vadd.f32 0.0, %v490
        %v492 = vpop.f32.mrf.mxu0
        %v493 = vpop.f32.mrf.mxu0
        %v494 = vpop.f32.mrf.mxu0
        %495 = vdwg.mxu0
        %v496 = vadd.f32 %v329, %v491
        %s497 = scalar_lea.vmem %s301, 8
        %v498 = vld [vmem:[%s497] sm:$0xff]
        %v499 = vpack.c.bf16 %v498, %v498
        %s500 = scalar_lea.vmem %s306, 8
        %v501 = vld [vmem:[%s500] sm:$0xff]
        %v502 = vpack.c.bf16 %v501, %v501
        %s503 = scalar_lea.vmem %s311, 8
        %v504 = vld [vmem:[%s503] sm:$0xff]
        %v505 = vpack.c.bf16 %v504, %v504
        %v507 = vsel %vm336, %v499, 0
        %v510 = vsel %vm336, %v502, 0
        %512 = vmatprep.subr.bf16.mxu0 0
        %513 = vmatpush1.bf16.xpose.msra.mxu0 0
        %514 = vmatprep.subr.bf16.mxu0 0
        %515 = vmatpush1.bf16.xpose.msra.mxu0 0
        %516 = vmatprep.subr.bf16.mxu0 0
        %517 = vmatpush1.bf16.xpose.msra.mxu0 0
        %518 = vmatprep.subr.bf16.mxu0 0
        %519 = vmatpush1.bf16.xpose.msra.mxu0 0
        %520 = vmatprep.subr.bf16.mxu0 0
        %521 = vmatpush1.bf16.xpose.msra.mxu0 0
        %522 = vmatprep.subr.bf16.mxu0 0
        %523 = vmatpush1.bf16.xpose.msra.mxu0 0
        %524 = vmatprep.subr.bf16.mxu0 0
        %525 = vmatpush1.bf16.xpose.msra.mxu0 0
        %526 = vmatprep.subr.bf16.mxu0 0
        %527 = vmatpush1.bf16.xpose.msra.mxu0 %v510
        %528 = vmatprep.subr.bf16.mxu0 0
        %529 = vmatpush2.bf16.xpose.msra.mxu0 0
        %530 = vmatprep.subr.bf16.mxu0 0
        %531 = vmatpush2.bf16.xpose.msra.mxu0 0
        %532 = vmatprep.subr.bf16.mxu0 0
        %533 = vmatpush2.bf16.xpose.msra.mxu0 0
        %534 = vmatprep.subr.bf16.mxu0 0
        %535 = vmatpush2.bf16.xpose.msra.mxu0 0
        %536 = vmatprep.subr.bf16.mxu0 0
        %537 = vmatpush2.bf16.xpose.msra.mxu0 0
        %538 = vmatprep.subr.bf16.mxu0 0
        %539 = vmatpush2.bf16.xpose.msra.mxu0 0
        %540 = vmatprep.subr.bf16.mxu0 0
        %541 = vmatpush2.bf16.xpose.msra.mxu0 0
        %542 = vmatprep.subr.bf16.mxu0 0
        %543 = vmatpush2.bf16.xpose.msra.mxu0 0
        %544 = vmatprep.mubr.bf16.mxu0 0
        %545 = vmatmul.mubr.bf16.gmra.mxu0 %v507
        %v546 = vpop.f32.mrf.mxu0
        %v547 = vadd.f32 0.0, %v546
        %v548 = vpop.f32.mrf.mxu0
        %v549 = vpop.f32.mrf.mxu0
        %v550 = vpop.f32.mrf.mxu0
        %551 = vdwg.mxu0
        %v552 = vmul.f32 %v547, 0.25
        %v553 = vsel %vm384, %v552, -inf
        %554 = vmax.xlane.f32.xlu0 %v553
        %v555 = vpop.xlane.xlu0 %554
        %v556 = vsub.f32 %v552, %v555
        %v557 = vmul.f32 %v556, 1.442695
        %v558 = vpow.pop %v557
        %v559 = vsel %vm384, %v558, 0.0
        %560 = vadd.xlane.f32.xlu0 %v559
        %v561 = vpop.xlane.xlu0 %560
        %v562 = vrcp.pop %v561
        %v563 = vmul.f32 %v558, %v562
        %v564 = vpack.c.bf16 %v563, %v563
        %v566 = vsel %vm384, %v564, 0
        %v569 = vsel %vm400, %v505, 0
        %571 = vmatprep.subr.bf16.mxu0 0
        %572 = vmatpush1.bf16.msra.mxu0 0
        %573 = vmatprep.subr.bf16.mxu0 0
        %574 = vmatpush1.bf16.msra.mxu0 0
        %575 = vmatprep.subr.bf16.mxu0 0
        %576 = vmatpush1.bf16.msra.mxu0 0
        %577 = vmatprep.subr.bf16.mxu0 0
        %578 = vmatpush1.bf16.msra.mxu0 0
        %579 = vmatprep.subr.bf16.mxu0 0
        %580 = vmatpush1.bf16.msra.mxu0 0
        %581 = vmatprep.subr.bf16.mxu0 0
        %582 = vmatpush1.bf16.msra.mxu0 0
        %583 = vmatprep.subr.bf16.mxu0 0
        %584 = vmatpush1.bf16.msra.mxu0 0
        %585 = vmatprep.subr.bf16.mxu0 0
        %586 = vmatpush1.bf16.msra.mxu0 %v569
        %587 = vmatprep.subr.bf16.mxu0 0
        %588 = vmatpush2.bf16.msra.mxu0 0
        %589 = vmatprep.subr.bf16.mxu0 0
        %590 = vmatpush2.bf16.msra.mxu0 0
        %591 = vmatprep.subr.bf16.mxu0 0
        %592 = vmatpush2.bf16.msra.mxu0 0
        %593 = vmatprep.subr.bf16.mxu0 0
        %594 = vmatpush2.bf16.msra.mxu0 0
        %595 = vmatprep.subr.bf16.mxu0 0
        %596 = vmatpush2.bf16.msra.mxu0 0
        %597 = vmatprep.subr.bf16.mxu0 0
        %598 = vmatpush2.bf16.msra.mxu0 0
        %599 = vmatprep.subr.bf16.mxu0 0
        %600 = vmatpush2.bf16.msra.mxu0 0
        %601 = vmatprep.subr.bf16.mxu0 0
        %602 = vmatpush2.bf16.msra.mxu0 0
        %603 = vmatprep.mubr.bf16.mxu0 0
        %604 = vmatmul.mubr.bf16.gmra.mxu0 %v566
        %v605 = vpop.f32.mrf.mxu0
        %v606 = vadd.f32 0.0, %v605
        %v607 = vpop.f32.mrf.mxu0
        %v608 = vpop.f32.mrf.mxu0
        %v609 = vpop.f32.mrf.mxu0
        %610 = vdwg.mxu0
        %v611 = vpack.c.bf16 %v606, %v606
        %s612 = scalar_lea.vmem %s3, 8
        %v613 = vld [vmem:[%s612] sm:$0xf]
        %v614 = vld [vmem:[%s612 + $0x4] sm:$0xf]
        %v617 = vunpack.c.l.b16 %v613
        %v618 = vunpack.c.l.b16 %v614
        %v619 = vpack.c.b16 %v618, %v617
        %v622 = vsel %vm336, %v611, 0
        %624 = vmatprep.subr.bf16.mxu0 0
        %625 = vmatpush1.bf16.msra.mxu0 0
        %626 = vmatprep.subr.bf16.mxu0 0
        %627 = vmatpush1.bf16.msra.mxu0 0
        %628 = vmatprep.subr.bf16.mxu0 0
        %629 = vmatpush1.bf16.msra.mxu0 0
        %630 = vmatprep.subr.bf16.mxu0 0
        %631 = vmatpush1.bf16.msra.mxu0 0
        %632 = vmatprep.subr.bf16.mxu0 0
        %633 = vmatpush1.bf16.msra.mxu0 0
        %634 = vmatprep.subr.bf16.mxu0 0
        %635 = vmatpush1.bf16.msra.mxu0 0
        %636 = vmatprep.subr.bf16.mxu0 0
        %637 = vmatpush1.bf16.msra.mxu0 0
        %638 = vmatprep.subr.bf16.mxu0 0
        %639 = vmatpush1.bf16.msra.mxu0 %v619
        %640 = vmatprep.subr.bf16.mxu0 0
        %641 = vmatpush2.bf16.msra.mxu0 0
        %642 = vmatprep.subr.bf16.mxu0 0
        %643 = vmatpush2.bf16.msra.mxu0 0
        %644 = vmatprep.subr.bf16.mxu0 0
        %645 = vmatpush2.bf16.msra.mxu0 0
        %646 = vmatprep.subr.bf16.mxu0 0
        %647 = vmatpush2.bf16.msra.mxu0 0
        %648 = vmatprep.subr.bf16.mxu0 0
        %649 = vmatpush2.bf16.msra.mxu0 0
        %650 = vmatprep.subr.bf16.mxu0 0
        %651 = vmatpush2.bf16.msra.mxu0 0
        %652 = vmatprep.subr.bf16.mxu0 0
        %653 = vmatpush2.bf16.msra.mxu0 0
        %654 = vmatprep.subr.bf16.mxu0 0
        %655 = vmatpush2.bf16.msra.mxu0 0
        %656 = vmatprep.mubr.bf16.mxu0 0
        %657 = vmatmul.mubr.bf16.gmra.mxu0 %v622
        %v658 = vpop.f32.mrf.mxu0
        %v659 = vadd.f32 0.0, %v658
        %v660 = vpop.f32.mrf.mxu0
        %v661 = vpop.f32.mrf.mxu0
        %v662 = vpop.f32.mrf.mxu0
        %663 = vdwg.mxu0
        %v664 = vadd.f32 %v496, %v659
        %s665 = scalar_lea.vmem %s301, 16
        %v666 = vld [vmem:[%s665] sm:$0xff]
        %v667 = vpack.c.bf16 %v666, %v666
        %s668 = scalar_lea.vmem %s306, 16
        %v669 = vld [vmem:[%s668] sm:$0xff]
        %v670 = vpack.c.bf16 %v669, %v669
        %s671 = scalar_lea.vmem %s311, 16
        %v672 = vld [vmem:[%s671] sm:$0xff]
        %v673 = vpack.c.bf16 %v672, %v672
        %v675 = vsel %vm336, %v667, 0
        %v678 = vsel %vm336, %v670, 0
        %680 = vmatprep.subr.bf16.mxu0 0
        %681 = vmatpush1.bf16.xpose.msra.mxu0 0
        %682 = vmatprep.subr.bf16.mxu0 0
        %683 = vmatpush1.bf16.xpose.msra.mxu0 0
        %684 = vmatprep.subr.bf16.mxu0 0
        %685 = vmatpush1.bf16.xpose.msra.mxu0 0
        %686 = vmatprep.subr.bf16.mxu0 0
        %687 = vmatpush1.bf16.xpose.msra.mxu0 0
        %688 = vmatprep.subr.bf16.mxu0 0
        %689 = vmatpush1.bf16.xpose.msra.mxu0 0
        %690 = vmatprep.subr.bf16.mxu0 0
        %691 = vmatpush1.bf16.xpose.msra.mxu0 0
        %692 = vmatprep.subr.bf16.mxu0 0
        %693 = vmatpush1.bf16.xpose.msra.mxu0 0
        %694 = vmatprep.subr.bf16.mxu0 0
        %695 = vmatpush1.bf16.xpose.msra.mxu0 %v678
        %696 = vmatprep.subr.bf16.mxu0 0
        %697 = vmatpush2.bf16.xpose.msra.mxu0 0
        %698 = vmatprep.subr.bf16.mxu0 0
        %699 = vmatpush2.bf16.xpose.msra.mxu0 0
        %700 = vmatprep.subr.bf16.mxu0 0
        %701 = vmatpush2.bf16.xpose.msra.mxu0 0
        %702 = vmatprep.subr.bf16.mxu0 0
        %703 = vmatpush2.bf16.xpose.msra.mxu0 0
        %704 = vmatprep.subr.bf16.mxu0 0
        %705 = vmatpush2.bf16.xpose.msra.mxu0 0
        %706 = vmatprep.subr.bf16.mxu0 0
        %707 = vmatpush2.bf16.xpose.msra.mxu0 0
        %708 = vmatprep.subr.bf16.mxu0 0
        %709 = vmatpush2.bf16.xpose.msra.mxu0 0
        %710 = vmatprep.subr.bf16.mxu0 0
        %711 = vmatpush2.bf16.xpose.msra.mxu0 0
        %712 = vmatprep.mubr.bf16.mxu0 0
        %713 = vmatmul.mubr.bf16.gmra.mxu0 %v675
        %v714 = vpop.f32.mrf.mxu0
        %v715 = vadd.f32 0.0, %v714
        %v716 = vpop.f32.mrf.mxu0
        %v717 = vpop.f32.mrf.mxu0
        %v718 = vpop.f32.mrf.mxu0
        %719 = vdwg.mxu0
        %v720 = vmul.f32 %v715, 0.25
        %v721 = vsel %vm384, %v720, -inf
        %722 = vmax.xlane.f32.xlu0 %v721
        %v723 = vpop.xlane.xlu0 %722
        %v724 = vsub.f32 %v720, %v723
        %v725 = vmul.f32 %v724, 1.442695
        %v726 = vpow.pop %v725
        %v727 = vsel %vm384, %v726, 0.0
        %728 = vadd.xlane.f32.xlu0 %v727
        %v729 = vpop.xlane.xlu0 %728
        %v730 = vrcp.pop %v729
        %v731 = vmul.f32 %v726, %v730
        %v732 = vpack.c.bf16 %v731, %v731
        %v734 = vsel %vm384, %v732, 0
        %v737 = vsel %vm400, %v673, 0
        %739 = vmatprep.subr.bf16.mxu0 0
        %740 = vmatpush1.bf16.msra.mxu0 0
        %741 = vmatprep.subr.bf16.mxu0 0
        %742 = vmatpush1.bf16.msra.mxu0 0
        %743 = vmatprep.subr.bf16.mxu0 0
        %744 = vmatpush1.bf16.msra.mxu0 0
        %745 = vmatprep.subr.bf16.mxu0 0
        %746 = vmatpush1.bf16.msra.mxu0 0
        %747 = vmatprep.subr.bf16.mxu0 0
        %748 = vmatpush1.bf16.msra.mxu0 0
        %749 = vmatprep.subr.bf16.mxu0 0
        %750 = vmatpush1.bf16.msra.mxu0 0
        %751 = vmatprep.subr.bf16.mxu0 0
        %752 = vmatpush1.bf16.msra.mxu0 0
        %753 = vmatprep.subr.bf16.mxu0 0
        %754 = vmatpush1.bf16.msra.mxu0 %v737
        %755 = vmatprep.subr.bf16.mxu0 0
        %756 = vmatpush2.bf16.msra.mxu0 0
        %757 = vmatprep.subr.bf16.mxu0 0
        %758 = vmatpush2.bf16.msra.mxu0 0
        %759 = vmatprep.subr.bf16.mxu0 0
        %760 = vmatpush2.bf16.msra.mxu0 0
        %761 = vmatprep.subr.bf16.mxu0 0
        %762 = vmatpush2.bf16.msra.mxu0 0
        %763 = vmatprep.subr.bf16.mxu0 0
        %764 = vmatpush2.bf16.msra.mxu0 0
        %765 = vmatprep.subr.bf16.mxu0 0
        %766 = vmatpush2.bf16.msra.mxu0 0
        %767 = vmatprep.subr.bf16.mxu0 0
        %768 = vmatpush2.bf16.msra.mxu0 0
        %769 = vmatprep.subr.bf16.mxu0 0
        %770 = vmatpush2.bf16.msra.mxu0 0
        %771 = vmatprep.mubr.bf16.mxu0 0
        %772 = vmatmul.mubr.bf16.gmra.mxu0 %v734
        %v773 = vpop.f32.mrf.mxu0
        %v774 = vadd.f32 0.0, %v773
        %v775 = vpop.f32.mrf.mxu0
        %v776 = vpop.f32.mrf.mxu0
        %v777 = vpop.f32.mrf.mxu0
        %778 = vdwg.mxu0
        %v779 = vpack.c.bf16 %v774, %v774
        %s780 = scalar_lea.vmem %s3, 16
        %v781 = vld [vmem:[%s780] sm:$0xf]
        %v782 = vld [vmem:[%s780 + $0x4] sm:$0xf]
        %v785 = vunpack.c.l.b16 %v781
        %v786 = vunpack.c.l.b16 %v782
        %v787 = vpack.c.b16 %v786, %v785
        %v790 = vsel %vm336, %v779, 0
        %792 = vmatprep.subr.bf16.mxu0 0
        %793 = vmatpush1.bf16.msra.mxu0 0
        %794 = vmatprep.subr.bf16.mxu0 0
        %795 = vmatpush1.bf16.msra.mxu0 0
        %796 = vmatprep.subr.bf16.mxu0 0
        %797 = vmatpush1.bf16.msra.mxu0 0
        %798 = vmatprep.subr.bf16.mxu0 0
        %799 = vmatpush1.bf16.msra.mxu0 0
        %800 = vmatprep.subr.bf16.mxu0 0
        %801 = vmatpush1.bf16.msra.mxu0 0
        %802 = vmatprep.subr.bf16.mxu0 0
        %803 = vmatpush1.bf16.msra.mxu0 0
        %804 = vmatprep.subr.bf16.mxu0 0
        %805 = vmatpush1.bf16.msra.mxu0 0
        %806 = vmatprep.subr.bf16.mxu0 0
        %807 = vmatpush1.bf16.msra.mxu0 %v787
        %808 = vmatprep.subr.bf16.mxu0 0
        %809 = vmatpush2.bf16.msra.mxu0 0
        %810 = vmatprep.subr.bf16.mxu0 0
        %811 = vmatpush2.bf16.msra.mxu0 0
        %812 = vmatprep.subr.bf16.mxu0 0
        %813 = vmatpush2.bf16.msra.mxu0 0
        %814 = vmatprep.subr.bf16.mxu0 0
        %815 = vmatpush2.bf16.msra.mxu0 0
        %816 = vmatprep.subr.bf16.mxu0 0
        %817 = vmatpush2.bf16.msra.mxu0 0
        %818 = vmatprep.subr.bf16.mxu0 0
        %819 = vmatpush2.bf16.msra.mxu0 0
        %820 = vmatprep.subr.bf16.mxu0 0
        %821 = vmatpush2.bf16.msra.mxu0 0
        %822 = vmatprep.subr.bf16.mxu0 0
        %823 = vmatpush2.bf16.msra.mxu0 0
        %824 = vmatprep.mubr.bf16.mxu0 0
        %825 = vmatmul.mubr.bf16.gmra.mxu0 %v790
        %v826 = vpop.f32.mrf.mxu0
        %v827 = vadd.f32 0.0, %v826
        %v828 = vpop.f32.mrf.mxu0
        %v829 = vpop.f32.mrf.mxu0
        %v830 = vpop.f32.mrf.mxu0
        %831 = vdwg.mxu0
        %v832 = vadd.f32 %v664, %v827
        %s833 = scalar_lea.vmem %s301, 24
        %v834 = vld [vmem:[%s833] sm:$0xff]
        %v835 = vpack.c.bf16 %v834, %v834
        %s836 = scalar_lea.vmem %s306, 24
        %v837 = vld [vmem:[%s836] sm:$0xff]
        %v838 = vpack.c.bf16 %v837, %v837
        %s839 = scalar_lea.vmem %s311, 24
        %v840 = vld [vmem:[%s839] sm:$0xff]
        %v841 = vpack.c.bf16 %v840, %v840
        %v843 = vsel %vm336, %v835, 0
        %v846 = vsel %vm336, %v838, 0
        %848 = vmatprep.subr.bf16.mxu0 0
        %849 = vmatpush1.bf16.xpose.msra.mxu0 0
        %850 = vmatprep.subr.bf16.mxu0 0
        %851 = vmatpush1.bf16.xpose.msra.mxu0 0
        %852 = vmatprep.subr.bf16.mxu0 0
        %853 = vmatpush1.bf16.xpose.msra.mxu0 0
        %854 = vmatprep.subr.bf16.mxu0 0
        %855 = vmatpush1.bf16.xpose.msra.mxu0 0
        %856 = vmatprep.subr.bf16.mxu0 0
        %857 = vmatpush1.bf16.xpose.msra.mxu0 0
        %858 = vmatprep.subr.bf16.mxu0 0
        %859 = vmatpush1.bf16.xpose.msra.mxu0 0
        %860 = vmatprep.subr.bf16.mxu0 0
        %861 = vmatpush1.bf16.xpose.msra.mxu0 0
        %862 = vmatprep.subr.bf16.mxu0 0
        %863 = vmatpush1.bf16.xpose.msra.mxu0 %v846
        %864 = vmatprep.subr.bf16.mxu0 0
        %865 = vmatpush2.bf16.xpose.msra.mxu0 0
        %866 = vmatprep.subr.bf16.mxu0 0
        %867 = vmatpush2.bf16.xpose.msra.mxu0 0
        %868 = vmatprep.subr.bf16.mxu0 0
        %869 = vmatpush2.bf16.xpose.msra.mxu0 0
        %870 = vmatprep.subr.bf16.mxu0 0
        %871 = vmatpush2.bf16.xpose.msra.mxu0 0
        %872 = vmatprep.subr.bf16.mxu0 0
        %873 = vmatpush2.bf16.xpose.msra.mxu0 0
        %874 = vmatprep.subr.bf16.mxu0 0
        %875 = vmatpush2.bf16.xpose.msra.mxu0 0
        %876 = vmatprep.subr.bf16.mxu0 0
        %877 = vmatpush2.bf16.xpose.msra.mxu0 0
        %878 = vmatprep.subr.bf16.mxu0 0
        %879 = vmatpush2.bf16.xpose.msra.mxu0 0
        %880 = vmatprep.mubr.bf16.mxu0 0
        %881 = vmatmul.mubr.bf16.gmra.mxu0 %v843
        %v882 = vpop.f32.mrf.mxu0
        %v883 = vadd.f32 0.0, %v882
        %v884 = vpop.f32.mrf.mxu0
        %v885 = vpop.f32.mrf.mxu0
        %v886 = vpop.f32.mrf.mxu0
        %887 = vdwg.mxu0
        %v888 = vmul.f32 %v883, 0.25
        %v889 = vsel %vm384, %v888, -inf
        %890 = vmax.xlane.f32.xlu0 %v889
        %v891 = vpop.xlane.xlu0 %890
        %v892 = vsub.f32 %v888, %v891
        %v893 = vmul.f32 %v892, 1.442695
        %v894 = vpow.pop %v893
        %v895 = vsel %vm384, %v894, 0.0
        %896 = vadd.xlane.f32.xlu0 %v895
        %v897 = vpop.xlane.xlu0 %896
        %v898 = vrcp.pop %v897
        %v899 = vmul.f32 %v894, %v898
        %v900 = vpack.c.bf16 %v899, %v899
        %v902 = vsel %vm384, %v900, 0
        %v905 = vsel %vm400, %v841, 0
        %907 = vmatprep.subr.bf16.mxu0 0
        %908 = vmatpush1.bf16.msra.mxu0 0
        %909 = vmatprep.subr.bf16.mxu0 0
        %910 = vmatpush1.bf16.msra.mxu0 0
        %911 = vmatprep.subr.bf16.mxu0 0
        %912 = vmatpush1.bf16.msra.mxu0 0
        %913 = vmatprep.subr.bf16.mxu0 0
        %914 = vmatpush1.bf16.msra.mxu0 0
        %915 = vmatprep.subr.bf16.mxu0 0
        %916 = vmatpush1.bf16.msra.mxu0 0
        %917 = vmatprep.subr.bf16.mxu0 0
        %918 = vmatpush1.bf16.msra.mxu0 0
        %919 = vmatprep.subr.bf16.mxu0 0
        %920 = vmatpush1.bf16.msra.mxu0 0
        %921 = vmatprep.subr.bf16.mxu0 0
        %922 = vmatpush1.bf16.msra.mxu0 %v905
        %923 = vmatprep.subr.bf16.mxu0 0
        %924 = vmatpush2.bf16.msra.mxu0 0
        %925 = vmatprep.subr.bf16.mxu0 0
        %926 = vmatpush2.bf16.msra.mxu0 0
        %927 = vmatprep.subr.bf16.mxu0 0
        %928 = vmatpush2.bf16.msra.mxu0 0
        %929 = vmatprep.subr.bf16.mxu0 0
        %930 = vmatpush2.bf16.msra.mxu0 0
        %931 = vmatprep.subr.bf16.mxu0 0
        %932 = vmatpush2.bf16.msra.mxu0 0
        %933 = vmatprep.subr.bf16.mxu0 0
        %934 = vmatpush2.bf16.msra.mxu0 0
        %935 = vmatprep.subr.bf16.mxu0 0
        %936 = vmatpush2.bf16.msra.mxu0 0
        %937 = vmatprep.subr.bf16.mxu0 0
        %938 = vmatpush2.bf16.msra.mxu0 0
        %939 = vmatprep.mubr.bf16.mxu0 0
        %940 = vmatmul.mubr.bf16.gmra.mxu0 %v902
        %v941 = vpop.f32.mrf.mxu0
        %v942 = vadd.f32 0.0, %v941
        %v943 = vpop.f32.mrf.mxu0
        %v944 = vpop.f32.mrf.mxu0
        %v945 = vpop.f32.mrf.mxu0
        %946 = vdwg.mxu0
        %v947 = vpack.c.bf16 %v942, %v942
        %s948 = scalar_lea.vmem %s3, 24
        %v949 = vld [vmem:[%s948] sm:$0xf]
        %v950 = vld [vmem:[%s948 + $0x4] sm:$0xf]
        %v953 = vunpack.c.l.b16 %v949
        %v954 = vunpack.c.l.b16 %v950
        %v955 = vpack.c.b16 %v954, %v953
        %v958 = vsel %vm336, %v947, 0
        %960 = vmatprep.subr.bf16.mxu0 0
        %961 = vmatpush1.bf16.msra.mxu0 0
        %962 = vmatprep.subr.bf16.mxu0 0
        %963 = vmatpush1.bf16.msra.mxu0 0
        %964 = vmatprep.subr.bf16.mxu0 0
        %965 = vmatpush1.bf16.msra.mxu0 0
        %966 = vmatprep.subr.bf16.mxu0 0
        %967 = vmatpush1.bf16.msra.mxu0 0
        %968 = vmatprep.subr.bf16.mxu0 0
        %969 = vmatpush1.bf16.msra.mxu0 0
        %970 = vmatprep.subr.bf16.mxu0 0
        %971 = vmatpush1.bf16.msra.mxu0 0
        %972 = vmatprep.subr.bf16.mxu0 0
        %973 = vmatpush1.bf16.msra.mxu0 0
        %974 = vmatprep.subr.bf16.mxu0 0
        %975 = vmatpush1.bf16.msra.mxu0 %v955
        %976 = vmatprep.subr.bf16.mxu0 0
        %977 = vmatpush2.bf16.msra.mxu0 0
        %978 = vmatprep.subr.bf16.mxu0 0
        %979 = vmatpush2.bf16.msra.mxu0 0
        %980 = vmatprep.subr.bf16.mxu0 0
        %981 = vmatpush2.bf16.msra.mxu0 0
        %982 = vmatprep.subr.bf16.mxu0 0
        %983 = vmatpush2.bf16.msra.mxu0 0
        %984 = vmatprep.subr.bf16.mxu0 0
        %985 = vmatpush2.bf16.msra.mxu0 0
        %986 = vmatprep.subr.bf16.mxu0 0
        %987 = vmatpush2.bf16.msra.mxu0 0
        %988 = vmatprep.subr.bf16.mxu0 0
        %989 = vmatpush2.bf16.msra.mxu0 0
        %990 = vmatprep.subr.bf16.mxu0 0
        %991 = vmatpush2.bf16.msra.mxu0 0
        %992 = vmatprep.mubr.bf16.mxu0 0
        %993 = vmatmul.mubr.bf16.gmra.mxu0 %v958
        %v994 = vpop.f32.mrf.mxu0
        %v995 = vadd.f32 0.0, %v994
        %v996 = vpop.f32.mrf.mxu0
        %v997 = vpop.f32.mrf.mxu0
        %v998 = vpop.f32.mrf.mxu0
        %999 = vdwg.mxu0
        %v1000 = vadd.f32 %v832, %v995
        %vm1001 = vcmask 523264
        %1002 = vst.msk [vmem:[%s319] sm:$0xff] %vm1001, %v1000
        %p1003 = scmp.lt.s32.totalorder %s18, 1
        %s1004 = scalar_select %p1003, %s18, 1
        %s1005 = smul.addr %s1004, 8
        %s1006 = scalar_lea.vmem %s6, %s1005
        // Predicated region
        $region49: #{conformer_vision_forward.26} parent=43 // pred_check
          %p1007 = pneg %p182
        $region50: #{conformer_vision_forward.26} parent=43 // pred_check_branch
          %1009 = sbr.rel (%p1007) target = $region52
        $region51: #{conformer_vision_forward.26} parent=43 // pred_region
          _
        $region52: #{conformer_vision_forward.26} parent=43 // pred_fallthru
          _
      $region44: #{conformer_vision_forward.26} parent=5 // pred_fallthru
        _
      %p1010 = scmp.le.s32.totalorder 2, %s13
      // Predicated region
      $region53: #{conformer_vision_forward.26} parent=5 // pred_check
        %p1011 = pneg %p1010
      $region54: #{conformer_vision_forward.26} parent=5 // pred_check_branch
        %1013 = sbr.rel (%p1011) target = $region56
      $region55: #{conformer_vision_forward.26} parent=5 // pred_region
        %s1014 = ssub.s32 %s13, 2
        // Predicated region
        $region57: #{conformer_vision_forward.26} parent=55 // pred_check
          %p1015 = pneg %p188
        $region58: #{conformer_vision_forward.26} parent=55 // pred_check_branch
          %1017 = sbr.rel (%p1015) target = $region60
        $region59: #{conformer_vision_forward.26} parent=55 // pred_region
          %p1018 = scmp.lt.s32.totalorder %s19, 1
          %s1019 = scalar_select %p1018, %s19, 1
          %s1020 = smul.addr %s1019, 8
          %s1021 = scalar_lea.vmem %s6, %s1020
        $region60: #{conformer_vision_forward.26} parent=55 // pred_fallthru
          _
      $region56: #{conformer_vision_forward.26} parent=5 // pred_fallthru
        _
    $region6: #{conformer_vision_forward.26} parent=1 // loop_footer
      %s17 = sadd.s32 1, %s13
    $region7: #{conformer_vision_forward.26} parent=1 // loop_footer_branch
      %12 = sbr.rel target = $region3
    $region8: #{conformer_vision_forward.26} parent=1 // loop_exit
      _
    %1022 = vsyncpa [#allocation3], 1
    %s1023 = scalar_lea.sflag [#allocation3], 1
    %1024 = vsyncpa %s1023, 1

// kernel: conformer_vision_forward.28
$region0: #{conformer_vision_forward.28}
  #allocation0 [shape = 'u32[]', space=smem, size = 0x4, offset = 0x4, fixed_abs, tag = 'smem constant byte address 0x4 - core index']
  #allocation1 [shape = 'u32[144,128]{1,0:T(1,128)}', space=vmem, size = 0x12000, scoped, tag = 'internal scratch']
  %s0 = inlined_call_operand.vmem [shape: f32[2,14,64], index: 0, kind: input, shape index: {}]
  %s1 = inlined_call_operand.vmem [shape: f32[7,1,64], index: 1, kind: input, shape index: {}]
  %s2 = inlined_call_operand.vmem [shape: f32[1,64], index: 2, kind: input, shape index: {}]
  %s3 = inlined_call_operand.vmem [shape: f32[2,8,64], index: 3, kind: output, shape index: {}]
  %s4 = sld [smem:[#allocation0]]
  $region22: #{conformer_vision_forward.28} parent=0
    _
  %s6 = ssub.s32 1, %s4
  %s7 = scalar_select 0, %s6, %s4
  // Predicated region
  $region2: #{conformer_vision_forward.28} parent=0 // pred_check
    _
  $region3: #{conformer_vision_forward.28} parent=0 // pred_check_branch
    %9 = sbr.rel (0) target = $region5
  $region4: #{conformer_vision_forward.28} parent=0 // pred_region
    _
  $region5: #{conformer_vision_forward.28} parent=0 // pred_fallthru
    _
  // Predicated region
  $region6: #{conformer_vision_forward.28} parent=0 // pred_check
    _
  $region7: #{conformer_vision_forward.28} parent=0 // pred_check_branch
    %11 = sbr.rel (0) target = $region9
  $region8: #{conformer_vision_forward.28} parent=0 // pred_region
    _
  $region9: #{conformer_vision_forward.28} parent=0 // pred_fallthru
    _
  // Predicated region
  $region10: #{conformer_vision_forward.28} parent=0 // pred_check
    _
  $region11: #{conformer_vision_forward.28} parent=0 // pred_check_branch
    %13 = sbr.rel (0) target = $region13
  $region12: #{conformer_vision_forward.28} parent=0 // pred_region
    _
  $region13: #{conformer_vision_forward.28} parent=0 // pred_fallthru
    _
  %v14 = vld [vmem:[%s0] sm:$0xff]
  %v15 = vld [vmem:[%s0 + $0x8] sm:$0x3f]
  %v16 = vld [vmem:[%s0 + $0x10] sm:$0xff]
  %v17 = vld [vmem:[%s0 + $0x18] sm:$0x3f]
  %v18 = vld [vmem:[%s1] sm:$0x1]
  %v20 = vlaneseq
  %v21 = vshrl.u32 %v20, 7
  %v22 = vsub.s32 0, %v21
  %v23 = vrot.slane %v18, %v22
  %v25 = vmul.f32 %v14, %v23
  %v26 = vmul.f32 %v16, %v23
  %s27 = scalar_lea.vmem %s1, 1
  %v28 = vld [vmem:[%s27] sm:$0x1]
  %v30 = vlaneseq
  %v31 = vshrl.u32 %v30, 7
  %v32 = vsub.s32 0, %v31
  %v33 = vrot.slane %v28, %v32
  %v35 = vmul.f32 %v14, %v33
  %v36 = vmul.f32 %v15, %v33
  %v37 = vmul.f32 %v16, %v33
  %v38 = vmul.f32 %v17, %v33
  %vm43 = vcmask 1046528
  %v44 = vrot.slane %v35, 1
  %v45 = vrot.slane %v36, 1
  %v46 = vsel %vm43, %v44, %v45
  %v47 = vrot.slane %v37, 1
  %v48 = vrot.slane %v38, 1
  %v49 = vsel %vm43, %v47, %v48
  %v52 = vadd.f32 %v25, %v46
  %v53 = vadd.f32 %v26, %v49
  %s54 = scalar_lea.vmem %s1, 2
  %v55 = vld [vmem:[%s54] sm:$0x1]
  %v57 = vlaneseq
  %v58 = vshrl.u32 %v57, 7
  %v59 = vsub.s32 0, %v58
  %v60 = vrot.slane %v55, %v59
  %v62 = vmul.f32 %v14, %v60
  %v63 = vmul.f32 %v15, %v60
  %v64 = vmul.f32 %v16, %v60
  %v65 = vmul.f32 %v17, %v60
  %vm70 = vcmask 1045504
  %v71 = vrot.slane %v62, 2
  %v72 = vrot.slane %v63, 2
  %v73 = vsel %vm70, %v71, %v72
  %v74 = vrot.slane %v64, 2
  %v75 = vrot.slane %v65, 2
  %v76 = vsel %vm70, %v74, %v75
  %v79 = vadd.f32 %v52, %v73
  %v80 = vadd.f32 %v53, %v76
  %s81 = scalar_lea.vmem %s1, 3
  %v82 = vld [vmem:[%s81] sm:$0x1]
  %v84 = vlaneseq
  %v85 = vshrl.u32 %v84, 7
  %v86 = vsub.s32 0, %v85
  %v87 = vrot.slane %v82, %v86
  %v89 = vmul.f32 %v14, %v87
  %v90 = vmul.f32 %v15, %v87
  %v91 = vmul.f32 %v16, %v87
  %v92 = vmul.f32 %v17, %v87
  %vm97 = vcmask 1044480
  %v98 = vrot.slane %v89, 3
  %v99 = vrot.slane %v90, 3
  %v100 = vsel %vm97, %v98, %v99
  %v101 = vrot.slane %v91, 3
  %v102 = vrot.slane %v92, 3
  %v103 = vsel %vm97, %v101, %v102
  %v106 = vadd.f32 %v79, %v100
  %v107 = vadd.f32 %v80, %v103
  %s108 = scalar_lea.vmem %s1, 4
  %v109 = vld [vmem:[%s108] sm:$0x1]
  %v111 = vlaneseq
  %v112 = vshrl.u32 %v111, 7
  %v113 = vsub.s32 0, %v112
  %v114 = vrot.slane %v109, %v113
  %v116 = vmul.f32 %v14, %v114
  %v117 = vmul.f32 %v15, %v114
  %v118 = vmul.f32 %v16, %v114
  %v119 = vmul.f32 %v17, %v114
  %vm124 = vcmask 1043456
  %v125 = vrot.slane %v116, 4
  %v126 = vrot.slane %v117, 4
  %v127 = vsel %vm124, %v125, %v126
  %v128 = vrot.slane %v118, 4
  %v129 = vrot.slane %v119, 4
  %v130 = vsel %vm124, %v128, %v129
  %v133 = vadd.f32 %v106, %v127
  %v134 = vadd.f32 %v107, %v130
  %s135 = scalar_lea.vmem %s1, 5
  %v136 = vld [vmem:[%s135] sm:$0x1]
  %v138 = vlaneseq
  %v139 = vshrl.u32 %v138, 7
  %v140 = vsub.s32 0, %v139
  %v141 = vrot.slane %v136, %v140
  %v143 = vmul.f32 %v14, %v141
  %v144 = vmul.f32 %v15, %v141
  %v145 = vmul.f32 %v16, %v141
  %v146 = vmul.f32 %v17, %v141
  %vm151 = vcmask 1042432
  %v152 = vrot.slane %v143, 5
  %v153 = vrot.slane %v144, 5
  %v154 = vsel %vm151, %v152, %v153
  %v155 = vrot.slane %v145, 5
  %v156 = vrot.slane %v146, 5
  %v157 = vsel %vm151, %v155, %v156
  %v160 = vadd.f32 %v133, %v154
  %v161 = vadd.f32 %v134, %v157
  %s162 = scalar_lea.vmem %s1, 6
  %v163 = vld [vmem:[%s162] sm:$0x1]
  %v165 = vlaneseq
  %v166 = vshrl.u32 %v165, 7
  %v167 = vsub.s32 0, %v166
  %v168 = vrot.slane %v163, %v167
  %v170 = vmul.f32 %v14, %v168
  %v171 = vmul.f32 %v15, %v168
  %v172 = vmul.f32 %v16, %v168
  %v173 = vmul.f32 %v17, %v168
  %vm178 = vcmask 1041408
  %v179 = vrot.slane %v170, 6
  %v180 = vrot.slane %v171, 6
  %v181 = vsel %vm178, %v179, %v180
  %v182 = vrot.slane %v172, 6
  %v183 = vrot.slane %v173, 6
  %v184 = vsel %vm178, %v182, %v183
  %v187 = vadd.f32 %v160, %v181
  %v188 = vadd.f32 %v161, %v184
  %v189 = vld [vmem:[%s2] sm:$0x1]
  %v191 = vlaneseq
  %v192 = vshrl.u32 %v191, 7
  %v193 = vsub.s32 0, %v192
  %v194 = vrot.slane %v189, %v193
  %v196 = vadd.f32 %v187, %v194
  %v197 = vadd.f32 %v188, %v194
  %v198 = vxor.u32 %v196, 2147483648
  %v199 = vxor.u32 %v197, 2147483648
  %v200 = vmul.f32 %v198, 1.442695
  %v201 = vpow.pop %v200
  %v202 = vmul.f32 %v199, 1.442695
  %v203 = vpow.pop %v202
  %v204 = vadd.f32 %v201, 1.0
  %v205 = vadd.f32 %v203, 1.0
  %v206 = vrcp.pop %v204
  %v207 = vmul.f32 1.0, %v206
  %v208 = vrcp.pop %v205
  %v209 = vmul.f32 1.0, %v208
  %v210 = vmul.f32 %v196, %v207
  %v211 = vmul.f32 %v197, %v209
  %vm212 = vcmask 523264
  %213 = vst.msk [vmem:[%s3] sm:$0xff] %vm212, %v210
  %214 = vst.msk [vmem:[%s3 + $0x8] sm:$0xff] %vm212, %v211
  // Predicated region
  $region14: #{conformer_vision_forward.28} parent=0 // pred_check
    _
  $region15: #{conformer_vision_forward.28} parent=0 // pred_check_branch
    %216 = sbr.rel (0) target = $region17
  $region16: #{conformer_vision_forward.28} parent=0 // pred_region
    _
  $region17: #{conformer_vision_forward.28} parent=0 // pred_fallthru
    _
  // Predicated region
  $region18: #{conformer_vision_forward.28} parent=0 // pred_check
    _
  $region19: #{conformer_vision_forward.28} parent=0 // pred_check_branch
    %218 = sbr.rel (0) target = $region21
  $region20: #{conformer_vision_forward.28} parent=0 // pred_region
    _
  $region21: #{conformer_vision_forward.28} parent=0 // pred_fallthru
    _

// kernel: conformer_vision_forward.29
$region0: #{conformer_vision_forward.29}
  #allocation0 [shape = 'u32[]', space=smem, size = 0x4, offset = 0x4, fixed_abs, tag = 'smem constant byte address 0x4 - core index']
  #allocation1 [shape = 'u32[144,128]{1,0:T(1,128)}', space=vmem, size = 0x12000, scoped, tag = 'internal scratch']
  %s0 = inlined_call_operand.vmem [shape: f32[16,64], index: 0, kind: input, shape index: {}]
  %s1 = inlined_call_operand.vmem [shape: bf16[64,64], index: 1, kind: input, shape index: {}]
  %s2 = inlined_call_operand.hbm [shape: f32[1,64], index: 2, kind: input, shape index: {}]
  %s3 = inlined_call_operand.vmem [shape: f32[16,64], index: 3, kind: input, shape index: {}]
  %s4 = inlined_call_operand.vmem [shape: f32[16,64], index: 4, kind: output, shape index: {}]
  %s5 = sld [smem:[#allocation0]]
  $region30: #{conformer_vision_forward.29} parent=0
    _
  %s7 = ssub.s32 1, %s5
  %s8 = scalar_select 0, %s7, %s5
  $region1: #{conformer_vision_forward.29} parent=0
    #allocation2 [shape = 'u8[512]{0}', space=vmem, size = 0x400, scoped, tag = 'input window, operand 2, single buffered']
    #allocation3 [shape = 's32[1]{0}', space=sflag, size = 0x4, scoped, tag = 'scoped memory for conformer_vision_forward.29']
    %9 = vsyncpa [#allocation3], 0
    // Predicated region
    $region2: #{conformer_vision_forward.29} parent=1 // pred_check
      _
    $region3: #{conformer_vision_forward.29} parent=1 // pred_check_branch
      %11 = sbr.rel (0) target = $region5
    $region4: #{conformer_vision_forward.29} parent=1 // pred_region
      _
    $region5: #{conformer_vision_forward.29} parent=1 // pred_fallthru
      _
    // Predicated region
    $region6: #{conformer_vision_forward.29} parent=1 // pred_check
      _
    $region7: #{conformer_vision_forward.29} parent=1 // pred_check_branch
      %13 = sbr.rel (0) target = $region9
    $region8: #{conformer_vision_forward.29} parent=1 // pred_region
      _
    $region9: #{conformer_vision_forward.29} parent=1 // pred_fallthru
      _
    // Predicated region
    $region10: #{conformer_vision_forward.29} parent=1 // pred_check
      _
    $region11: #{conformer_vision_forward.29} parent=1 // pred_check_branch
      %15 = sbr.rel (0) target = $region13
    $region12: #{conformer_vision_forward.29} parent=1 // pred_region
      %s17 = ssub.s32 16, 16
      %18 = vsyncadd [#allocation3], %s17
      %s20 = sshll.u32 [#allocation2], 4
      %s21 = int_to_ptr.vmem [resolvable:$true] %s20
      %23 = dma.hbm_to_vmem [thread:$0]  %s2, 16, %s21, [#allocation3]
    $region13: #{conformer_vision_forward.29} parent=1 // pred_fallthru
      _
    // Predicated region
    $region14: #{conformer_vision_forward.29} parent=1 // pred_check
      _
    $region15: #{conformer_vision_forward.29} parent=1 // pred_check_branch
      %25 = sbr.rel (0) target = $region17
    $region16: #{conformer_vision_forward.29} parent=1 // pred_region
      _
    $region17: #{conformer_vision_forward.29} parent=1 // pred_fallthru
      _
    // Predicated region
    $region18: #{conformer_vision_forward.29} parent=1 // pred_check
      _
    $region19: #{conformer_vision_forward.29} parent=1 // pred_check_branch
      %27 = sbr.rel (0) target = $region21
    $region20: #{conformer_vision_forward.29} parent=1 // pred_region
      %28 = dma.done [#allocation3], 16
    $region21: #{conformer_vision_forward.29} parent=1 // pred_fallthru
      _
    %v30 = vld [vmem:[%s0] sm:$0xff]
    %v31 = vld [vmem:[%s0 + $0x8] sm:$0xff]
    %v32 = vpack.c.bf16 %v31, %v30
    %v33 = vld [vmem:[%s1] sm:$0xf]
    %v34 = vld [vmem:[%s1 + $0x4] sm:$0xf]
    %v35 = vld [vmem:[%s1 + $0x8] sm:$0xf]
    %v36 = vld [vmem:[%s1 + $0xc] sm:$0xf]
    %v37 = vld [vmem:[%s1 + $0x10] sm:$0xf]
    %v38 = vld [vmem:[%s1 + $0x14] sm:$0xf]
    %v39 = vld [vmem:[%s1 + $0x18] sm:$0xf]
    %v40 = vld [vmem:[%s1 + $0x1c] sm:$0xf]
    %v41 = vld [vmem:[#allocation2] sm:$0x1]
    %v43 = vlaneseq
    %v44 = vshrl.u32 %v43, 7
    %v45 = vsub.s32 0, %v44
    %v46 = vrot.slane %v41, %v45
    %v56 = vunpack.c.l.b16 %v33
    %v57 = vunpack.c.l.b16 %v34
    %v58 = vunpack.c.l.b16 %v35
    %v59 = vunpack.c.l.b16 %v36
    %v60 = vunpack.c.l.b16 %v37
    %v61 = vunpack.c.l.b16 %v38
    %v62 = vunpack.c.l.b16 %v39
    %v63 = vunpack.c.l.b16 %v40
    %v64 = vpack.c.b16 %v57, %v56
    %v65 = vpack.c.b16 %v59, %v58
    %v66 = vpack.c.b16 %v61, %v60
    %v67 = vpack.c.b16 %v63, %v62
    %vm72 = vcmask 523264
    %v74 = vsel %vm72, %v32, 0
    %76 = vmatprep.subr.bf16.mxu0 0
    %77 = vmatpush1.bf16.msra.mxu0 0
    %78 = vmatprep.subr.bf16.mxu0 0
    %79 = vmatpush1.bf16.msra.mxu0 0
    %80 = vmatprep.subr.bf16.mxu0 0
    %81 = vmatpush1.bf16.msra.mxu0 0
    %82 = vmatprep.subr.bf16.mxu0 0
    %83 = vmatpush1.bf16.msra.mxu0 0
    %84 = vmatprep.subr.bf16.mxu0 0
    %85 = vmatpush1.bf16.msra.mxu0 %v67
    %86 = vmatprep.subr.bf16.mxu0 0
    %87 = vmatpush1.bf16.msra.mxu0 %v66
    %88 = vmatprep.subr.bf16.mxu0 0
    %89 = vmatpush1.bf16.msra.mxu0 %v65
    %90 = vmatprep.subr.bf16.mxu0 0
    %91 = vmatpush1.bf16.msra.mxu0 %v64
    %92 = vmatprep.subr.bf16.mxu0 0
    %93 = vmatpush2.bf16.msra.mxu0 0
    %94 = vmatprep.subr.bf16.mxu0 0
    %95 = vmatpush2.bf16.msra.mxu0 0
    %96 = vmatprep.subr.bf16.mxu0 0
    %97 = vmatpush2.bf16.msra.mxu0 0
    %98 = vmatprep.subr.bf16.mxu0 0
    %99 = vmatpush2.bf16.msra.mxu0 0
    %100 = vmatprep.subr.bf16.mxu0 0
    %101 = vmatpush2.bf16.msra.mxu0 0
    %102 = vmatprep.subr.bf16.mxu0 0
    %103 = vmatpush2.bf16.msra.mxu0 0
    %104 = vmatprep.subr.bf16.mxu0 0
    %105 = vmatpush2.bf16.msra.mxu0 0
    %106 = vmatprep.subr.bf16.mxu0 0
    %107 = vmatpush2.bf16.msra.mxu0 0
    %108 = vmatprep.mubr.bf16.mxu0 0
    %109 = vmatmul.mubr.bf16.gmra.mxu0 %v74
    %v110 = vpop.f32.mrf.mxu0
    %v111 = vadd.f32 %v46, %v110
    %v112 = vpop.f32.mrf.mxu0
    %v113 = vpop.f32.mrf.mxu0
    %v114 = vadd.f32 %v46, %v113
    %v115 = vpop.f32.mrf.mxu0
    %116 = vdwg.mxu0
    %v117 = vld [vmem:[%s3] sm:$0xff]
    %v118 = vld [vmem:[%s3 + $0x8] sm:$0xff]
    %v119 = vadd.f32 %v111, %v117
    %v120 = vadd.f32 %v114, %v118
    %121 = vst.msk [vmem:[%s4] sm:$0xff] %vm72, %v119
    %122 = vst.msk [vmem:[%s4 + $0x8] sm:$0xff] %vm72, %v120
    // Predicated region
    $region22: #{conformer_vision_forward.29} parent=1 // pred_check
      _
    $region23: #{conformer_vision_forward.29} parent=1 // pred_check_branch
      %124 = sbr.rel (0) target = $region25
    $region24: #{conformer_vision_forward.29} parent=1 // pred_region
      _
    $region25: #{conformer_vision_forward.29} parent=1 // pred_fallthru
      _
    // Predicated region
    $region26: #{conformer_vision_forward.29} parent=1 // pred_check
      _
    $region27: #{conformer_vision_forward.29} parent=1 // pred_check_branch
      %126 = sbr.rel (0) target = $region29
    $region28: #{conformer_vision_forward.29} parent=1 // pred_region
      _
    $region29: #{conformer_vision_forward.29} parent=1 // pred_fallthru
      _
    %127 = vsyncpa [#allocation3], 1

// kernel: conformer_vision_forward.31
$region0: #{conformer_vision_forward.31}
  #allocation0 [shape = 'u32[]', space=smem, size = 0x4, offset = 0x4, fixed_abs, tag = 'smem constant byte address 0x4 - core index']
  #allocation1 [shape = 'u32[144,128]{1,0:T(1,128)}', space=vmem, size = 0x12000, scoped, tag = 'internal scratch']
  %s0 = inlined_call_operand.vmem [shape: f32[16,64], index: 0, kind: input, shape index: {}]
  %s1 = inlined_call_operand.vmem [shape: bf16[64,64], index: 1, kind: input, shape index: {}]
  %s2 = inlined_call_operand.vmem [shape: f32[1,64], index: 2, kind: input, shape index: {}]
  %s3 = inlined_call_operand.vmem [shape: f32[16,64], index: 3, kind: input, shape index: {}]
  %s4 = inlined_call_operand.vmem [shape: f32[1,64], index: 4, kind: input, shape index: {}]
  %s5 = inlined_call_operand.vmem [shape: f32[1,64], index: 5, kind: input, shape index: {}]
  %s6 = inlined_call_operand.vmem [shape: f32[16,64], index: 6, kind: output, shape index: {}]
  %s7 = sld [smem:[#allocation0]]
  $region34: #{conformer_vision_forward.31} parent=0
    _
  %s9 = ssub.s32 1, %s7
  %s10 = scalar_select 0, %s9, %s7
  // Predicated region
  $region2: #{conformer_vision_forward.31} parent=0 // pred_check
    _
  $region3: #{conformer_vision_forward.31} parent=0 // pred_check_branch
    %12 = sbr.rel (0) target = $region5
  $region4: #{conformer_vision_forward.31} parent=0 // pred_region
    _
  $region5: #{conformer_vision_forward.31} parent=0 // pred_fallthru
    _
  // Predicated region
  $region6: #{conformer_vision_forward.31} parent=0 // pred_check
    _
  $region7: #{conformer_vision_forward.31} parent=0 // pred_check_branch
    %14 = sbr.rel (0) target = $region9
  $region8: #{conformer_vision_forward.31} parent=0 // pred_region
    _
  $region9: #{conformer_vision_forward.31} parent=0 // pred_fallthru
    _
  // Predicated region
  $region10: #{conformer_vision_forward.31} parent=0 // pred_check
    _
  $region11: #{conformer_vision_forward.31} parent=0 // pred_check_branch
    %16 = sbr.rel (0) target = $region13
  $region12: #{conformer_vision_forward.31} parent=0 // pred_region
    _
  $region13: #{conformer_vision_forward.31} parent=0 // pred_fallthru
    _
  // Predicated region
  $region14: #{conformer_vision_forward.31} parent=0 // pred_check
    _
  $region15: #{conformer_vision_forward.31} parent=0 // pred_check_branch
    %18 = sbr.rel (0) target = $region17
  $region16: #{conformer_vision_forward.31} parent=0 // pred_region
    _
  $region17: #{conformer_vision_forward.31} parent=0 // pred_fallthru
    _
  // Predicated region
  $region18: #{conformer_vision_forward.31} parent=0 // pred_check
    _
  $region19: #{conformer_vision_forward.31} parent=0 // pred_check_branch
    %20 = sbr.rel (0) target = $region21
  $region20: #{conformer_vision_forward.31} parent=0 // pred_region
    _
  $region21: #{conformer_vision_forward.31} parent=0 // pred_fallthru
    _
  // Predicated region
  $region22: #{conformer_vision_forward.31} parent=0 // pred_check
    _
  $region23: #{conformer_vision_forward.31} parent=0 // pred_check_branch
    %22 = sbr.rel (0) target = $region25
  $region24: #{conformer_vision_forward.31} parent=0 // pred_region
    _
  $region25: #{conformer_vision_forward.31} parent=0 // pred_fallthru
    _
  %v24 = vld [vmem:[%s0] sm:$0xff]
  %v25 = vld [vmem:[%s0 + $0x8] sm:$0xff]
  %v26 = vpack.c.bf16 %v25, %v24
  %v27 = vld [vmem:[%s1] sm:$0xf]
  %v28 = vld [vmem:[%s1 + $0x4] sm:$0xf]
  %v29 = vld [vmem:[%s1 + $0x8] sm:$0xf]
  %v30 = vld [vmem:[%s1 + $0xc] sm:$0xf]
  %v31 = vld [vmem:[%s1 + $0x10] sm:$0xf]
  %v32 = vld [vmem:[%s1 + $0x14] sm:$0xf]
  %v33 = vld [vmem:[%s1 + $0x18] sm:$0xf]
  %v34 = vld [vmem:[%s1 + $0x1c] sm:$0xf]
  %v35 = vld [vmem:[%s2] sm:$0x1]
  %v37 = vlaneseq
  %v38 = vshrl.u32 %v37, 7
  %v39 = vsub.s32 0, %v38
  %v40 = vrot.slane %v35, %v39
  %v50 = vunpack.c.l.b16 %v27
  %v51 = vunpack.c.l.b16 %v28
  %v52 = vunpack.c.l.b16 %v29
  %v53 = vunpack.c.l.b16 %v30
  %v54 = vunpack.c.l.b16 %v31
  %v55 = vunpack.c.l.b16 %v32
  %v56 = vunpack.c.l.b16 %v33
  %v57 = vunpack.c.l.b16 %v34
  %v58 = vpack.c.b16 %v51, %v50
  %v59 = vpack.c.b16 %v53, %v52
  %v60 = vpack.c.b16 %v55, %v54
  %v61 = vpack.c.b16 %v57, %v56
  %vm66 = vcmask 523264
  %v68 = vsel %vm66, %v26, 0
  %70 = vmatprep.subr.bf16.mxu0 0
  %71 = vmatpush1.bf16.msra.mxu0 0
  %72 = vmatprep.subr.bf16.mxu0 0
  %73 = vmatpush1.bf16.msra.mxu0 0
  %74 = vmatprep.subr.bf16.mxu0 0
  %75 = vmatpush1.bf16.msra.mxu0 0
  %76 = vmatprep.subr.bf16.mxu0 0
  %77 = vmatpush1.bf16.msra.mxu0 0
  %78 = vmatprep.subr.bf16.mxu0 0
  %79 = vmatpush1.bf16.msra.mxu0 %v61
  %80 = vmatprep.subr.bf16.mxu0 0
  %81 = vmatpush1.bf16.msra.mxu0 %v60
  %82 = vmatprep.subr.bf16.mxu0 0
  %83 = vmatpush1.bf16.msra.mxu0 %v59
  %84 = vmatprep.subr.bf16.mxu0 0
  %85 = vmatpush1.bf16.msra.mxu0 %v58
  %86 = vmatprep.subr.bf16.mxu0 0
  %87 = vmatpush2.bf16.msra.mxu0 0
  %88 = vmatprep.subr.bf16.mxu0 0
  %89 = vmatpush2.bf16.msra.mxu0 0
  %90 = vmatprep.subr.bf16.mxu0 0
  %91 = vmatpush2.bf16.msra.mxu0 0
  %92 = vmatprep.subr.bf16.mxu0 0
  %93 = vmatpush2.bf16.msra.mxu0 0
  %94 = vmatprep.subr.bf16.mxu0 0
  %95 = vmatpush2.bf16.msra.mxu0 0
  %96 = vmatprep.subr.bf16.mxu0 0
  %97 = vmatpush2.bf16.msra.mxu0 0
  %98 = vmatprep.subr.bf16.mxu0 0
  %99 = vmatpush2.bf16.msra.mxu0 0
  %100 = vmatprep.subr.bf16.mxu0 0
  %101 = vmatpush2.bf16.msra.mxu0 0
  %102 = vmatprep.mubr.bf16.mxu0 0
  %103 = vmatmul.mubr.bf16.gmra.mxu0 %v68
  %v104 = vpop.f32.mrf.mxu0
  %v105 = vadd.f32 %v40, %v104
  %v106 = vpop.f32.mrf.mxu0
  %v107 = vpop.f32.mrf.mxu0
  %v108 = vadd.f32 %v40, %v107
  %v109 = vpop.f32.mrf.mxu0
  %110 = vdwg.mxu0
  %v111 = vmul.f32 %v105, 0.5
  %v112 = vmul.f32 %v108, 0.5
  %v113 = vld [vmem:[%s3] sm:$0xff]
  %v114 = vld [vmem:[%s3 + $0x8] sm:$0xff]
  %v115 = vadd.f32 %v111, %v113
  %v116 = vadd.f32 %v112, %v114
  %v117 = vsel %vm66, %v115, 0.0
  %118 = vadd.xlane.f32.xlu0 %v117
  %v119 = vpop.xlane.xlu0 %118
  %v120 = vsel %vm66, %v116, 0.0
  %121 = vadd.xlane.f32.xlu0 %v120
  %v122 = vpop.xlane.xlu0 %121
  %v123 = vrcp.pop 64.0
  %v124 = vmul.f32 %v119, %v123
  %v125 = vmul.f32 %v122, %v123
  %v126 = vsub.f32 %v115, %v124
  %v127 = vsub.f32 %v116, %v125
  %v128 = vmul.f32 %v126, %v126
  %v129 = vmul.f32 %v127, %v127
  %v130 = vsel %vm66, %v128, 0.0
  %131 = vadd.xlane.f32.xlu0 %v130
  %v132 = vpop.xlane.xlu0 %131
  %v133 = vsel %vm66, %v129, 0.0
  %134 = vadd.xlane.f32.xlu0 %v133
  %v135 = vpop.xlane.xlu0 %134
  %v136 = vmul.f32 %v132, %v123
  %v137 = vmul.f32 %v135, %v123
  %v138 = vadd.f32 %v136, 1e-05
  %v139 = vadd.f32 %v137, 1e-05
  %v140 = vrsqrt.pop %v138
  %v141 = vrsqrt.pop %v139
  %v142 = vmul.f32 %v126, %v140
  %v143 = vmul.f32 %v127, %v141
  %v144 = vld [vmem:[%s4] sm:$0x1]
  %v146 = vlaneseq
  %v147 = vshrl.u32 %v146, 7
  %v148 = vsub.s32 0, %v147
  %v149 = vrot.slane %v144, %v148
  %v151 = vmul.f32 %v142, %v149
  %v152 = vmul.f32 %v143, %v149
  %v153 = vld [vmem:[%s5] sm:$0x1]
  %v155 = vlaneseq
  %v156 = vshrl.u32 %v155, 7
  %v157 = vsub.s32 0, %v156
  %v158 = vrot.slane %v153, %v157
  %v160 = vadd.f32 %v151, %v158
  %v161 = vadd.f32 %v152, %v158
  %162 = vst.msk [vmem:[%s6] sm:$0xff] %vm66, %v160
  %163 = vst.msk [vmem:[%s6 + $0x8] sm:$0xff] %vm66, %v161
  // Predicated region
  $region26: #{conformer_vision_forward.31} parent=0 // pred_check
    _
  $region27: #{conformer_vision_forward.31} parent=0 // pred_check_branch
    %165 = sbr.rel (0) target = $region29
  $region28: #{conformer_vision_forward.31} parent=0 // pred_region
    _
  $region29: #{conformer_vision_forward.31} parent=0 // pred_fallthru
    _
  // Predicated region
  $region30: #{conformer_vision_forward.31} parent=0 // pred_check
    _
  $region31: #{conformer_vision_forward.31} parent=0 // pred_check_branch
    %167 = sbr.rel (0) target = $region33
  $region32: #{conformer_vision_forward.31} parent=0 // pred_region
    _
  $region33: #{conformer_vision_forward.31} parent=0 // pred_fallthru
    _

// kernel: conformer_vision_forward.32
$region0: #{conformer_vision_forward.32}
  #allocation0 [shape = 'u32[]', space=smem, size = 0x4, offset = 0x4, fixed_abs, tag = 'smem constant byte address 0x4 - core index']
  #allocation1 [shape = 'u32[144,128]{1,0:T(1,128)}', space=vmem, size = 0x12000, scoped, tag = 'internal scratch']
  %s0 = inlined_call_operand.vmem [shape: f32[16,64], index: 0, kind: input, shape index: {}]
  %s1 = inlined_call_operand.hbm [shape: f32[1,64], index: 1, kind: input, shape index: {}]
  %s2 = inlined_call_operand.hbm [shape: f32[1,64], index: 2, kind: input, shape index: {}]
  %s3 = inlined_call_operand.vmem [shape: bf16[64,64], index: 3, kind: input, shape index: {}]
  %s4 = inlined_call_operand.hbm [shape: f32[1,64], index: 4, kind: input, shape index: {}]
  %s5 = inlined_call_operand.vmem [shape: f32[16,64], index: 5, kind: output, shape index: {}]
  %s6 = sld [smem:[#allocation0]]
  $region42: #{conformer_vision_forward.32} parent=0
    _
  %s8 = ssub.s32 1, %s6
  %s9 = scalar_select 0, %s8, %s6
  $region1: #{conformer_vision_forward.32} parent=0
    #allocation2 [shape = 'u8[512]{0}', space=vmem, size = 0x400, scoped, tag = 'input window, operand 1, single buffered']
    #allocation3 [shape = 's32[1]{0}', space=sflag, size = 0x4, scoped, tag = 'scoped memory for conformer_vision_forward.32']
    #allocation4 [shape = 'u8[512]{0}', space=vmem, size = 0x400, scoped, tag = 'input window, operand 2, single buffered']
    #allocation5 [shape = 's32[1]{0}', space=sflag, size = 0x4, scoped, tag = 'scoped memory for conformer_vision_forward.32']
    #allocation6 [shape = 'u8[512]{0}', space=vmem, size = 0x400, scoped, tag = 'input window, operand 4, single buffered']
    %10 = vsyncpa [#allocation3], 0
    %11 = vsyncpa [#allocation5], 0
    // Predicated region
    $region2: #{conformer_vision_forward.32} parent=1 // pred_check
      _
    $region3: #{conformer_vision_forward.32} parent=1 // pred_check_branch
      %13 = sbr.rel (0) target = $region5
    $region4: #{conformer_vision_forward.32} parent=1 // pred_region
      _
    $region5: #{conformer_vision_forward.32} parent=1 // pred_fallthru
      _
    // Predicated region
    $region6: #{conformer_vision_forward.32} parent=1 // pred_check
      _
    $region7: #{conformer_vision_forward.32} parent=1 // pred_check_branch
      %15 = sbr.rel (0) target = $region9
    $region8: #{conformer_vision_forward.32} parent=1 // pred_region
      %s17 = ssub.s32 16, 16
      %18 = vsyncadd [#allocation3], %s17
      %s20 = sshll.u32 [#allocation2], 4
      %s21 = int_to_ptr.vmem [resolvable:$true] %s20
      %23 = dma.hbm_to_vmem [thread:$0]  %s1, 16, %s21, [#allocation3]
    $region9: #{conformer_vision_forward.32} parent=1 // pred_fallthru
      _
    // Predicated region
    $region10: #{conformer_vision_forward.32} parent=1 // pred_check
      _
    $region11: #{conformer_vision_forward.32} parent=1 // pred_check_branch
      %25 = sbr.rel (0) target = $region13
    $region12: #{conformer_vision_forward.32} parent=1 // pred_region
      %s27 = ssub.s32 16, 16
      %28 = vsyncadd [#allocation5], %s27
      %s30 = sshll.u32 [#allocation4], 4
      %s31 = int_to_ptr.vmem [resolvable:$true] %s30
      %33 = dma.hbm_to_vmem [thread:$0]  %s2, 16, %s31, [#allocation5]
    $region13: #{conformer_vision_forward.32} parent=1 // pred_fallthru
      _
    // Predicated region
    $region14: #{conformer_vision_forward.32} parent=1 // pred_check
      _
    $region15: #{conformer_vision_forward.32} parent=1 // pred_check_branch
      %35 = sbr.rel (0) target = $region17
    $region16: #{conformer_vision_forward.32} parent=1 // pred_region
      _
    $region17: #{conformer_vision_forward.32} parent=1 // pred_fallthru
      _
    // Predicated region
    $region18: #{conformer_vision_forward.32} parent=1 // pred_check
      _
    $region19: #{conformer_vision_forward.32} parent=1 // pred_check_branch
      %37 = sbr.rel (0) target = $region21
    $region20: #{conformer_vision_forward.32} parent=1 // pred_region
      %s39 = ssub.s32 16, 16
      %40 = vsyncadd [#allocation5], %s39
      %s42 = sshll.u32 [#allocation6], 4
      %s43 = int_to_ptr.vmem [resolvable:$true] %s42
      %45 = dma.hbm_to_vmem [thread:$0]  %s4, 16, %s43, [#allocation5]
    $region21: #{conformer_vision_forward.32} parent=1 // pred_fallthru
      _
    // Predicated region
    $region22: #{conformer_vision_forward.32} parent=1 // pred_check
      _
    $region23: #{conformer_vision_forward.32} parent=1 // pred_check_branch
      %47 = sbr.rel (0) target = $region25
    $region24: #{conformer_vision_forward.32} parent=1 // pred_region
      %48 = dma.done [#allocation3], 16
    $region25: #{conformer_vision_forward.32} parent=1 // pred_fallthru
      _
    // Predicated region
    $region26: #{conformer_vision_forward.32} parent=1 // pred_check
      _
    $region27: #{conformer_vision_forward.32} parent=1 // pred_check_branch
      %50 = sbr.rel (0) target = $region29
    $region28: #{conformer_vision_forward.32} parent=1 // pred_region
      %51 = dma.done [#allocation5], 16
    $region29: #{conformer_vision_forward.32} parent=1 // pred_fallthru
      _
    // Predicated region
    $region30: #{conformer_vision_forward.32} parent=1 // pred_check
      _
    $region31: #{conformer_vision_forward.32} parent=1 // pred_check_branch
      %53 = sbr.rel (0) target = $region33
    $region32: #{conformer_vision_forward.32} parent=1 // pred_region
      %54 = dma.done [#allocation5], 16
    $region33: #{conformer_vision_forward.32} parent=1 // pred_fallthru
      _
    %v56 = vld [vmem:[%s0] sm:$0xff]
    %v57 = vld [vmem:[%s0 + $0x8] sm:$0xff]
    %vm58 = vcmask 523264
    %v59 = vsel %vm58, %v56, 0.0
    %60 = vadd.xlane.f32.xlu0 %v59
    %v61 = vpop.xlane.xlu0 %60
    %v62 = vsel %vm58, %v57, 0.0
    %63 = vadd.xlane.f32.xlu0 %v62
    %v64 = vpop.xlane.xlu0 %63
    %v65 = vrcp.pop 64.0
    %v66 = vmul.f32 %v61, %v65
    %v67 = vmul.f32 %v64, %v65
    %v68 = vsub.f32 %v56, %v66
    %v69 = vsub.f32 %v57, %v67
    %v70 = vmul.f32 %v68, %v68
    %v71 = vmul.f32 %v69, %v69
    %v72 = vsel %vm58, %v70, 0.0
    %73 = vadd.xlane.f32.xlu0 %v72
    %v74 = vpop.xlane.xlu0 %73
    %v75 = vsel %vm58, %v71, 0.0
    %76 = vadd.xlane.f32.xlu0 %v75
    %v77 = vpop.xlane.xlu0 %76
    %v78 = vmul.f32 %v74, %v65
    %v79 = vmul.f32 %v77, %v65
    %v80 = vadd.f32 %v78, 1e-05
    %v81 = vadd.f32 %v79, 1e-05
    %v82 = vrsqrt.pop %v80
    %v83 = vrsqrt.pop %v81
    %v84 = vmul.f32 %v68, %v82
    %v85 = vmul.f32 %v69, %v83
    %v86 = vld [vmem:[#allocation2] sm:$0x1]
    %v88 = vlaneseq
    %v89 = vshrl.u32 %v88, 7
    %v90 = vsub.s32 0, %v89
    %v91 = vrot.slane %v86, %v90
    %v93 = vmul.f32 %v84, %v91
    %v94 = vmul.f32 %v85, %v91
    %v95 = vld [vmem:[#allocation4] sm:$0x1]
    %v97 = vlaneseq
    %v98 = vshrl.u32 %v97, 7
    %v99 = vsub.s32 0, %v98
    %v100 = vrot.slane %v95, %v99
    %v102 = vadd.f32 %v93, %v100
    %v103 = vadd.f32 %v94, %v100
    %v104 = vpack.c.bf16 %v103, %v102
    %v105 = vld [vmem:[%s3] sm:$0xf]
    %v106 = vld [vmem:[%s3 + $0x4] sm:$0xf]
    %v107 = vld [vmem:[%s3 + $0x8] sm:$0xf]
    %v108 = vld [vmem:[%s3 + $0xc] sm:$0xf]
    %v109 = vld [vmem:[%s3 + $0x10] sm:$0xf]
    %v110 = vld [vmem:[%s3 + $0x14] sm:$0xf]
    %v111 = vld [vmem:[%s3 + $0x18] sm:$0xf]
    %v112 = vld [vmem:[%s3 + $0x1c] sm:$0xf]
    %v113 = vld [vmem:[#allocation6] sm:$0x1]
    %v115 = vlaneseq
    %v116 = vshrl.u32 %v115, 7
    %v117 = vsub.s32 0, %v116
    %v118 = vrot.slane %v113, %v117
    %v128 = vunpack.c.l.b16 %v105
    %v129 = vunpack.c.l.b16 %v106
    %v130 = vunpack.c.l.b16 %v107
    %v131 = vunpack.c.l.b16 %v108
    %v132 = vunpack.c.l.b16 %v109
    %v133 = vunpack.c.l.b16 %v110
    %v134 = vunpack.c.l.b16 %v111
    %v135 = vunpack.c.l.b16 %v112
    %v136 = vpack.c.b16 %v129, %v128
    %v137 = vpack.c.b16 %v131, %v130
    %v138 = vpack.c.b16 %v133, %v132
    %v139 = vpack.c.b16 %v135, %v134
    %v145 = vsel %vm58, %v104, 0
    %147 = vmatprep.subr.bf16.mxu0 0
    %148 = vmatpush1.bf16.msra.mxu0 0
    %149 = vmatprep.subr.bf16.mxu0 0
    %150 = vmatpush1.bf16.msra.mxu0 0
    %151 = vmatprep.subr.bf16.mxu0 0
    %152 = vmatpush1.bf16.msra.mxu0 0
    %153 = vmatprep.subr.bf16.mxu0 0
    %154 = vmatpush1.bf16.msra.mxu0 0
    %155 = vmatprep.subr.bf16.mxu0 0
    %156 = vmatpush1.bf16.msra.mxu0 %v139
    %157 = vmatprep.subr.bf16.mxu0 0
    %158 = vmatpush1.bf16.msra.mxu0 %v138
    %159 = vmatprep.subr.bf16.mxu0 0
    %160 = vmatpush1.bf16.msra.mxu0 %v137
    %161 = vmatprep.subr.bf16.mxu0 0
    %162 = vmatpush1.bf16.msra.mxu0 %v136
    %163 = vmatprep.subr.bf16.mxu0 0
    %164 = vmatpush2.bf16.msra.mxu0 0
    %165 = vmatprep.subr.bf16.mxu0 0
    %166 = vmatpush2.bf16.msra.mxu0 0
    %167 = vmatprep.subr.bf16.mxu0 0
    %168 = vmatpush2.bf16.msra.mxu0 0
    %169 = vmatprep.subr.bf16.mxu0 0
    %170 = vmatpush2.bf16.msra.mxu0 0
    %171 = vmatprep.subr.bf16.mxu0 0
    %172 = vmatpush2.bf16.msra.mxu0 0
    %173 = vmatprep.subr.bf16.mxu0 0
    %174 = vmatpush2.bf16.msra.mxu0 0
    %175 = vmatprep.subr.bf16.mxu0 0
    %176 = vmatpush2.bf16.msra.mxu0 0
    %177 = vmatprep.subr.bf16.mxu0 0
    %178 = vmatpush2.bf16.msra.mxu0 0
    %179 = vmatprep.mubr.bf16.mxu0 0
    %180 = vmatmul.mubr.bf16.gmra.mxu0 %v145
    %v181 = vpop.f32.mrf.mxu0
    %v182 = vadd.f32 %v118, %v181
    %v183 = vpop.f32.mrf.mxu0
    %v184 = vpop.f32.mrf.mxu0
    %v185 = vadd.f32 %v118, %v184
    %v186 = vpop.f32.mrf.mxu0
    %187 = vdwg.mxu0
    %v188 = vxor.u32 %v182, 2147483648
    %v189 = vxor.u32 %v185, 2147483648
    %v190 = vmul.f32 %v188, 1.442695
    %v191 = vpow.pop %v190
    %v192 = vmul.f32 %v189, 1.442695
    %v193 = vpow.pop %v192
    %v194 = vadd.f32 %v191, 1.0
    %v195 = vadd.f32 %v193, 1.0
    %v196 = vrcp.pop %v194
    %v197 = vmul.f32 1.0, %v196
    %v198 = vrcp.pop %v195
    %v199 = vmul.f32 1.0, %v198
    %v200 = vmul.f32 %v182, %v197
    %v201 = vmul.f32 %v185, %v199
    %202 = vst.msk [vmem:[%s5] sm:$0xff] %vm58, %v200
    %203 = vst.msk [vmem:[%s5 + $0x8] sm:$0xff] %vm58, %v201
    // Predicated region
    $region34: #{conformer_vision_forward.32} parent=1 // pred_check
      _
    $region35: #{conformer_vision_forward.32} parent=1 // pred_check_branch
      %205 = sbr.rel (0) target = $region37
    $region36: #{conformer_vision_forward.32} parent=1 // pred_region
      _
    $region37: #{conformer_vision_forward.32} parent=1 // pred_fallthru
      _
    // Predicated region
    $region38: #{conformer_vision_forward.32} parent=1 // pred_check
      _
    $region39: #{conformer_vision_forward.32} parent=1 // pred_check_branch
      %207 = sbr.rel (0) target = $region41
    $region40: #{conformer_vision_forward.32} parent=1 // pred_region
      _
    $region41: #{conformer_vision_forward.32} parent=1 // pred_fallthru
      _
    %208 = vsyncpa [#allocation3], 1
    %209 = vsyncpa [#allocation5], 1

// kernel: conformer_vision_forward.40
$region0: #{conformer_vision_forward.40}
  #allocation0 [shape = 'u32[]', space=smem, size = 0x4, offset = 0x4, fixed_abs, tag = 'smem constant byte address 0x4 - core index']
  #allocation1 [shape = 'u32[144,128]{1,0:T(1,128)}', space=vmem, size = 0x12000, scoped, tag = 'internal scratch']
  %s0 = inlined_call_operand.vmem [shape: f32[16,64], index: 0, kind: input, shape index: {}]
  %s1 = inlined_call_operand.vmem [shape: bf16[64,64], index: 1, kind: input, shape index: {}]
  %s2 = inlined_call_operand.hbm [shape: f32[1,64], index: 2, kind: input, shape index: {}]
  %s3 = inlined_call_operand.vmem [shape: f32[16,64], index: 3, kind: input, shape index: {}]
  %s4 = inlined_call_operand.hbm [shape: f32[1,64], index: 4, kind: input, shape index: {}]
  %s5 = inlined_call_operand.hbm [shape: f32[1,64], index: 5, kind: input, shape index: {}]
  %s6 = inlined_call_operand.vmem [shape: f32[16,64], index: 6, kind: output, shape index: {}]
  %s7 = sld [smem:[#allocation0]]
  $region46: #{conformer_vision_forward.40} parent=0
    _
  %s9 = ssub.s32 1, %s7
  %s10 = scalar_select 0, %s9, %s7
  $region1: #{conformer_vision_forward.40} parent=0
    #allocation2 [shape = 'u8[512]{0}', space=vmem, size = 0x400, scoped, tag = 'input window, operand 2, single buffered']
    #allocation3 [shape = 's32[1]{0}', space=sflag, size = 0x4, scoped, tag = 'scoped memory for conformer_vision_forward.40']
    #allocation4 [shape = 'u8[512]{0}', space=vmem, size = 0x400, scoped, tag = 'input window, operand 4, single buffered']
    #allocation5 [shape = 's32[1]{0}', space=sflag, size = 0x4, scoped, tag = 'scoped memory for conformer_vision_forward.40']
    #allocation6 [shape = 'u8[512]{0}', space=vmem, size = 0x400, scoped, tag = 'input window, operand 5, single buffered']
    %11 = vsyncpa [#allocation3], 0
    %12 = vsyncpa [#allocation5], 0
    // Predicated region
    $region2: #{conformer_vision_forward.40} parent=1 // pred_check
      _
    $region3: #{conformer_vision_forward.40} parent=1 // pred_check_branch
      %14 = sbr.rel (0) target = $region5
    $region4: #{conformer_vision_forward.40} parent=1 // pred_region
      _
    $region5: #{conformer_vision_forward.40} parent=1 // pred_fallthru
      _
    // Predicated region
    $region6: #{conformer_vision_forward.40} parent=1 // pred_check
      _
    $region7: #{conformer_vision_forward.40} parent=1 // pred_check_branch
      %16 = sbr.rel (0) target = $region9
    $region8: #{conformer_vision_forward.40} parent=1 // pred_region
      _
    $region9: #{conformer_vision_forward.40} parent=1 // pred_fallthru
      _
    // Predicated region
    $region10: #{conformer_vision_forward.40} parent=1 // pred_check
      _
    $region11: #{conformer_vision_forward.40} parent=1 // pred_check_branch
      %18 = sbr.rel (0) target = $region13
    $region12: #{conformer_vision_forward.40} parent=1 // pred_region
      %s20 = ssub.s32 16, 16
      %21 = vsyncadd [#allocation3], %s20
      %s23 = sshll.u32 [#allocation2], 4
      %s24 = int_to_ptr.vmem [resolvable:$true] %s23
      %26 = dma.hbm_to_vmem [thread:$0]  %s2, 16, %s24, [#allocation3]
    $region13: #{conformer_vision_forward.40} parent=1 // pred_fallthru
      _
    // Predicated region
    $region14: #{conformer_vision_forward.40} parent=1 // pred_check
      _
    $region15: #{conformer_vision_forward.40} parent=1 // pred_check_branch
      %28 = sbr.rel (0) target = $region17
    $region16: #{conformer_vision_forward.40} parent=1 // pred_region
      _
    $region17: #{conformer_vision_forward.40} parent=1 // pred_fallthru
      _
    // Predicated region
    $region18: #{conformer_vision_forward.40} parent=1 // pred_check
      _
    $region19: #{conformer_vision_forward.40} parent=1 // pred_check_branch
      %30 = sbr.rel (0) target = $region21
    $region20: #{conformer_vision_forward.40} parent=1 // pred_region
      %s32 = ssub.s32 16, 16
      %33 = vsyncadd [#allocation5], %s32
      %s35 = sshll.u32 [#allocation4], 4
      %s36 = int_to_ptr.vmem [resolvable:$true] %s35
      %38 = dma.hbm_to_vmem [thread:$0]  %s4, 16, %s36, [#allocation5]
    $region21: #{conformer_vision_forward.40} parent=1 // pred_fallthru
      _
    // Predicated region
    $region22: #{conformer_vision_forward.40} parent=1 // pred_check
      _
    $region23: #{conformer_vision_forward.40} parent=1 // pred_check_branch
      %40 = sbr.rel (0) target = $region25
    $region24: #{conformer_vision_forward.40} parent=1 // pred_region
      %s42 = ssub.s32 16, 16
      %43 = vsyncadd [#allocation5], %s42
      %s45 = sshll.u32 [#allocation6], 4
      %s46 = int_to_ptr.vmem [resolvable:$true] %s45
      %48 = dma.hbm_to_vmem [thread:$0]  %s5, 16, %s46, [#allocation5]
    $region25: #{conformer_vision_forward.40} parent=1 // pred_fallthru
      _
    // Predicated region
    $region26: #{conformer_vision_forward.40} parent=1 // pred_check
      _
    $region27: #{conformer_vision_forward.40} parent=1 // pred_check_branch
      %50 = sbr.rel (0) target = $region29
    $region28: #{conformer_vision_forward.40} parent=1 // pred_region
      %51 = dma.done [#allocation3], 16
    $region29: #{conformer_vision_forward.40} parent=1 // pred_fallthru
      _
    // Predicated region
    $region30: #{conformer_vision_forward.40} parent=1 // pred_check
      _
    $region31: #{conformer_vision_forward.40} parent=1 // pred_check_branch
      %53 = sbr.rel (0) target = $region33
    $region32: #{conformer_vision_forward.40} parent=1 // pred_region
      %54 = dma.done [#allocation5], 16
    $region33: #{conformer_vision_forward.40} parent=1 // pred_fallthru
      _
    // Predicated region
    $region34: #{conformer_vision_forward.40} parent=1 // pred_check
      _
    $region35: #{conformer_vision_forward.40} parent=1 // pred_check_branch
      %56 = sbr.rel (0) target = $region37
    $region36: #{conformer_vision_forward.40} parent=1 // pred_region
      %57 = dma.done [#allocation5], 16
    $region37: #{conformer_vision_forward.40} parent=1 // pred_fallthru
      _
    %v59 = vld [vmem:[%s0] sm:$0xff]
    %v60 = vld [vmem:[%s0 + $0x8] sm:$0xff]
    %v61 = vpack.c.bf16 %v60, %v59
    %v62 = vld [vmem:[%s1] sm:$0xf]
    %v63 = vld [vmem:[%s1 + $0x4] sm:$0xf]
    %v64 = vld [vmem:[%s1 + $0x8] sm:$0xf]
    %v65 = vld [vmem:[%s1 + $0xc] sm:$0xf]
    %v66 = vld [vmem:[%s1 + $0x10] sm:$0xf]
    %v67 = vld [vmem:[%s1 + $0x14] sm:$0xf]
    %v68 = vld [vmem:[%s1 + $0x18] sm:$0xf]
    %v69 = vld [vmem:[%s1 + $0x1c] sm:$0xf]
    %v70 = vld [vmem:[#allocation2] sm:$0x1]
    %v72 = vlaneseq
    %v73 = vshrl.u32 %v72, 7
    %v74 = vsub.s32 0, %v73
    %v75 = vrot.slane %v70, %v74
    %v85 = vunpack.c.l.b16 %v62
    %v86 = vunpack.c.l.b16 %v63
    %v87 = vunpack.c.l.b16 %v64
    %v88 = vunpack.c.l.b16 %v65
    %v89 = vunpack.c.l.b16 %v66
    %v90 = vunpack.c.l.b16 %v67
    %v91 = vunpack.c.l.b16 %v68
    %v92 = vunpack.c.l.b16 %v69
    %v93 = vpack.c.b16 %v86, %v85
    %v94 = vpack.c.b16 %v88, %v87
    %v95 = vpack.c.b16 %v90, %v89
    %v96 = vpack.c.b16 %v92, %v91
    %vm101 = vcmask 523264
    %v103 = vsel %vm101, %v61, 0
    %105 = vmatprep.subr.bf16.mxu0 0
    %106 = vmatpush1.bf16.msra.mxu0 0
    %107 = vmatprep.subr.bf16.mxu0 0
    %108 = vmatpush1.bf16.msra.mxu0 0
    %109 = vmatprep.subr.bf16.mxu0 0
    %110 = vmatpush1.bf16.msra.mxu0 0
    %111 = vmatprep.subr.bf16.mxu0 0
    %112 = vmatpush1.bf16.msra.mxu0 0
    %113 = vmatprep.subr.bf16.mxu0 0
    %114 = vmatpush1.bf16.msra.mxu0 %v96
    %115 = vmatprep.subr.bf16.mxu0 0
    %116 = vmatpush1.bf16.msra.mxu0 %v95
    %117 = vmatprep.subr.bf16.mxu0 0
    %118 = vmatpush1.bf16.msra.mxu0 %v94
    %119 = vmatprep.subr.bf16.mxu0 0
    %120 = vmatpush1.bf16.msra.mxu0 %v93
    %121 = vmatprep.subr.bf16.mxu0 0
    %122 = vmatpush2.bf16.msra.mxu0 0
    %123 = vmatprep.subr.bf16.mxu0 0
    %124 = vmatpush2.bf16.msra.mxu0 0
    %125 = vmatprep.subr.bf16.mxu0 0
    %126 = vmatpush2.bf16.msra.mxu0 0
    %127 = vmatprep.subr.bf16.mxu0 0
    %128 = vmatpush2.bf16.msra.mxu0 0
    %129 = vmatprep.subr.bf16.mxu0 0
    %130 = vmatpush2.bf16.msra.mxu0 0
    %131 = vmatprep.subr.bf16.mxu0 0
    %132 = vmatpush2.bf16.msra.mxu0 0
    %133 = vmatprep.subr.bf16.mxu0 0
    %134 = vmatpush2.bf16.msra.mxu0 0
    %135 = vmatprep.subr.bf16.mxu0 0
    %136 = vmatpush2.bf16.msra.mxu0 0
    %137 = vmatprep.mubr.bf16.mxu0 0
    %138 = vmatmul.mubr.bf16.gmra.mxu0 %v103
    %v139 = vpop.f32.mrf.mxu0
    %v140 = vadd.f32 %v75, %v139
    %v141 = vpop.f32.mrf.mxu0
    %v142 = vpop.f32.mrf.mxu0
    %v143 = vadd.f32 %v75, %v142
    %v144 = vpop.f32.mrf.mxu0
    %145 = vdwg.mxu0
    %v146 = vmul.f32 %v140, 0.5
    %v147 = vmul.f32 %v143, 0.5
    %v148 = vld [vmem:[%s3] sm:$0xff]
    %v149 = vld [vmem:[%s3 + $0x8] sm:$0xff]
    %v150 = vadd.f32 %v146, %v148
    %v151 = vadd.f32 %v147, %v149
    %v152 = vsel %vm101, %v150, 0.0
    %153 = vadd.xlane.f32.xlu0 %v152
    %v154 = vpop.xlane.xlu0 %153
    %v155 = vsel %vm101, %v151, 0.0
    %156 = vadd.xlane.f32.xlu0 %v155
    %v157 = vpop.xlane.xlu0 %156
    %v158 = vrcp.pop 64.0
    %v159 = vmul.f32 %v154, %v158
    %v160 = vmul.f32 %v157, %v158
    %v161 = vsub.f32 %v150, %v159
    %v162 = vsub.f32 %v151, %v160
    %v163 = vmul.f32 %v161, %v161
    %v164 = vmul.f32 %v162, %v162
    %v165 = vsel %vm101, %v163, 0.0
    %166 = vadd.xlane.f32.xlu0 %v165
    %v167 = vpop.xlane.xlu0 %166
    %v168 = vsel %vm101, %v164, 0.0
    %169 = vadd.xlane.f32.xlu0 %v168
    %v170 = vpop.xlane.xlu0 %169
    %v171 = vmul.f32 %v167, %v158
    %v172 = vmul.f32 %v170, %v158
    %v173 = vadd.f32 %v171, 1e-05
    %v174 = vadd.f32 %v172, 1e-05
    %v175 = vrsqrt.pop %v173
    %v176 = vrsqrt.pop %v174
    %v177 = vmul.f32 %v161, %v175
    %v178 = vmul.f32 %v162, %v176
    %v179 = vld [vmem:[#allocation4] sm:$0x1]
    %v181 = vlaneseq
    %v182 = vshrl.u32 %v181, 7
    %v183 = vsub.s32 0, %v182
    %v184 = vrot.slane %v179, %v183
    %v186 = vmul.f32 %v177, %v184
    %v187 = vmul.f32 %v178, %v184
    %v188 = vld [vmem:[#allocation6] sm:$0x1]
    %v190 = vlaneseq
    %v191 = vshrl.u32 %v190, 7
    %v192 = vsub.s32 0, %v191
    %v193 = vrot.slane %v188, %v192
    %v195 = vadd.f32 %v186, %v193
    %v196 = vadd.f32 %v187, %v193
    %197 = vst.msk [vmem:[%s6] sm:$0xff] %vm101, %v195
    %198 = vst.msk [vmem:[%s6 + $0x8] sm:$0xff] %vm101, %v196
    // Predicated region
    $region38: #{conformer_vision_forward.40} parent=1 // pred_check
      _
    $region39: #{conformer_vision_forward.40} parent=1 // pred_check_branch
      %200 = sbr.rel (0) target = $region41
    $region40: #{conformer_vision_forward.40} parent=1 // pred_region
      _
    $region41: #{conformer_vision_forward.40} parent=1 // pred_fallthru
      _
    // Predicated region
    $region42: #{conformer_vision_forward.40} parent=1 // pred_check
      _
    $region43: #{conformer_vision_forward.40} parent=1 // pred_check_branch
      %202 = sbr.rel (0) target = $region45
    $region44: #{conformer_vision_forward.40} parent=1 // pred_region
      _
    $region45: #{conformer_vision_forward.40} parent=1 // pred_fallthru
      _
    %203 = vsyncpa [#allocation3], 1
    %204 = vsyncpa [#allocation5], 1

// kernel: conformer_vision_forward.37
$region0: #{conformer_vision_forward.37}
  #allocation0 [shape = 'u32[]', space=smem, size = 0x4, offset = 0x4, fixed_abs, tag = 'smem constant byte address 0x4 - core index']
  #allocation1 [shape = 'u32[144,128]{1,0:T(1,128)}', space=vmem, size = 0x12000, scoped, tag = 'internal scratch']
  %s0 = inlined_call_operand.vmem [shape: f32[2,14,64], index: 0, kind: input, shape index: {}]
  %s1 = inlined_call_operand.vmem [shape: f32[7,1,64], index: 1, kind: input, shape index: {}]
  %s2 = inlined_call_operand.hbm [shape: f32[1,64], index: 2, kind: input, shape index: {}]
  %s3 = inlined_call_operand.vmem [shape: f32[2,8,64], index: 3, kind: output, shape index: {}]
  %s4 = sld [smem:[#allocation0]]
  $region26: #{conformer_vision_forward.37} parent=0
    _
  %s6 = ssub.s32 1, %s4
  %s7 = scalar_select 0, %s6, %s4
  $region1: #{conformer_vision_forward.37} parent=0
    #allocation2 [shape = 'u8[512]{0}', space=vmem, size = 0x400, scoped, tag = 'input window, operand 2, single buffered']
    #allocation3 [shape = 's32[1]{0}', space=sflag, size = 0x4, scoped, tag = 'scoped memory for conformer_vision_forward.37']
    %8 = vsyncpa [#allocation3], 0
    // Predicated region
    $region2: #{conformer_vision_forward.37} parent=1 // pred_check
      _
    $region3: #{conformer_vision_forward.37} parent=1 // pred_check_branch
      %10 = sbr.rel (0) target = $region5
    $region4: #{conformer_vision_forward.37} parent=1 // pred_region
      _
    $region5: #{conformer_vision_forward.37} parent=1 // pred_fallthru
      _
    // Predicated region
    $region6: #{conformer_vision_forward.37} parent=1 // pred_check
      _
    $region7: #{conformer_vision_forward.37} parent=1 // pred_check_branch
      %12 = sbr.rel (0) target = $region9
    $region8: #{conformer_vision_forward.37} parent=1 // pred_region
      _
    $region9: #{conformer_vision_forward.37} parent=1 // pred_fallthru
      _
    // Predicated region
    $region10: #{conformer_vision_forward.37} parent=1 // pred_check
      _
    $region11: #{conformer_vision_forward.37} parent=1 // pred_check_branch
      %14 = sbr.rel (0) target = $region13
    $region12: #{conformer_vision_forward.37} parent=1 // pred_region
      %s16 = ssub.s32 16, 16
      %17 = vsyncadd [#allocation3], %s16
      %s19 = sshll.u32 [#allocation2], 4
      %s20 = int_to_ptr.vmem [resolvable:$true] %s19
      %22 = dma.hbm_to_vmem [thread:$0]  %s2, 16, %s20, [#allocation3]
    $region13: #{conformer_vision_forward.37} parent=1 // pred_fallthru
      _
    // Predicated region
    $region14: #{conformer_vision_forward.37} parent=1 // pred_check
      _
    $region15: #{conformer_vision_forward.37} parent=1 // pred_check_branch
      %24 = sbr.rel (0) target = $region17
    $region16: #{conformer_vision_forward.37} parent=1 // pred_region
      %25 = dma.done [#allocation3], 16
    $region17: #{conformer_vision_forward.37} parent=1 // pred_fallthru
      _
    %v26 = vld [vmem:[%s0] sm:$0xff]
    %v27 = vld [vmem:[%s0 + $0x8] sm:$0x3f]
    %v28 = vld [vmem:[%s0 + $0x10] sm:$0xff]
    %v29 = vld [vmem:[%s0 + $0x18] sm:$0x3f]
    %v30 = vld [vmem:[%s1] sm:$0x1]
    %v32 = vlaneseq
    %v33 = vshrl.u32 %v32, 7
    %v34 = vsub.s32 0, %v33
    %v35 = vrot.slane %v30, %v34
    %v37 = vmul.f32 %v26, %v35
    %v38 = vmul.f32 %v28, %v35
    %s39 = scalar_lea.vmem %s1, 1
    %v40 = vld [vmem:[%s39] sm:$0x1]
    %v42 = vlaneseq
    %v43 = vshrl.u32 %v42, 7
    %v44 = vsub.s32 0, %v43
    %v45 = vrot.slane %v40, %v44
    %v47 = vmul.f32 %v26, %v45
    %v48 = vmul.f32 %v27, %v45
    %v49 = vmul.f32 %v28, %v45
    %v50 = vmul.f32 %v29, %v45
    %vm55 = vcmask 1046528
    %v56 = vrot.slane %v47, 1
    %v57 = vrot.slane %v48, 1
    %v58 = vsel %vm55, %v56, %v57
    %v59 = vrot.slane %v49, 1
    %v60 = vrot.slane %v50, 1
    %v61 = vsel %vm55, %v59, %v60
    %v64 = vadd.f32 %v37, %v58
    %v65 = vadd.f32 %v38, %v61
    %s66 = scalar_lea.vmem %s1, 2
    %v67 = vld [vmem:[%s66] sm:$0x1]
    %v69 = vlaneseq
    %v70 = vshrl.u32 %v69, 7
    %v71 = vsub.s32 0, %v70
    %v72 = vrot.slane %v67, %v71
    %v74 = vmul.f32 %v26, %v72
    %v75 = vmul.f32 %v27, %v72
    %v76 = vmul.f32 %v28, %v72
    %v77 = vmul.f32 %v29, %v72
    %vm82 = vcmask 1045504
    %v83 = vrot.slane %v74, 2
    %v84 = vrot.slane %v75, 2
    %v85 = vsel %vm82, %v83, %v84
    %v86 = vrot.slane %v76, 2
    %v87 = vrot.slane %v77, 2
    %v88 = vsel %vm82, %v86, %v87
    %v91 = vadd.f32 %v64, %v85
    %v92 = vadd.f32 %v65, %v88
    %s93 = scalar_lea.vmem %s1, 3
    %v94 = vld [vmem:[%s93] sm:$0x1]
    %v96 = vlaneseq
    %v97 = vshrl.u32 %v96, 7
    %v98 = vsub.s32 0, %v97
    %v99 = vrot.slane %v94, %v98
    %v101 = vmul.f32 %v26, %v99
    %v102 = vmul.f32 %v27, %v99
    %v103 = vmul.f32 %v28, %v99
    %v104 = vmul.f32 %v29, %v99
    %vm109 = vcmask 1044480
    %v110 = vrot.slane %v101, 3
    %v111 = vrot.slane %v102, 3
    %v112 = vsel %vm109, %v110, %v111
    %v113 = vrot.slane %v103, 3
    %v114 = vrot.slane %v104, 3
    %v115 = vsel %vm109, %v113, %v114
    %v118 = vadd.f32 %v91, %v112
    %v119 = vadd.f32 %v92, %v115
    %s120 = scalar_lea.vmem %s1, 4
    %v121 = vld [vmem:[%s120] sm:$0x1]
    %v123 = vlaneseq
    %v124 = vshrl.u32 %v123, 7
    %v125 = vsub.s32 0, %v124
    %v126 = vrot.slane %v121, %v125
    %v128 = vmul.f32 %v26, %v126
    %v129 = vmul.f32 %v27, %v126
    %v130 = vmul.f32 %v28, %v126
    %v131 = vmul.f32 %v29, %v126
    %vm136 = vcmask 1043456
    %v137 = vrot.slane %v128, 4
    %v138 = vrot.slane %v129, 4
    %v139 = vsel %vm136, %v137, %v138
    %v140 = vrot.slane %v130, 4
    %v141 = vrot.slane %v131, 4
    %v142 = vsel %vm136, %v140, %v141
    %v145 = vadd.f32 %v118, %v139
    %v146 = vadd.f32 %v119, %v142
    %s147 = scalar_lea.vmem %s1, 5
    %v148 = vld [vmem:[%s147] sm:$0x1]
    %v150 = vlaneseq
    %v151 = vshrl.u32 %v150, 7
    %v152 = vsub.s32 0, %v151
    %v153 = vrot.slane %v148, %v152
    %v155 = vmul.f32 %v26, %v153
    %v156 = vmul.f32 %v27, %v153
    %v157 = vmul.f32 %v28, %v153
    %v158 = vmul.f32 %v29, %v153
    %vm163 = vcmask 1042432
    %v164 = vrot.slane %v155, 5
    %v165 = vrot.slane %v156, 5
    %v166 = vsel %vm163, %v164, %v165
    %v167 = vrot.slane %v157, 5
    %v168 = vrot.slane %v158, 5
    %v169 = vsel %vm163, %v167, %v168
    %v172 = vadd.f32 %v145, %v166
    %v173 = vadd.f32 %v146, %v169
    %s174 = scalar_lea.vmem %s1, 6
    %v175 = vld [vmem:[%s174] sm:$0x1]
    %v177 = vlaneseq
    %v178 = vshrl.u32 %v177, 7
    %v179 = vsub.s32 0, %v178
    %v180 = vrot.slane %v175, %v179
    %v182 = vmul.f32 %v26, %v180
    %v183 = vmul.f32 %v27, %v180
    %v184 = vmul.f32 %v28, %v180
    %v185 = vmul.f32 %v29, %v180
    %vm190 = vcmask 1041408
    %v191 = vrot.slane %v182, 6
    %v192 = vrot.slane %v183, 6
    %v193 = vsel %vm190, %v191, %v192
    %v194 = vrot.slane %v184, 6
    %v195 = vrot.slane %v185, 6
    %v196 = vsel %vm190, %v194, %v195
    %v199 = vadd.f32 %v172, %v193
    %v200 = vadd.f32 %v173, %v196
    %v201 = vld [vmem:[#allocation2] sm:$0x1]
    %v203 = vlaneseq
    %v204 = vshrl.u32 %v203, 7
    %v205 = vsub.s32 0, %v204
    %v206 = vrot.slane %v201, %v205
    %v208 = vadd.f32 %v199, %v206
    %v209 = vadd.f32 %v200, %v206
    %v210 = vxor.u32 %v208, 2147483648
    %v211 = vxor.u32 %v209, 2147483648
    %v212 = vmul.f32 %v210, 1.442695
    %v213 = vpow.pop %v212
    %v214 = vmul.f32 %v211, 1.442695
    %v215 = vpow.pop %v214
    %v216 = vadd.f32 %v213, 1.0
    %v217 = vadd.f32 %v215, 1.0
    %v218 = vrcp.pop %v216
    %v219 = vmul.f32 1.0, %v218
    %v220 = vrcp.pop %v217
    %v221 = vmul.f32 1.0, %v220
    %v222 = vmul.f32 %v208, %v219
    %v223 = vmul.f32 %v209, %v221
    %vm224 = vcmask 523264
    %225 = vst.msk [vmem:[%s3] sm:$0xff] %vm224, %v222
    %226 = vst.msk [vmem:[%s3 + $0x8] sm:$0xff] %vm224, %v223
    // Predicated region
    $region18: #{conformer_vision_forward.37} parent=1 // pred_check
      _
    $region19: #{conformer_vision_forward.37} parent=1 // pred_check_branch
      %228 = sbr.rel (0) target = $region21
    $region20: #{conformer_vision_forward.37} parent=1 // pred_region
      _
    $region21: #{conformer_vision_forward.37} parent=1 // pred_fallthru
      _
    // Predicated region
    $region22: #{conformer_vision_forward.37} parent=1 // pred_check
      _
    $region23: #{conformer_vision_forward.37} parent=1 // pred_check_branch
      %230 = sbr.rel (0) target = $region25
    $region24: #{conformer_vision_forward.37} parent=1 // pred_region
      _
    $region25: #{conformer_vision_forward.37} parent=1 // pred_fallthru
      _
    %231 = vsyncpa [#allocation3], 1

// kernel: conformer_vision_forward.41
$region0: #{conformer_vision_forward.41}
  #allocation0 [shape = 'u32[]', space=smem, size = 0x4, offset = 0x4, fixed_abs, tag = 'smem constant byte address 0x4 - core index']
  #allocation1 [shape = 'u32[144,128]{1,0:T(1,128)}', space=vmem, size = 0x12000, scoped, tag = 'internal scratch']
  %s0 = inlined_call_operand.vmem [shape: f32[2,64], index: 0, kind: input, shape index: {}]
  %s1 = inlined_call_operand.vmem [shape: bf16[64,128], index: 1, kind: input, shape index: {}]
  %s2 = inlined_call_operand.hbm [shape: f32[1,128], index: 2, kind: input, shape index: {}]
  %s3 = inlined_call_operand.hbm [shape: f32[2,128], index: 3, kind: output, shape index: {}]
  %s4 = sld [smem:[#allocation0]]
  $region26: #{conformer_vision_forward.41} parent=0
    _
  %s6 = ssub.s32 1, %s4
  %s7 = scalar_select 0, %s6, %s4
  $region1: #{conformer_vision_forward.41} parent=0
    #allocation2 [shape = 'u8[512]{0}', space=vmem, size = 0x400, scoped, tag = 'input window, operand 2, single buffered']
    #allocation3 [shape = 's32[1]{0}', space=sflag, size = 0x4, scoped, tag = 'scoped memory for conformer_vision_forward.41']
    #allocation4 [shape = 's32[1]{0}', space=sflag, size = 0x4, scoped, tag = 'scoped memory for conformer_vision_forward.41']
    #allocation5 [shape = 'u8[1024]{0}', space=vmem, size = 0x400, scoped, tag = 'output window, operand 0, single buffered']
    %8 = vsyncpa [#allocation3], 0
    %9 = vsyncpa [#allocation4], 0
    // Predicated region
    $region2: #{conformer_vision_forward.41} parent=1 // pred_check
      _
    $region3: #{conformer_vision_forward.41} parent=1 // pred_check_branch
      %11 = sbr.rel (0) target = $region5
    $region4: #{conformer_vision_forward.41} parent=1 // pred_region
      _
    $region5: #{conformer_vision_forward.41} parent=1 // pred_fallthru
      _
    // Predicated region
    $region6: #{conformer_vision_forward.41} parent=1 // pred_check
      _
    $region7: #{conformer_vision_forward.41} parent=1 // pred_check_branch
      %13 = sbr.rel (0) target = $region9
    $region8: #{conformer_vision_forward.41} parent=1 // pred_region
      _
    $region9: #{conformer_vision_forward.41} parent=1 // pred_fallthru
      _
    // Predicated region
    $region10: #{conformer_vision_forward.41} parent=1 // pred_check
      _
    $region11: #{conformer_vision_forward.41} parent=1 // pred_check_branch
      %15 = sbr.rel (0) target = $region13
    $region12: #{conformer_vision_forward.41} parent=1 // pred_region
      %s17 = ssub.s32 16, 16
      %18 = vsyncadd [#allocation3], %s17
      %s20 = sshll.u32 [#allocation2], 4
      %s21 = int_to_ptr.vmem [resolvable:$true] %s20
      %23 = dma.hbm_to_vmem [thread:$0]  %s2, 16, %s21, [#allocation3]
    $region13: #{conformer_vision_forward.41} parent=1 // pred_fallthru
      _
    // Predicated region
    $region14: #{conformer_vision_forward.41} parent=1 // pred_check
      _
    $region15: #{conformer_vision_forward.41} parent=1 // pred_check_branch
      %25 = sbr.rel (0) target = $region17
    $region16: #{conformer_vision_forward.41} parent=1 // pred_region
      %26 = dma.done [#allocation3], 16
    $region17: #{conformer_vision_forward.41} parent=1 // pred_fallthru
      _
    %v28 = vld [vmem:[%s0] sm:$0x3]
    %v29 = vpack.c.bf16 %v28, %v28
    %v30 = vld [vmem:[%s1] sm:$0xf]
    %v31 = vld [vmem:[%s1 + $0x4] sm:$0xf]
    %v32 = vld [vmem:[%s1 + $0x8] sm:$0xf]
    %v33 = vld [vmem:[%s1 + $0xc] sm:$0xf]
    %v34 = vld [vmem:[%s1 + $0x10] sm:$0xf]
    %v35 = vld [vmem:[%s1 + $0x14] sm:$0xf]
    %v36 = vld [vmem:[%s1 + $0x18] sm:$0xf]
    %v37 = vld [vmem:[%s1 + $0x1c] sm:$0xf]
    %v38 = vld [vmem:[#allocation2] sm:$0x1]
    %v40 = vlaneseq
    %v41 = vshrl.u32 %v40, 7
    %v42 = vsub.s32 0, %v41
    %v43 = vrot.slane %v38, %v42
    %v53 = vunpack.c.l.b16 %v30
    %v54 = vunpack.c.l.b16 %v31
    %v55 = vunpack.c.l.b16 %v32
    %v56 = vunpack.c.l.b16 %v33
    %v57 = vunpack.c.l.b16 %v34
    %v58 = vunpack.c.l.b16 %v35
    %v59 = vunpack.c.l.b16 %v36
    %v60 = vunpack.c.l.b16 %v37
    %v61 = vpack.c.b16 %v54, %v53
    %v62 = vpack.c.b16 %v56, %v55
    %v63 = vpack.c.b16 %v58, %v57
    %v64 = vpack.c.b16 %v60, %v59
    %vm69 = vcmask 523264
    %v71 = vsel %vm69, %v29, 0
    %73 = vmatprep.subr.bf16.mxu0 0
    %74 = vmatpush1.bf16.msra.mxu0 0
    %75 = vmatprep.subr.bf16.mxu0 0
    %76 = vmatpush1.bf16.msra.mxu0 0
    %77 = vmatprep.subr.bf16.mxu0 0
    %78 = vmatpush1.bf16.msra.mxu0 0
    %79 = vmatprep.subr.bf16.mxu0 0
    %80 = vmatpush1.bf16.msra.mxu0 0
    %81 = vmatprep.subr.bf16.mxu0 0
    %82 = vmatpush1.bf16.msra.mxu0 %v64
    %83 = vmatprep.subr.bf16.mxu0 0
    %84 = vmatpush1.bf16.msra.mxu0 %v63
    %85 = vmatprep.subr.bf16.mxu0 0
    %86 = vmatpush1.bf16.msra.mxu0 %v62
    %87 = vmatprep.subr.bf16.mxu0 0
    %88 = vmatpush1.bf16.msra.mxu0 %v61
    %89 = vmatprep.subr.bf16.mxu0 0
    %90 = vmatpush2.bf16.msra.mxu0 0
    %91 = vmatprep.subr.bf16.mxu0 0
    %92 = vmatpush2.bf16.msra.mxu0 0
    %93 = vmatprep.subr.bf16.mxu0 0
    %94 = vmatpush2.bf16.msra.mxu0 0
    %95 = vmatprep.subr.bf16.mxu0 0
    %96 = vmatpush2.bf16.msra.mxu0 0
    %97 = vmatprep.subr.bf16.mxu0 0
    %98 = vmatpush2.bf16.msra.mxu0 0
    %99 = vmatprep.subr.bf16.mxu0 0
    %100 = vmatpush2.bf16.msra.mxu0 0
    %101 = vmatprep.subr.bf16.mxu0 0
    %102 = vmatpush2.bf16.msra.mxu0 0
    %103 = vmatprep.subr.bf16.mxu0 0
    %104 = vmatpush2.bf16.msra.mxu0 0
    %105 = vmatprep.mubr.bf16.mxu0 0
    %106 = vmatmul.mubr.bf16.gmra.mxu0 %v71
    %v107 = vpop.f32.mrf.mxu0
    %v108 = vadd.f32 %v43, %v107
    %v109 = vpop.f32.mrf.mxu0
    %v110 = vpop.f32.mrf.mxu0
    %v111 = vpop.f32.mrf.mxu0
    %112 = vdwg.mxu0
    %113 = vst [vmem:[#allocation5] sm:$0x3] %v108
    // Predicated region
    $region18: #{conformer_vision_forward.41} parent=1 // pred_check
      _
    $region19: #{conformer_vision_forward.41} parent=1 // pred_check_branch
      %115 = sbr.rel (0) target = $region21
    $region20: #{conformer_vision_forward.41} parent=1 // pred_region
      %s117 = ssub.s32 32, 32
      %118 = vsyncadd [#allocation4], %s117
      %s120 = sshll.u32 [#allocation5], 4
      %s121 = int_to_ptr.vmem [resolvable:$true] %s120
      %123 = dma.vmem_to_hbm [thread:$0]  %s121, 32, %s3, [#allocation4]
    $region21: #{conformer_vision_forward.41} parent=1 // pred_fallthru
      _
    // Predicated region
    $region22: #{conformer_vision_forward.41} parent=1 // pred_check
      _
    $region23: #{conformer_vision_forward.41} parent=1 // pred_check_branch
      %125 = sbr.rel (0) target = $region25
    $region24: #{conformer_vision_forward.41} parent=1 // pred_region
      %126 = dma.done [#allocation4], 32
    $region25: #{conformer_vision_forward.41} parent=1 // pred_fallthru
      _
    %127 = vsyncpa [#allocation3], 1
    %128 = vsyncpa [#allocation4], 1

</llo_original>
